<compile_context>
chip_gen: v6e
topology: v6e:2x2x1
jax: 0.10.0
libtpu: 0.0.40
codegen_flags: <defaults>
</compile_context>

<pallas_src>
import functools

import jax
import jax.numpy as jnp
from jax.experimental import pallas as pl
from jax.experimental.pallas import tpu as pltpu

EPS = 1e-5


# --------------------------------------------------------------------------------------
# In-kernel helpers
# --------------------------------------------------------------------------------------

def _bn_act(x, scale, bias, a_bit):
    """Folded inference BatchNorm (x*scale+bias) + Activate(a_bit).

    DoReFa activation: clamp to [0,1] then round to 2^a_bit - 1 uniform levels
    (plain ReLU when a_bit == 32).  scale/bias are (1, C) and broadcast over x.
    """
    y = x * scale + bias
    if a_bit == 32:
        return jnp.maximum(y, 0.0)
    n = float(2 ** a_bit - 1)
    return jnp.round(jnp.clip(y, 0.0, 1.0) * n) / n


def _store_padded(pad_ref, interior_bf16):
    """Write `interior` into the centre of a (H+2, W+2, C) bf16 VMEM scratch with a zero border.

    Whole-slab zero store (write-only, cheap) + interior store replaces the two whole-slab
    jnp.concatenate copies of the previous version and is safe under any grid/core scheduling.
    TODO(synk): border-only strip stores would shave the extra zero store further.
    """
    h, w, _ = interior_bf16.shape
    pad_ref[...] = jnp.zeros(pad_ref.shape, pad_ref.dtype)
    pad_ref[pl.ds(1, h), pl.ds(1, w), :] = interior_bf16


def _conv3x3_from_padded(xp, w9, stride):
    """3x3 conv on an already zero-padded (H+2, W+2, Cin) bf16 slab as ONE im2col MXU matmul.

    Both the H- and W-stride are applied *before* the matmul, so the contraction is
    (Ho*Wo, 9*Cin) @ (9*Cin, Cout) with f32 accumulation.  w9 rows are ordered (kh, kw, cin)
    (HWIO flattened).
    """
    hp, wp, cin = xp.shape
    h, w = hp - 2, wp - 2
    ho, wo = h // stride, w // stride

    cols = []
    for kh in range(3):
        rows = xp[kh:kh + stride * ho]                                  # rows kh .. kh + s*Ho - 1
        if stride > 1:                                                  # keep rows kh + s*i (major-dim split)
            rows = rows.reshape(ho, stride, wp, cin)[:, 0]              # (Ho, W+2, Cin)
        for kw in range(3):
            win = rows[:, kw:kw + stride * wo, :]                       # (Ho, s*Wo, Cin)
            if stride > 1:                                              # keep cols kw + s*j (pre-matmul)
                win = win.reshape(ho * wo, stride, cin)[:, 0:1, :]
            cols.append(win.reshape(ho * wo, cin))

    col = jnp.concatenate(cols, axis=-1)                                # (Ho*Wo, 9*Cin) bf16
    return jnp.dot(col, w9, preferred_element_type=jnp.float32)        # (Ho*Wo, Cout)  f32


# --------------------------------------------------------------------------------------
# Fused Pallas kernel (the whole block, one pallas_call)
# --------------------------------------------------------------------------------------

def block_kernel(*refs, a_bit, stride, projection):
    """out = conv2(act2(bn2(conv1(act1(bn1(x)))))) + shortcut(act1(bn1(x)))  -- fully fused."""
    if projection:
        (x_ref, s1_ref, b1_ref, w1_ref, s2_ref, b2_ref, w2_ref, ws_ref,
         o_ref, xpad_ref, mpad_ref) = refs
    else:
        (x_ref, s1_ref, b1_ref, w1_ref, s2_ref, b2_ref, w2_ref,
         o_ref, xpad_ref, mpad_ref) = refs
        ws_ref = None

    _, h, w, cin = x_ref.shape
    _, ho, wo, cout = o_ref.shape

    # ---- prologue: bn1 + act1 on the raw input tile (never written to HBM) ------------
    xa = _bn_act(x_ref[0].astype(jnp.float32), s1_ref[...], b1_ref[...], a_bit)     # (H, W, Cin) f32

    # Shortcut operand prepared up-front so only a small bf16 slab (projection case) or the
    # already-needed activated slab (identity case) stays live across the two matmuls.
    if projection:
        xs = xa
        if stride > 1:
            xs = xs.reshape(ho, stride, w, cin)[:, 0]                               # rows i*s
            xs = xs.reshape(ho * wo, stride, cin)[:, 0:1, :]                        # cols j*s
        xs = xs.reshape(ho * wo, cin).astype(jnp.bfloat16)

    # ---- conv1: strided 3x3 as a single im2col matmul (bf16 operands, f32 acc) --------
    _store_padded(xpad_ref, xa.astype(jnp.bfloat16))
    z1 = _conv3x3_from_padded(xpad_ref[...], w1_ref[...], stride)                   # (Ho*Wo, Cmid) f32
    # TODO(synk): nn.Dropout(0.3) sits here in training mode; identity at inference.

    # ---- bn2 + act2 + conv2 (stride 1), all in VMEM ------------------------------------
    mid = _bn_act(z1, s2_ref[...], b2_ref[...], a_bit).astype(jnp.bfloat16)         # (Ho*Wo, Cmid)
    cmid = mid.shape[-1]
    _store_padded(mpad_ref, mid.reshape(ho, wo, cmid))
    acc = _conv3x3_from_padded(mpad_ref[...], w2_ref[...], 1)                       # (Ho*Wo, Cout) f32

    # ---- shortcut + residual add --------------------------------------------------------
    if projection:
        short = jnp.dot(xs, ws_ref[...], preferred_element_type=jnp.float32)        # (Ho*Wo, Cout)
    else:
        short = xa.reshape(ho * wo, cout)                                           # stride==1, Cin==Cout
    o_ref[...] = (acc + short).reshape(1, ho, wo, cout).astype(o_ref.dtype)


# --------------------------------------------------------------------------------------
# Host-side parameter preparation (hoisted out of the forward path)
# --------------------------------------------------------------------------------------

def weight_quantize(w, w_bit):
    """DoReFa weight quantization (weight_quantize_fn)."""
    if w_bit == 32:
        return w
    n = float(2 ** w_bit - 1)
    wt = jnp.tanh(w)
    wt = wt / (2.0 * jnp.max(jnp.abs(wt))) + 0.5
    return 2.0 * (jnp.round(wt * n) / n) - 1.0


def prepare_block_params(params, *, w_bit, stride, in_planes, planes):
    """Quantize + reshape conv weights (bf16, im2col layout) and fold BN. Done once per weight update."""
    w1 = weight_quantize(params["conv1_w"], w_bit).reshape(9 * in_planes, planes).astype(jnp.bfloat16)
    w2 = weight_quantize(params["conv2_w"], w_bit).reshape(9 * planes, planes).astype(jnp.bfloat16)
    s1 = params["bn1_gamma"] / jnp.sqrt(params["bn1_var"] + EPS)
    b1 = params["bn1_beta"] - params["bn1_mean"] * s1
    s2 = params["bn2_gamma"] / jnp.sqrt(params["bn2_var"] + EPS)
    b2 = params["bn2_beta"] - params["bn2_mean"] * s2
    prep = {
        "w1": w1, "w2": w2,
        "s1": s1.reshape(1, in_planes).astype(jnp.float32),
        "b1": b1.reshape(1, in_planes).astype(jnp.float32),
        "s2": s2.reshape(1, planes).astype(jnp.float32),
        "b2": b2.reshape(1, planes).astype(jnp.float32),
    }
    if stride != 1 or in_planes != planes:
        # nn.Conv2d(in_planes, planes, 1, stride, bias=False) -- plain (un-quantized) weights.
        prep["ws"] = params["shortcut_w"].astype(jnp.bfloat16)
    return prep


# --------------------------------------------------------------------------------------
# Forward (one pallas_call)
# --------------------------------------------------------------------------------------

def wide_basicblock_q_forward_nhwc(x, prep, *, a_bit, stride, in_planes, planes):
    n, h, w, cin = x.shape
    assert cin == in_planes
    assert h % stride == 0 and w % stride == 0
    ho, wo = h // stride, w // stride
    projection = (stride != 1) or (in_planes != planes)

    in_specs = [
        pl.BlockSpec((1, h, w, in_planes), lambda i: (i, 0, 0, 0)),     # raw x
        pl.BlockSpec((1, in_planes), lambda i: (0, 0)),                 # bn1 scale
        pl.BlockSpec((1, in_planes), lambda i: (0, 0)),                 # bn1 bias
        pl.BlockSpec((9 * in_planes, planes), lambda i: (0, 0)),        # conv1 weights (bf16, im2col)
        pl.BlockSpec((1, planes), lambda i: (0, 0)),                    # bn2 scale
        pl.BlockSpec((1, planes), lambda i: (0, 0)),                    # bn2 bias
        pl.BlockSpec((9 * planes, planes), lambda i: (0, 0)),           # conv2 weights (bf16, im2col)
    ]
    args = (x, prep["s1"], prep["b1"], prep["w1"], prep["s2"], prep["b2"], prep["w2"])
    if projection:
        in_specs.append(pl.BlockSpec((in_planes, planes), lambda i: (0, 0)))   # 1x1 shortcut weights
        args = args + (prep["ws"],)

    out = pl.pallas_call(
        functools.partial(block_kernel, a_bit=a_bit, stride=stride, projection=projection),
        out_shape=jax.ShapeDtypeStruct((n, ho, wo, planes), jnp.float32),
        grid=(n,),
        in_specs=in_specs,
        out_specs=pl.BlockSpec((1, ho, wo, planes), lambda i: (i, 0, 0, 0)),
        scratch_shapes=[
            pltpu.VMEM((h + 2, w + 2, in_planes), jnp.bfloat16),        # padded activated x
            pltpu.VMEM((ho + 2, wo + 2, planes), jnp.bfloat16),         # padded mid activation
        ],
        compiler_params=pltpu.CompilerParams(dimension_semantics=("parallel",)),
    )(*args)
    return out


def wide_basicblock_q_forward(x_nchw, prep, *, a_bit, stride, in_planes, planes):
    # TODO(synk): keep the whole network in NHWC and hoist this transpose pair to the model
    #             boundary; it is retained here only to match the PyTorch NCHW interface
    #             of a standalone block.
    x = jnp.transpose(x_nchw, (0, 2, 3, 1)).astype(jnp.float32)     # NCHW -> NHWC
    out = wide_basicblock_q_forward_nhwc(x, prep, a_bit=a_bit, stride=stride,
                                         in_planes=in_planes, planes=planes)
    return jnp.transpose(out, (0, 3, 1, 2))                         # back to NCHW


# --------------------------------------------------------------------------------------
# Parameter init + pure-JAX reference (for correctness check)
# --------------------------------------------------------------------------------------

def init_params(key, in_planes, planes, stride):
    ks = jax.random.split(key, 11)
    params = {
        # conv weights stored directly in HWIO (PyTorch keeps OIHW; pure layout choice)
        "conv1_w": 0.1 * jax.random.normal(ks[0], (3, 3, in_planes, planes), jnp.float32),
        "conv2_w": 0.1 * jax.random.normal(ks[1], (3, 3, planes, planes), jnp.float32),
        "bn1_gamma": 1.0 + 0.1 * jax.random.normal(ks[2], (in_planes,), jnp.float32),
        "bn1_beta": 0.1 * jax.random.normal(ks[3], (in_planes,), jnp.float32),
        "bn1_mean": 0.1 * jax.random.normal(ks[4], (in_planes,), jnp.float32),
        "bn1_var": 0.5 + jax.random.uniform(ks[5], (in_planes,), jnp.float32),
        "bn2_gamma": 1.0 + 0.1 * jax.random.normal(ks[6], (planes,), jnp.float32),
        "bn2_beta": 0.1 * jax.random.normal(ks[7], (planes,), jnp.float32),
        "bn2_mean": 0.1 * jax.random.normal(ks[8], (planes,), jnp.float32),
        "bn2_var": 0.5 + jax.random.uniform(ks[9], (planes,), jnp.float32),
    }
    if stride != 1 or in_planes != planes:
        params["shortcut_w"] = 0.1 * jax.random.normal(ks[10], (in_planes, planes), jnp.float32)
    return params


def ref_forward(x_nchw, params, *, a_bit, w_bit, stride, in_planes, planes):
    """Pure-JAX reference, using the same bf16-operand / f32-accumulate conv numerics."""
    x = jnp.transpose(x_nchw, (0, 2, 3, 1)).astype(jnp.float32)

    def bn_act(t, g, b, m, v):
        inv = g / jnp.sqrt(v + EPS)
        y = t * inv + (b - m * inv)
        if a_bit == 32:
            return jnp.maximum(y, 0.0)
        n = float(2 ** a_bit - 1)
        return jnp.round(jnp.clip(y, 0.0, 1.0) * n) / n

    def conv(t, w_hwio, s, pad):
        return jax.lax.conv_general_dilated(
            t.astype(jnp.bfloat16), w_hwio.astype(jnp.bfloat16), (s, s), pad,
            dimension_numbers=("NHWC", "HWIO", "NHWC"),
            preferred_element_type=jnp.float32)

    xa = bn_act(x, params["bn1_gamma"], params["bn1_beta"], params["bn1_mean"], params["bn1_var"])
    out = bn_act(conv(xa, weight_quantize(params["conv1_w"], w_bit), stride, ((1, 1), (1, 1))),
                 params["bn2_gamma"], params["bn2_beta"], params["bn2_mean"], params["bn2_var"])
    out = conv(out, weight_quantize(params["conv2_w"], w_bit), 1, ((1, 1), (1, 1)))
    if stride != 1 or in_planes != planes:
        short = conv(xa, params["shortcut_w"].reshape(1, 1, in_planes, planes), stride, ((0, 0), (0, 0)))
    else:
        short = xa
    return jnp.transpose(out + short, (0, 3, 1, 2))


# --------------------------------------------------------------------------------------

if __name__ == "__main__":
    A_BIT, W_BIT = 4, 4
    N, H, W = 2, 16, 16

    # (in_planes, planes, stride): covers 1x1 projection, identity, and strided-projection shortcuts.
    configs = [
        (32, 64, 1),
        (64, 64, 1),
        (64, 64, 2),
    ]

    key = jax.random.PRNGKey(0)
    for idx, (cin, cout, stride) in enumerate(configs):
        key, kx, kp = jax.random.split(key, 3)
        x = jax.random.normal(kx, (N, cin, H, W), jnp.float32)     # NCHW, PyTorch convention
        params = init_params(kp, cin, cout, stride)
        prep = prepare_block_params(params, w_bit=W_BIT, stride=stride, in_planes=cin, planes=cout)

        fwd = jax.jit(functools.partial(wide_basicblock_q_forward, a_bit=A_BIT,
                                        stride=stride, in_planes=cin, planes=cout))
        out = jax.block_until_ready(fwd(x, prep))

        ref = jax.block_until_ready(
            ref_forward(x, params, a_bit=A_BIT, w_bit=W_BIT,
                        stride=stride, in_planes=cin, planes=cout))

        assert out.shape == ref.shape == (N, cout, H // stride, W // stride), (out.shape, ref.shape)
        err = jnp.abs(out - ref)
        rel = float(jnp.linalg.norm(out - ref) / (jnp.linalg.norm(ref) + 1e-12))
        # Tolerances absorb rare activation-quantization threshold flips caused by differing f32
        # accumulation order between the im2col matmul and XLA's conv (both use bf16 operands).
        frac_big = float(jnp.mean((err > 0.1).astype(jnp.float32)))
        assert rel < 2e-2, (idx, rel)
        assert frac_big < 5e-3, (idx, frac_big)

    print("KERNEL_OK")
</pallas_src>

<mosaic_0001>
module attributes {stable_mosaic.version = 11 : i64} {
  func.func @block_kernel(%arg0: i32, %arg1: memref<1x16x16x32xf32, #tpu.memory_space<vmem>>, %arg2: memref<1x32xf32, #tpu.memory_space<vmem>>, %arg3: memref<1x32xf32, #tpu.memory_space<vmem>>, %arg4: memref<288x64xbf16, #tpu.memory_space<vmem>>, %arg5: memref<1x64xf32, #tpu.memory_space<vmem>>, %arg6: memref<1x64xf32, #tpu.memory_space<vmem>>, %arg7: memref<576x64xbf16, #tpu.memory_space<vmem>>, %arg8: memref<32x64xbf16, #tpu.memory_space<vmem>>, %arg9: memref<1x16x16x64xf32, #tpu.memory_space<vmem>>, %arg10: memref<18x18x32xbf16, #tpu.memory_space<vmem>>, %arg11: memref<18x18x64xbf16, #tpu.memory_space<vmem>>) attributes {dimension_semantics = [#tpu.dimension_semantics<parallel>], iteration_bounds = array<i64: 2>, scalar_prefetch = 0 : i64, scratch_operands = 2 : i64, tpu.core_type = #tpu.core_type<tc>, window_params = [{transform_indices = @transform_0, window_bounds = array<i64: 1, 16, 16, 32>}, {pipeline_mode = #tpu.pipeline_mode<synchronous>, transform_indices = @transform_1, window_bounds = array<i64: 1, 32>}, {pipeline_mode = #tpu.pipeline_mode<synchronous>, transform_indices = @transform_2, window_bounds = array<i64: 1, 32>}, {pipeline_mode = #tpu.pipeline_mode<synchronous>, transform_indices = @transform_3, window_bounds = array<i64: 288, 64>}, {pipeline_mode = #tpu.pipeline_mode<synchronous>, transform_indices = @transform_4, window_bounds = array<i64: 1, 64>}, {pipeline_mode = #tpu.pipeline_mode<synchronous>, transform_indices = @transform_5, window_bounds = array<i64: 1, 64>}, {pipeline_mode = #tpu.pipeline_mode<synchronous>, transform_indices = @transform_6, window_bounds = array<i64: 576, 64>}, {pipeline_mode = #tpu.pipeline_mode<synchronous>, transform_indices = @transform_7, window_bounds = array<i64: 32, 64>}, {transform_indices = @transform_8, window_bounds = array<i64: 1, 16, 16, 64>}]} {
    %c0 = arith.constant 0 : index
    %c0_0 = arith.constant 0 : index
    %c0_1 = arith.constant 0 : index
    %c0_2 = arith.constant 0 : index
    %0 = vector.load %arg1[%c0, %c0_0, %c0_1, %c0_2] : memref<1x16x16x32xf32, #tpu.memory_space<vmem>>, vector<1x16x16x32xf32>
    %1 = vector.shape_cast %0 : vector<1x16x16x32xf32> to vector<16x16x32xf32>
    %c0_3 = arith.constant 0 : index
    %c0_4 = arith.constant 0 : index
    %2 = vector.load %arg2[%c0_3, %c0_4] : memref<1x32xf32, #tpu.memory_space<vmem>>, vector<1x32xf32>
    %c0_5 = arith.constant 0 : index
    %c0_6 = arith.constant 0 : index
    %3 = vector.load %arg3[%c0_5, %c0_6] : memref<1x32xf32, #tpu.memory_space<vmem>>, vector<1x32xf32>
    %4 = vector.shape_cast %2 : vector<1x32xf32> to vector<1x1x32xf32>
    %5 = vector.broadcast %4 : vector<1x1x32xf32> to vector<16x16x32xf32>
    %6 = arith.mulf %1, %5 : vector<16x16x32xf32>
    %7 = vector.shape_cast %3 : vector<1x32xf32> to vector<1x1x32xf32>
    %8 = vector.broadcast %7 : vector<1x1x32xf32> to vector<16x16x32xf32>
    %9 = arith.addf %6, %8 : vector<16x16x32xf32>
    %cst = arith.constant 0.000000e+00 : f32
    %cst_7 = arith.constant 1.000000e+00 : f32
    %10 = vector.broadcast %cst : f32 to vector<16x16x32xf32>
    %11 = arith.maximumf %10, %9 : vector<16x16x32xf32>
    %12 = vector.broadcast %cst_7 : f32 to vector<16x16x32xf32>
    %13 = arith.minimumf %12, %11 : vector<16x16x32xf32>
    %cst_8 = arith.constant 1.500000e+01 : f32
    %14 = vector.broadcast %cst_8 : f32 to vector<16x16x32xf32>
    %15 = arith.mulf %13, %14 : vector<16x16x32xf32>
    %16 = math.roundeven %15 : vector<16x16x32xf32>
    %cst_9 = arith.constant 1.500000e+01 : f32
    %17 = vector.broadcast %cst_9 : f32 to vector<16x16x32xf32>
    %18 = arith.divf %16, %17 : vector<16x16x32xf32>
    %19 = vector.shape_cast %18 : vector<16x16x32xf32> to vector<256x32xf32>
    %20 = arith.truncf %19 : vector<256x32xf32> to vector<256x32xbf16>
    %21 = arith.truncf %18 : vector<16x16x32xf32> to vector<16x16x32xbf16>
    %cst_10 = arith.constant 0.000000e+00 : bf16
    %22 = vector.broadcast %cst_10 : bf16 to vector<18x18x32xbf16>
    %c0_11 = arith.constant 0 : index
    %c0_12 = arith.constant 0 : index
    %c0_13 = arith.constant 0 : index
    %23 = vector.load %arg10[%c0_11, %c0_12, %c0_13] : memref<18x18x32xbf16, #tpu.memory_space<vmem>>, vector<18x18x32xbf16>
    tpu.vector_store %arg10[%c0_11, %c0_12, %c0_13], %22 {strides = array<i32>} : memref<18x18x32xbf16, #tpu.memory_space<vmem>>, vector<18x18x32xbf16>,
    %c1 = arith.constant 1 : index
    %c1_14 = arith.constant 1 : index
    %c0_15 = arith.constant 0 : index
    %24 = vector.load %arg10[%c1, %c1_14, %c0_15] : memref<18x18x32xbf16, #tpu.memory_space<vmem>>, vector<16x16x32xbf16>
    tpu.vector_store %arg10[%c1, %c1_14, %c0_15], %21 {strides = array<i32>} : memref<18x18x32xbf16, #tpu.memory_space<vmem>>, vector<16x16x32xbf16>,
    %c0_16 = arith.constant 0 : index
    %c0_17 = arith.constant 0 : index
    %c0_18 = arith.constant 0 : index
    %25 = vector.load %arg10[%c0_16, %c0_17, %c0_18] : memref<18x18x32xbf16, #tpu.memory_space<vmem>>, vector<18x18x32xbf16>
    %c0_19 = arith.constant 0 : index
    %c0_20 = arith.constant 0 : index
    %26 = vector.load %arg4[%c0_19, %c0_20] : memref<288x64xbf16, #tpu.memory_space<vmem>>, vector<288x64xbf16>
    %27 = vector.extract_strided_slice %25 {offsets = [0, 0, 0], sizes = [16, 18, 32], strides = [1, 1, 1]} : vector<18x18x32xbf16> to vector<16x18x32xbf16>
    %28 = vector.extract_strided_slice %27 {offsets = [0, 0, 0], sizes = [16, 16, 32], strides = [1, 1, 1]} : vector<16x18x32xbf16> to vector<16x16x32xbf16>
    %29 = vector.shape_cast %28 : vector<16x16x32xbf16> to vector<256x32xbf16>
    %30 = vector.extract_strided_slice %27 {offsets = [0, 1, 0], sizes = [16, 16, 32], strides = [1, 1, 1]} : vector<16x18x32xbf16> to vector<16x16x32xbf16>
    %31 = vector.shape_cast %30 : vector<16x16x32xbf16> to vector<256x32xbf16>
    %32 = vector.extract_strided_slice %27 {offsets = [0, 2, 0], sizes = [16, 16, 32], strides = [1, 1, 1]} : vector<16x18x32xbf16> to vector<16x16x32xbf16>
    %33 = vector.shape_cast %32 : vector<16x16x32xbf16> to vector<256x32xbf16>
    %34 = vector.extract_strided_slice %25 {offsets = [1, 0, 0], sizes = [16, 18, 32], strides = [1, 1, 1]} : vector<18x18x32xbf16> to vector<16x18x32xbf16>
    %35 = vector.extract_strided_slice %34 {offsets = [0, 0, 0], sizes = [16, 16, 32], strides = [1, 1, 1]} : vector<16x18x32xbf16> to vector<16x16x32xbf16>
    %36 = vector.shape_cast %35 : vector<16x16x32xbf16> to vector<256x32xbf16>
    %37 = vector.extract_strided_slice %34 {offsets = [0, 1, 0], sizes = [16, 16, 32], strides = [1, 1, 1]} : vector<16x18x32xbf16> to vector<16x16x32xbf16>
    %38 = vector.shape_cast %37 : vector<16x16x32xbf16> to vector<256x32xbf16>
    %39 = vector.extract_strided_slice %34 {offsets = [0, 2, 0], sizes = [16, 16, 32], strides = [1, 1, 1]} : vector<16x18x32xbf16> to vector<16x16x32xbf16>
    %40 = vector.shape_cast %39 : vector<16x16x32xbf16> to vector<256x32xbf16>
    %41 = vector.extract_strided_slice %25 {offsets = [2, 0, 0], sizes = [16, 18, 32], strides = [1, 1, 1]} : vector<18x18x32xbf16> to vector<16x18x32xbf16>
    %42 = vector.extract_strided_slice %41 {offsets = [0, 0, 0], sizes = [16, 16, 32], strides = [1, 1, 1]} : vector<16x18x32xbf16> to vector<16x16x32xbf16>
    %43 = vector.shape_cast %42 : vector<16x16x32xbf16> to vector<256x32xbf16>
    %44 = vector.extract_strided_slice %41 {offsets = [0, 1, 0], sizes = [16, 16, 32], strides = [1, 1, 1]} : vector<16x18x32xbf16> to vector<16x16x32xbf16>
    %45 = vector.shape_cast %44 : vector<16x16x32xbf16> to vector<256x32xbf16>
    %46 = vector.extract_strided_slice %41 {offsets = [0, 2, 0], sizes = [16, 16, 32], strides = [1, 1, 1]} : vector<16x18x32xbf16> to vector<16x16x32xbf16>
    %47 = vector.shape_cast %46 : vector<16x16x32xbf16> to vector<256x32xbf16>
    %48 = tpu.concatenate %29, %31, %33, %36, %38, %40, %43, %45, %47 in 1 : vector<256x32xbf16>, vector<256x32xbf16>, vector<256x32xbf16>, vector<256x32xbf16>, vector<256x32xbf16>, vector<256x32xbf16>, vector<256x32xbf16>, vector<256x32xbf16>, vector<256x32xbf16> -> vector<256x288xbf16>
    %cst_21 = arith.constant dense<0.000000e+00> : vector<256x64xf32>
    %49 = tpu.matmul %48, %26, %cst_21 {dimension_numbers = #tpu.dot_dimension_numbers<[1], [0], [0], [1], [0, 0, 1, 1], [], []>} : vector<256x288xbf16>, vector<288x64xbf16>, vector<256x64xf32> -> vector<256x64xf32>
    %c0_22 = arith.constant 0 : index
    %c0_23 = arith.constant 0 : index
    %50 = vector.load %arg5[%c0_22, %c0_23] : memref<1x64xf32, #tpu.memory_space<vmem>>, vector<1x64xf32>
    %c0_24 = arith.constant 0 : index
    %c0_25 = arith.constant 0 : index
    %51 = vector.load %arg6[%c0_24, %c0_25] : memref<1x64xf32, #tpu.memory_space<vmem>>, vector<1x64xf32>
    %52 = vector.broadcast %50 : vector<1x64xf32> to vector<256x64xf32>
    %53 = arith.mulf %49, %52 : vector<256x64xf32>
    %54 = vector.broadcast %51 : vector<1x64xf32> to vector<256x64xf32>
    %55 = arith.addf %53, %54 : vector<256x64xf32>
    %cst_26 = arith.constant 0.000000e+00 : f32
    %cst_27 = arith.constant 1.000000e+00 : f32
    %56 = vector.broadcast %cst_26 : f32 to vector<256x64xf32>
    %57 = arith.maximumf %56, %55 : vector<256x64xf32>
    %58 = vector.broadcast %cst_27 : f32 to vector<256x64xf32>
    %59 = arith.minimumf %58, %57 : vector<256x64xf32>
    %cst_28 = arith.constant 1.500000e+01 : f32
    %60 = vector.broadcast %cst_28 : f32 to vector<256x64xf32>
    %61 = arith.mulf %59, %60 : vector<256x64xf32>
    %62 = math.roundeven %61 : vector<256x64xf32>
    %cst_29 = arith.constant 1.500000e+01 : f32
    %63 = vector.broadcast %cst_29 : f32 to vector<256x64xf32>
    %64 = arith.divf %62, %63 : vector<256x64xf32>
    %65 = arith.truncf %64 : vector<256x64xf32> to vector<256x64xbf16>
    %66 = vector.shape_cast %65 : vector<256x64xbf16> to vector<16x16x64xbf16>
    %cst_30 = arith.constant 0.000000e+00 : bf16
    %67 = vector.broadcast %cst_30 : bf16 to vector<18x18x64xbf16>
    %c0_31 = arith.constant 0 : index
    %c0_32 = arith.constant 0 : index
    %c0_33 = arith.constant 0 : index
    %68 = vector.load %arg11[%c0_31, %c0_32, %c0_33] : memref<18x18x64xbf16, #tpu.memory_space<vmem>>, vector<18x18x64xbf16>
    tpu.vector_store %arg11[%c0_31, %c0_32, %c0_33], %67 {strides = array<i32>} : memref<18x18x64xbf16, #tpu.memory_space<vmem>>, vector<18x18x64xbf16>,
    %c1_34 = arith.constant 1 : index
    %c1_35 = arith.constant 1 : index
    %c0_36 = arith.constant 0 : index
    %69 = vector.load %arg11[%c1_34, %c1_35, %c0_36] : memref<18x18x64xbf16, #tpu.memory_space<vmem>>, vector<16x16x64xbf16>
    tpu.vector_store %arg11[%c1_34, %c1_35, %c0_36], %66 {strides = array<i32>} : memref<18x18x64xbf16, #tpu.memory_space<vmem>>, vector<16x16x64xbf16>,
    %c0_37 = arith.constant 0 : index
    %c0_38 = arith.constant 0 : index
    %c0_39 = arith.constant 0 : index
    %70 = vector.load %arg11[%c0_37, %c0_38, %c0_39] : memref<18x18x64xbf16, #tpu.memory_space<vmem>>, vector<18x18x64xbf16>
    %c0_40 = arith.constant 0 : index
    %c0_41 = arith.constant 0 : index
    %71 = vector.load %arg7[%c0_40, %c0_41] : memref<576x64xbf16, #tpu.memory_space<vmem>>, vector<576x64xbf16>
    %72 = vector.extract_strided_slice %70 {offsets = [0, 0, 0], sizes = [16, 18, 64], strides = [1, 1, 1]} : vector<18x18x64xbf16> to vector<16x18x64xbf16>
    %73 = vector.extract_strided_slice %72 {offsets = [0, 0, 0], sizes = [16, 16, 64], strides = [1, 1, 1]} : vector<16x18x64xbf16> to vector<16x16x64xbf16>
    %74 = vector.shape_cast %73 : vector<16x16x64xbf16> to vector<256x64xbf16>
    %75 = vector.extract_strided_slice %72 {offsets = [0, 1, 0], sizes = [16, 16, 64], strides = [1, 1, 1]} : vector<16x18x64xbf16> to vector<16x16x64xbf16>
    %76 = vector.shape_cast %75 : vector<16x16x64xbf16> to vector<256x64xbf16>
    %77 = vector.extract_strided_slice %72 {offsets = [0, 2, 0], sizes = [16, 16, 64], strides = [1, 1, 1]} : vector<16x18x64xbf16> to vector<16x16x64xbf16>
    %78 = vector.shape_cast %77 : vector<16x16x64xbf16> to vector<256x64xbf16>
    %79 = vector.extract_strided_slice %70 {offsets = [1, 0, 0], sizes = [16, 18, 64], strides = [1, 1, 1]} : vector<18x18x64xbf16> to vector<16x18x64xbf16>
    %80 = vector.extract_strided_slice %79 {offsets = [0, 0, 0], sizes = [16, 16, 64], strides = [1, 1, 1]} : vector<16x18x64xbf16> to vector<16x16x64xbf16>
    %81 = vector.shape_cast %80 : vector<16x16x64xbf16> to vector<256x64xbf16>
    %82 = vector.extract_strided_slice %79 {offsets = [0, 1, 0], sizes = [16, 16, 64], strides = [1, 1, 1]} : vector<16x18x64xbf16> to vector<16x16x64xbf16>
    %83 = vector.shape_cast %82 : vector<16x16x64xbf16> to vector<256x64xbf16>
    %84 = vector.extract_strided_slice %79 {offsets = [0, 2, 0], sizes = [16, 16, 64], strides = [1, 1, 1]} : vector<16x18x64xbf16> to vector<16x16x64xbf16>
    %85 = vector.shape_cast %84 : vector<16x16x64xbf16> to vector<256x64xbf16>
    %86 = vector.extract_strided_slice %70 {offsets = [2, 0, 0], sizes = [16, 18, 64], strides = [1, 1, 1]} : vector<18x18x64xbf16> to vector<16x18x64xbf16>
    %87 = vector.extract_strided_slice %86 {offsets = [0, 0, 0], sizes = [16, 16, 64], strides = [1, 1, 1]} : vector<16x18x64xbf16> to vector<16x16x64xbf16>
    %88 = vector.shape_cast %87 : vector<16x16x64xbf16> to vector<256x64xbf16>
    %89 = vector.extract_strided_slice %86 {offsets = [0, 1, 0], sizes = [16, 16, 64], strides = [1, 1, 1]} : vector<16x18x64xbf16> to vector<16x16x64xbf16>
    %90 = vector.shape_cast %89 : vector<16x16x64xbf16> to vector<256x64xbf16>
    %91 = vector.extract_strided_slice %86 {offsets = [0, 2, 0], sizes = [16, 16, 64], strides = [1, 1, 1]} : vector<16x18x64xbf16> to vector<16x16x64xbf16>
    %92 = vector.shape_cast %91 : vector<16x16x64xbf16> to vector<256x64xbf16>
    %93 = tpu.concatenate %74, %76, %78, %81, %83, %85, %88, %90, %92 in 1 : vector<256x64xbf16>, vector<256x64xbf16>, vector<256x64xbf16>, vector<256x64xbf16>, vector<256x64xbf16>, vector<256x64xbf16>, vector<256x64xbf16>, vector<256x64xbf16>, vector<256x64xbf16> -> vector<256x576xbf16>
    %cst_42 = arith.constant dense<0.000000e+00> : vector<256x64xf32>
    %94 = tpu.matmul %93, %71, %cst_42 {dimension_numbers = #tpu.dot_dimension_numbers<[1], [0], [0], [1], [0, 0, 1, 1], [], []>} : vector<256x576xbf16>, vector<576x64xbf16>, vector<256x64xf32> -> vector<256x64xf32>
    %c0_43 = arith.constant 0 : index
    %c0_44 = arith.constant 0 : index
    %95 = vector.load %arg8[%c0_43, %c0_44] : memref<32x64xbf16, #tpu.memory_space<vmem>>, vector<32x64xbf16>
    %cst_45 = arith.constant dense<0.000000e+00> : vector<256x64xf32>
    %96 = tpu.matmul %20, %95, %cst_45 {dimension_numbers = #tpu.dot_dimension_numbers<[1], [0], [0], [1], [0, 0, 1, 1], [], []>} : vector<256x32xbf16>, vector<32x64xbf16>, vector<256x64xf32> -> vector<256x64xf32>
    %97 = arith.addf %94, %96 : vector<256x64xf32>
    %98 = vector.shape_cast %97 : vector<256x64xf32> to vector<1x16x16x64xf32>
    %c0_46 = arith.constant 0 : index
    %c0_47 = arith.constant 0 : index
    %c0_48 = arith.constant 0 : index
    %c0_49 = arith.constant 0 : index
    %99 = vector.load %arg9[%c0_46, %c0_47, %c0_48, %c0_49] : memref<1x16x16x64xf32, #tpu.memory_space<vmem>>, vector<1x16x16x64xf32>
    tpu.vector_store %arg9[%c0_46, %c0_47, %c0_48, %c0_49], %98 {strides = array<i32>} : memref<1x16x16x64xf32, #tpu.memory_space<vmem>>, vector<1x16x16x64xf32>,
    return
  }
  func.func @transform_0(%arg0: i32) -> (i32, i32, i32, i32) {
    %c0_i32 = arith.constant 0 : i32
    %c0_i32_0 = arith.constant 0 : i32
    %c0_i32_1 = arith.constant 0 : i32
    %c0_i32_2 = arith.constant 0 : i32
    return %arg0, %c0_i32, %c0_i32_0, %c0_i32_1 : i32, i32, i32, i32
  }
  func.func @transform_1(%arg0: i32) -> (i32, i32) {
    %c0_i32 = arith.constant 0 : i32
    %c0_i32_0 = arith.constant 0 : i32
    %c0_i32_1 = arith.constant 0 : i32
    return %c0_i32, %c0_i32_0 : i32, i32
  }
  func.func @transform_2(%arg0: i32) -> (i32, i32) {
    %c0_i32 = arith.constant 0 : i32
    %c0_i32_0 = arith.constant 0 : i32
    %c0_i32_1 = arith.constant 0 : i32
    return %c0_i32, %c0_i32_0 : i32, i32
  }
  func.func @transform_3(%arg0: i32) -> (i32, i32) {
    %c0_i32 = arith.constant 0 : i32
    %c0_i32_0 = arith.constant 0 : i32
    %c0_i32_1 = arith.constant 0 : i32
    return %c0_i32, %c0_i32_0 : i32, i32
  }
  func.func @transform_4(%arg0: i32) -> (i32, i32) {
    %c0_i32 = arith.constant 0 : i32
    %c0_i32_0 = arith.constant 0 : i32
    %c0_i32_1 = arith.constant 0 : i32
    return %c0_i32, %c0_i32_0 : i32, i32
  }
  func.func @transform_5(%arg0: i32) -> (i32, i32) {
    %c0_i32 = arith.constant 0 : i32
    %c0_i32_0 = arith.constant 0 : i32
    %c0_i32_1 = arith.constant 0 : i32
    return %c0_i32, %c0_i32_0 : i32, i32
  }
  func.func @transform_6(%arg0: i32) -> (i32, i32) {
    %c0_i32 = arith.constant 0 : i32
    %c0_i32_0 = arith.constant 0 : i32
    %c0_i32_1 = arith.constant 0 : i32
    return %c0_i32, %c0_i32_0 : i32, i32
  }
  func.func @transform_7(%arg0: i32) -> (i32, i32) {
    %c0_i32 = arith.constant 0 : i32
    %c0_i32_0 = arith.constant 0 : i32
    %c0_i32_1 = arith.constant 0 : i32
    return %c0_i32, %c0_i32_0 : i32, i32
  }
  func.func @transform_8(%arg0: i32) -> (i32, i32, i32, i32) {
    %c0_i32 = arith.constant 0 : i32
    %c0_i32_0 = arith.constant 0 : i32
    %c0_i32_1 = arith.constant 0 : i32
    %c0_i32_2 = arith.constant 0 : i32
    return %arg0, %c0_i32, %c0_i32_0, %c0_i32_1 : i32, i32, i32, i32
  }
}

</mosaic_0001>

<llo_original>
// kernel: wide_basicblock_q_forward.1
$region0: #{wide_basicblock_q_forward.1}
  #allocation0 [shape = 'u32[]', space=smem, size = 0x4, offset = 0x4, fixed_abs, tag = 'smem constant byte address 0x4 - core index']
  #allocation1 [shape = 'u32[144,128]{1,0:T(1,128)}', space=vmem, size = 0x12000, scoped, tag = 'internal scratch']
  #allocation2 [shape = 'bf16[18,18,32]{2,1,0:T(8,128)(2,1)}', space=vmem, size = 0x1b000, scoped, tag = 'scratch operand']
  #allocation3 [shape = 'bf16[18,18,64]{2,1,0:T(8,128)(2,1)}', space=vmem, size = 0x1b000, scoped, tag = 'scratch operand']
  %s0 = inlined_call_operand.vmem [shape: f32[2,16,16,32], index: 0, kind: input, shape index: {}]
  %s1 = inlined_call_operand.vmem [shape: f32[1,32], index: 1, kind: input, shape index: {}]
  %s2 = inlined_call_operand.vmem [shape: f32[1,32], index: 2, kind: input, shape index: {}]
  %s3 = inlined_call_operand.vmem [shape: bf16[288,64], index: 3, kind: input, shape index: {}]
  %s4 = inlined_call_operand.vmem [shape: f32[1,64], index: 4, kind: input, shape index: {}]
  %s5 = inlined_call_operand.vmem [shape: f32[1,64], index: 5, kind: input, shape index: {}]
  %s6 = inlined_call_operand.vmem [shape: bf16[576,64], index: 6, kind: input, shape index: {}]
  %s7 = inlined_call_operand.vmem [shape: bf16[32,64], index: 7, kind: input, shape index: {}]
  %s8 = inlined_call_operand.hbm [shape: f32[2,16,16,64], index: 8, kind: output, shape index: {}]
  %s9 = sld [smem:[#allocation0]]
  $region65: #{wide_basicblock_q_forward.1} parent=0
    _
  %s11 = ssub.s32 1, %s9
  %s12 = scalar_select 0, %s11, %s9
  $region1: #{wide_basicblock_q_forward.1} parent=0
    #allocation4 [shape = 'u8[262144]{0}', space=vmem, size = 0x40000, scoped, tag = 'output window, operand 0']
    #allocation5 [shape = 's32[2]{0}', space=sflag, size = 0x8, scoped, tag = 'scoped memory for wide_basicblock_q_forward.1']
    %13 = vsyncpa [#allocation5], 0
    %s14 = scalar_lea.sflag [#allocation5], 1
    %15 = vsyncpa %s14, 0
    loop: start=0, step=1, limit=4
    $region2: #{wide_basicblock_q_forward.1} parent=1 // loop_pre_header
      _
    $region3: #{wide_basicblock_q_forward.1} parent=1 // loop_header
      %s17 = sphi 0, %s21
      %p18 = scmp.ge.s32.totalorder %s17, 4
      %s27 = sphi 0, %s29
      %s30 = sphi 0, %s27
      %s31 = sphi 0, %s30
      %s47 = sphi 0, %s31
      %s51 = sphi 0, %s51
      %s53 = sphi 0, %s51
      %s54 = sphi 0, %s53
      %s68 = sphi 0, %s54
      %s72 = sphi 0, %s72
      %s74 = sphi 0, %s72
      %s75 = sphi 0, %s74
      %s89 = sphi 0, %s75
      %s93 = sphi 0, %s93
      %s95 = sphi 0, %s93
      %s96 = sphi 0, %s95
      %s110 = sphi 0, %s96
      %s114 = sphi 0, %s114
      %s116 = sphi 0, %s114
      %s117 = sphi 0, %s116
      %s131 = sphi 0, %s117
      %s135 = sphi 0, %s135
      %s137 = sphi 0, %s135
      %s138 = sphi 0, %s137
      %s152 = sphi 0, %s138
      %s156 = sphi 0, %s156
      %s158 = sphi 0, %s156
      %s159 = sphi 0, %s158
      %s173 = sphi 0, %s159
      %s177 = sphi 0, %s177
      %s179 = sphi 0, %s177
      %s180 = sphi 0, %s179
      %s194 = sphi 0, %s180
      %s200 = sphi 0, %s202
      %s203 = sphi 0, %s200
      %s204 = sphi 0, %s203
      %s220 = sphi 0, %s204
    $region4: #{wide_basicblock_q_forward.1} parent=1 // loop_header_branch
      %20 = sbr.rel (%p18) target = $region8
    $region5: #{wide_basicblock_q_forward.1} parent=1 // loop_body
      %s22 = ssub.s32 %s17, 1
      %s23 = ssub.s32 %s17, 2
      %s24 = sadd.s32 %s17, 1
      %s25 = ssub.s32 %s17, %s24
      %p26 = scmp.eq.s32.totalorder %s25, 0
      %s28 = sadd.s32 %s27, 1
      %s29 = scalar_select %p26, %s27, %s28
      %p32 = pneg %p26
      %p33 = scmp.eq.s32.totalorder %s17, 1
      %p34 = por %p32, %p33
      %p35 = scmp.ne.s32.totalorder %s27, %s30
      %p36 = scmp.eq.s32.totalorder %s17, 0
      %p37 = por %p35, %p36
      %p38 = scmp.ne.s32.totalorder %s27, %s30
      %p39 = scmp.eq.s32.totalorder %s22, 1
      %p40 = por %p38, %p39
      %p41 = scmp.ne.s32.totalorder %s30, %s31
      %p42 = scmp.eq.s32.totalorder %s22, 0
      %p43 = por %p41, %p42
      %p44 = scmp.ne.s32.totalorder %s30, %s31
      %p45 = scmp.eq.s32.totalorder %s23, 1
      %p46 = por %p44, %p45
      %p48 = scmp.ne.s32.totalorder %s31, %s47
      %p49 = scmp.eq.s32.totalorder %s23, 0
      %p50 = por %p48, %p49
      %s52 = sadd.s32 %s51, 1
      %p55 = scmp.eq.s32.totalorder %s17, 1
      %p56 = scmp.ne.s32.totalorder %s51, %s53
      %p57 = scmp.eq.s32.totalorder %s17, 0
      %p58 = por %p56, %p57
      %p59 = scmp.ne.s32.totalorder %s51, %s53
      %p60 = scmp.eq.s32.totalorder %s22, 1
      %p61 = por %p59, %p60
      %p62 = scmp.ne.s32.totalorder %s53, %s54
      %p63 = scmp.eq.s32.totalorder %s22, 0
      %p64 = por %p62, %p63
      %p65 = scmp.ne.s32.totalorder %s53, %s54
      %p66 = scmp.eq.s32.totalorder %s23, 1
      %p67 = por %p65, %p66
      %p69 = scmp.ne.s32.totalorder %s54, %s68
      %p70 = scmp.eq.s32.totalorder %s23, 0
      %p71 = por %p69, %p70
      %s73 = sadd.s32 %s72, 1
      %p76 = scmp.eq.s32.totalorder %s17, 1
      %p77 = scmp.ne.s32.totalorder %s72, %s74
      %p78 = scmp.eq.s32.totalorder %s17, 0
      %p79 = por %p77, %p78
      %p80 = scmp.ne.s32.totalorder %s72, %s74
      %p81 = scmp.eq.s32.totalorder %s22, 1
      %p82 = por %p80, %p81
      %p83 = scmp.ne.s32.totalorder %s74, %s75
      %p84 = scmp.eq.s32.totalorder %s22, 0
      %p85 = por %p83, %p84
      %p86 = scmp.ne.s32.totalorder %s74, %s75
      %p87 = scmp.eq.s32.totalorder %s23, 1
      %p88 = por %p86, %p87
      %p90 = scmp.ne.s32.totalorder %s75, %s89
      %p91 = scmp.eq.s32.totalorder %s23, 0
      %p92 = por %p90, %p91
      %s94 = sadd.s32 %s93, 1
      %p97 = scmp.eq.s32.totalorder %s17, 1
      %p98 = scmp.ne.s32.totalorder %s93, %s95
      %p99 = scmp.eq.s32.totalorder %s17, 0
      %p100 = por %p98, %p99
      %p101 = scmp.ne.s32.totalorder %s93, %s95
      %p102 = scmp.eq.s32.totalorder %s22, 1
      %p103 = por %p101, %p102
      %p104 = scmp.ne.s32.totalorder %s95, %s96
      %p105 = scmp.eq.s32.totalorder %s22, 0
      %p106 = por %p104, %p105
      %p107 = scmp.ne.s32.totalorder %s95, %s96
      %p108 = scmp.eq.s32.totalorder %s23, 1
      %p109 = por %p107, %p108
      %p111 = scmp.ne.s32.totalorder %s96, %s110
      %p112 = scmp.eq.s32.totalorder %s23, 0
      %p113 = por %p111, %p112
      %s115 = sadd.s32 %s114, 1
      %p118 = scmp.eq.s32.totalorder %s17, 1
      %p119 = scmp.ne.s32.totalorder %s114, %s116
      %p120 = scmp.eq.s32.totalorder %s17, 0
      %p121 = por %p119, %p120
      %p122 = scmp.ne.s32.totalorder %s114, %s116
      %p123 = scmp.eq.s32.totalorder %s22, 1
      %p124 = por %p122, %p123
      %p125 = scmp.ne.s32.totalorder %s116, %s117
      %p126 = scmp.eq.s32.totalorder %s22, 0
      %p127 = por %p125, %p126
      %p128 = scmp.ne.s32.totalorder %s116, %s117
      %p129 = scmp.eq.s32.totalorder %s23, 1
      %p130 = por %p128, %p129
      %p132 = scmp.ne.s32.totalorder %s117, %s131
      %p133 = scmp.eq.s32.totalorder %s23, 0
      %p134 = por %p132, %p133
      %s136 = sadd.s32 %s135, 1
      %p139 = scmp.eq.s32.totalorder %s17, 1
      %p140 = scmp.ne.s32.totalorder %s135, %s137
      %p141 = scmp.eq.s32.totalorder %s17, 0
      %p142 = por %p140, %p141
      %p143 = scmp.ne.s32.totalorder %s135, %s137
      %p144 = scmp.eq.s32.totalorder %s22, 1
      %p145 = por %p143, %p144
      %p146 = scmp.ne.s32.totalorder %s137, %s138
      %p147 = scmp.eq.s32.totalorder %s22, 0
      %p148 = por %p146, %p147
      %p149 = scmp.ne.s32.totalorder %s137, %s138
      %p150 = scmp.eq.s32.totalorder %s23, 1
      %p151 = por %p149, %p150
      %p153 = scmp.ne.s32.totalorder %s138, %s152
      %p154 = scmp.eq.s32.totalorder %s23, 0
      %p155 = por %p153, %p154
      %s157 = sadd.s32 %s156, 1
      %p160 = scmp.eq.s32.totalorder %s17, 1
      %p161 = scmp.ne.s32.totalorder %s156, %s158
      %p162 = scmp.eq.s32.totalorder %s17, 0
      %p163 = por %p161, %p162
      %p164 = scmp.ne.s32.totalorder %s156, %s158
      %p165 = scmp.eq.s32.totalorder %s22, 1
      %p166 = por %p164, %p165
      %p167 = scmp.ne.s32.totalorder %s158, %s159
      %p168 = scmp.eq.s32.totalorder %s22, 0
      %p169 = por %p167, %p168
      %p170 = scmp.ne.s32.totalorder %s158, %s159
      %p171 = scmp.eq.s32.totalorder %s23, 1
      %p172 = por %p170, %p171
      %p174 = scmp.ne.s32.totalorder %s159, %s173
      %p175 = scmp.eq.s32.totalorder %s23, 0
      %p176 = por %p174, %p175
      %s178 = sadd.s32 %s177, 1
      %p181 = scmp.eq.s32.totalorder %s17, 1
      %p182 = scmp.ne.s32.totalorder %s177, %s179
      %p183 = scmp.eq.s32.totalorder %s17, 0
      %p184 = por %p182, %p183
      %p185 = scmp.ne.s32.totalorder %s177, %s179
      %p186 = scmp.eq.s32.totalorder %s22, 1
      %p187 = por %p185, %p186
      %p188 = scmp.ne.s32.totalorder %s179, %s180
      %p189 = scmp.eq.s32.totalorder %s22, 0
      %p190 = por %p188, %p189
      %p191 = scmp.ne.s32.totalorder %s179, %s180
      %p192 = scmp.eq.s32.totalorder %s23, 1
      %p193 = por %p191, %p192
      %p195 = scmp.ne.s32.totalorder %s180, %s194
      %p196 = scmp.eq.s32.totalorder %s23, 0
      %p197 = por %p195, %p196
      %s198 = ssub.s32 %s17, %s24
      %p199 = scmp.eq.s32.totalorder %s198, 0
      %s201 = sadd.s32 %s200, 1
      %s202 = scalar_select %p199, %s200, %s201
      %p205 = pneg %p199
      %p206 = scmp.eq.s32.totalorder %s17, 1
      %p207 = por %p205, %p206
      %p208 = scmp.ne.s32.totalorder %s200, %s203
      %p209 = scmp.eq.s32.totalorder %s17, 0
      %p210 = por %p208, %p209
      %p211 = scmp.ne.s32.totalorder %s200, %s203
      %p212 = scmp.eq.s32.totalorder %s22, 1
      %p213 = por %p211, %p212
      %p214 = scmp.ne.s32.totalorder %s203, %s204
      %p215 = scmp.eq.s32.totalorder %s22, 0
      %p216 = por %p214, %p215
      %p217 = scmp.ne.s32.totalorder %s203, %s204
      %p218 = scmp.eq.s32.totalorder %s23, 1
      %p219 = por %p217, %p218
      %p221 = scmp.ne.s32.totalorder %s204, %s220
      %p222 = scmp.eq.s32.totalorder %s23, 0
      %p223 = por %p221, %p222
      %p224 = scmp.le.s32.totalorder 1, %s17
      %p225 = scmp.lt.s32.totalorder %s17, 3
      %p226 = pnand %p224, %p225
      %p227 = pneg %p226
      // Predicated region
      $region9: #{wide_basicblock_q_forward.1} parent=5 // pred_check
        _
      $region10: #{wide_basicblock_q_forward.1} parent=5 // pred_check_branch
        %229 = sbr.rel (%p226) target = $region12
      $region11: #{wide_basicblock_q_forward.1} parent=5 // pred_region
        %s230 = ssub.s32 %s17, 1
        // Predicated region
        $region13: #{wide_basicblock_q_forward.1} parent=11 // pred_check
          %p231 = pneg %p64
        $region14: #{wide_basicblock_q_forward.1} parent=11 // pred_check_branch
          %233 = sbr.rel (%p231) target = $region16
        $region15: #{wide_basicblock_q_forward.1} parent=11 // pred_region
          _
        $region16: #{wide_basicblock_q_forward.1} parent=11 // pred_fallthru
          _
        // Predicated region
        $region17: #{wide_basicblock_q_forward.1} parent=11 // pred_check
          %p234 = pneg %p85
        $region18: #{wide_basicblock_q_forward.1} parent=11 // pred_check_branch
          %236 = sbr.rel (%p234) target = $region20
        $region19: #{wide_basicblock_q_forward.1} parent=11 // pred_region
          _
        $region20: #{wide_basicblock_q_forward.1} parent=11 // pred_fallthru
          _
        // Predicated region
        $region21: #{wide_basicblock_q_forward.1} parent=11 // pred_check
          %p237 = pneg %p106
        $region22: #{wide_basicblock_q_forward.1} parent=11 // pred_check_branch
          %239 = sbr.rel (%p237) target = $region24
        $region23: #{wide_basicblock_q_forward.1} parent=11 // pred_region
          _
        $region24: #{wide_basicblock_q_forward.1} parent=11 // pred_fallthru
          _
        // Predicated region
        $region25: #{wide_basicblock_q_forward.1} parent=11 // pred_check
          %p240 = pneg %p127
        $region26: #{wide_basicblock_q_forward.1} parent=11 // pred_check_branch
          %242 = sbr.rel (%p240) target = $region28
        $region27: #{wide_basicblock_q_forward.1} parent=11 // pred_region
          _
        $region28: #{wide_basicblock_q_forward.1} parent=11 // pred_fallthru
          _
        // Predicated region
        $region29: #{wide_basicblock_q_forward.1} parent=11 // pred_check
          %p243 = pneg %p148
        $region30: #{wide_basicblock_q_forward.1} parent=11 // pred_check_branch
          %245 = sbr.rel (%p243) target = $region32
        $region31: #{wide_basicblock_q_forward.1} parent=11 // pred_region
          _
        $region32: #{wide_basicblock_q_forward.1} parent=11 // pred_fallthru
          _
        // Predicated region
        $region33: #{wide_basicblock_q_forward.1} parent=11 // pred_check
          %p246 = pneg %p169
        $region34: #{wide_basicblock_q_forward.1} parent=11 // pred_check_branch
          %248 = sbr.rel (%p246) target = $region36
        $region35: #{wide_basicblock_q_forward.1} parent=11 // pred_region
          _
        $region36: #{wide_basicblock_q_forward.1} parent=11 // pred_fallthru
          _
        // Predicated region
        $region37: #{wide_basicblock_q_forward.1} parent=11 // pred_check
          %p249 = pneg %p190
        $region38: #{wide_basicblock_q_forward.1} parent=11 // pred_check_branch
          %251 = sbr.rel (%p249) target = $region40
        $region39: #{wide_basicblock_q_forward.1} parent=11 // pred_region
          _
        $region40: #{wide_basicblock_q_forward.1} parent=11 // pred_fallthru
          _
      $region12: #{wide_basicblock_q_forward.1} parent=5 // pred_fallthru
        _
      %p252 = scmp.lt.s32.totalorder %s17, 2
      // Predicated region
      $region41: #{wide_basicblock_q_forward.1} parent=5 // pred_check
        %p253 = pneg %p252
      $region42: #{wide_basicblock_q_forward.1} parent=5 // pred_check_branch
        %255 = sbr.rel (%p253) target = $region44
      $region43: #{wide_basicblock_q_forward.1} parent=5 // pred_region
        // Predicated region
        $region45: #{wide_basicblock_q_forward.1} parent=43 // pred_check
          %p256 = pneg %p37
        $region46: #{wide_basicblock_q_forward.1} parent=43 // pred_check_branch
          %258 = sbr.rel (%p256) target = $region48
        $region47: #{wide_basicblock_q_forward.1} parent=43 // pred_region
          %p259 = scmp.lt.s32.totalorder %s17, 1
          %s260 = scalar_select %p259, %s17, 1
          %s261 = smul.addr %s260, 32
          %s262 = smul.addr %s261, 8
          %s263 = scalar_lea.vmem %s0, %s262
        $region48: #{wide_basicblock_q_forward.1} parent=43 // pred_fallthru
          _
      $region44: #{wide_basicblock_q_forward.1} parent=5 // pred_fallthru
        _
      %p264 = scmp.le.s32.totalorder 1, %s17
      %p265 = scmp.lt.s32.totalorder %s17, 3
      %p266 = pnand %p264, %p265
      %p267 = pneg %p266
      // Predicated region
      $region49: #{wide_basicblock_q_forward.1} parent=5 // pred_check
        _
      $region50: #{wide_basicblock_q_forward.1} parent=5 // pred_check_branch
        %269 = sbr.rel (%p266) target = $region52
      $region51: #{wide_basicblock_q_forward.1} parent=5 // pred_region
        %s270 = ssub.s32 %s17, 1
        %p271 = scmp.lt.s32.totalorder %s22, 1
        %s272 = scalar_select %p271, %s22, 1
        %s273 = smul.addr %s272, 32
        %s274 = smul.addr %s273, 8
        %s275 = scalar_lea.vmem %s0, %s274
        %p276 = pneg %p43
        %p277 = pneg %p40
        %p278 = pneg %p64
        %p279 = pneg %p61
        %p280 = pneg %p85
        %p281 = pneg %p82
        %p282 = pneg %p106
        %p283 = pneg %p103
        %p284 = pneg %p127
        %p285 = pneg %p124
        %p286 = pneg %p148
        %p287 = pneg %p145
        %p288 = pneg %p169
        %p289 = pneg %p166
        %p290 = pneg %p190
        %p291 = pneg %p187
        %p292 = pneg %p216
        %p293 = pneg %p213
        %s294 = sand.u32 %s203, 1
        %s295 = scalar_lea.sflag [#allocation5], %s294
        %s296 = sand.u32 %s203, 1
        %s297 = smul.addr %s296, 256
        %s298 = scalar_lea.vmem [#allocation4], %s297
        %p299 = scmp.lt.s32.totalorder %s22, 1
        %s300 = scalar_select %p299, %s22, 1
        %s301 = smul.addr %s300, 32
        %s302 = smul.addr %s301, 8
        %s303 = scalar_lea.vmem %s0, %s302
        %v305 = vld [vmem:[%s303] sm:$0xff]
        %v306 = vld [vmem:[%s303 + $0x8] sm:$0xff]
        %v307 = vld [vmem:[%s303 + $0x10] sm:$0xff]
        %v308 = vld [vmem:[%s303 + $0x18] sm:$0xff]
        %v309 = vld [vmem:[%s303 + $0x20] sm:$0xff]
        %v310 = vld [vmem:[%s303 + $0x28] sm:$0xff]
        %v311 = vld [vmem:[%s303 + $0x30] sm:$0xff]
        %v312 = vld [vmem:[%s303 + $0x38] sm:$0xff]
        %v313 = vld [vmem:[%s303 + $0x40] sm:$0xff]
        %v314 = vld [vmem:[%s303 + $0x48] sm:$0xff]
        %v315 = vld [vmem:[%s303 + $0x50] sm:$0xff]
        %v316 = vld [vmem:[%s303 + $0x58] sm:$0xff]
        %v317 = vld [vmem:[%s303 + $0x60] sm:$0xff]
        %v318 = vld [vmem:[%s303 + $0x68] sm:$0xff]
        %v319 = vld [vmem:[%s303 + $0x70] sm:$0xff]
        %v320 = vld [vmem:[%s303 + $0x78] sm:$0xff]
        %v321 = vld [vmem:[%s303 + $0x80] sm:$0xff]
        %v322 = vld [vmem:[%s303 + $0x88] sm:$0xff]
        %v323 = vld [vmem:[%s303 + $0x90] sm:$0xff]
        %v324 = vld [vmem:[%s303 + $0x98] sm:$0xff]
        %v325 = vld [vmem:[%s303 + $0xa0] sm:$0xff]
        %v326 = vld [vmem:[%s303 + $0xa8] sm:$0xff]
        %v327 = vld [vmem:[%s303 + $0xb0] sm:$0xff]
        %v328 = vld [vmem:[%s303 + $0xb8] sm:$0xff]
        %v329 = vld [vmem:[%s303 + $0xc0] sm:$0xff]
        %v330 = vld [vmem:[%s303 + $0xc8] sm:$0xff]
        %v331 = vld [vmem:[%s303 + $0xd0] sm:$0xff]
        %v332 = vld [vmem:[%s303 + $0xd8] sm:$0xff]
        %v333 = vld [vmem:[%s303 + $0xe0] sm:$0xff]
        %v334 = vld [vmem:[%s303 + $0xe8] sm:$0xff]
        %v335 = vld [vmem:[%s303 + $0xf0] sm:$0xff]
        %v336 = vld [vmem:[%s303 + $0xf8] sm:$0xff]
        %v337 = vld [vmem:[%s1] sm:$0x1]
        %v338 = vld [vmem:[%s2] sm:$0x1]
        %v340 = vlaneseq
        %v341 = vshrl.u32 %v340, 7
        %v342 = vsub.s32 0, %v341
        %v343 = vrot.slane %v337, %v342
        %v345 = vmul.f32 %v305, %v343
        %v346 = vmul.f32 %v306, %v343
        %v347 = vmul.f32 %v307, %v343
        %v348 = vmul.f32 %v308, %v343
        %v349 = vmul.f32 %v309, %v343
        %v350 = vmul.f32 %v310, %v343
        %v351 = vmul.f32 %v311, %v343
        %v352 = vmul.f32 %v312, %v343
        %v353 = vmul.f32 %v313, %v343
        %v354 = vmul.f32 %v314, %v343
        %v355 = vmul.f32 %v315, %v343
        %v356 = vmul.f32 %v316, %v343
        %v357 = vmul.f32 %v317, %v343
        %v358 = vmul.f32 %v318, %v343
        %v359 = vmul.f32 %v319, %v343
        %v360 = vmul.f32 %v320, %v343
        %v361 = vmul.f32 %v321, %v343
        %v362 = vmul.f32 %v322, %v343
        %v363 = vmul.f32 %v323, %v343
        %v364 = vmul.f32 %v324, %v343
        %v365 = vmul.f32 %v325, %v343
        %v366 = vmul.f32 %v326, %v343
        %v367 = vmul.f32 %v327, %v343
        %v368 = vmul.f32 %v328, %v343
        %v369 = vmul.f32 %v329, %v343
        %v370 = vmul.f32 %v330, %v343
        %v371 = vmul.f32 %v331, %v343
        %v372 = vmul.f32 %v332, %v343
        %v373 = vmul.f32 %v333, %v343
        %v374 = vmul.f32 %v334, %v343
        %v375 = vmul.f32 %v335, %v343
        %v376 = vmul.f32 %v336, %v343
        %v378 = vlaneseq
        %v379 = vshrl.u32 %v378, 7
        %v380 = vsub.s32 0, %v379
        %v381 = vrot.slane %v338, %v380
        %v383 = vadd.f32 %v345, %v381
        %v384 = vadd.f32 %v346, %v381
        %v385 = vadd.f32 %v347, %v381
        %v386 = vadd.f32 %v348, %v381
        %v387 = vadd.f32 %v349, %v381
        %v388 = vadd.f32 %v350, %v381
        %v389 = vadd.f32 %v351, %v381
        %v390 = vadd.f32 %v352, %v381
        %v391 = vadd.f32 %v353, %v381
        %v392 = vadd.f32 %v354, %v381
        %v393 = vadd.f32 %v355, %v381
        %v394 = vadd.f32 %v356, %v381
        %v395 = vadd.f32 %v357, %v381
        %v396 = vadd.f32 %v358, %v381
        %v397 = vadd.f32 %v359, %v381
        %v398 = vadd.f32 %v360, %v381
        %v399 = vadd.f32 %v361, %v381
        %v400 = vadd.f32 %v362, %v381
        %v401 = vadd.f32 %v363, %v381
        %v402 = vadd.f32 %v364, %v381
        %v403 = vadd.f32 %v365, %v381
        %v404 = vadd.f32 %v366, %v381
        %v405 = vadd.f32 %v367, %v381
        %v406 = vadd.f32 %v368, %v381
        %v407 = vadd.f32 %v369, %v381
        %v408 = vadd.f32 %v370, %v381
        %v409 = vadd.f32 %v371, %v381
        %v410 = vadd.f32 %v372, %v381
        %v411 = vadd.f32 %v373, %v381
        %v412 = vadd.f32 %v374, %v381
        %v413 = vadd.f32 %v375, %v381
        %v414 = vadd.f32 %v376, %v381
        %v415 = vmax.f32 %v383, 0.0
        %v416 = vmax.f32 %v384, 0.0
        %v417 = vmax.f32 %v385, 0.0
        %v418 = vmax.f32 %v386, 0.0
        %v419 = vmax.f32 %v387, 0.0
        %v420 = vmax.f32 %v388, 0.0
        %v421 = vmax.f32 %v389, 0.0
        %v422 = vmax.f32 %v390, 0.0
        %v423 = vmax.f32 %v391, 0.0
        %v424 = vmax.f32 %v392, 0.0
        %v425 = vmax.f32 %v393, 0.0
        %v426 = vmax.f32 %v394, 0.0
        %v427 = vmax.f32 %v395, 0.0
        %v428 = vmax.f32 %v396, 0.0
        %v429 = vmax.f32 %v397, 0.0
        %v430 = vmax.f32 %v398, 0.0
        %v431 = vmax.f32 %v399, 0.0
        %v432 = vmax.f32 %v400, 0.0
        %v433 = vmax.f32 %v401, 0.0
        %v434 = vmax.f32 %v402, 0.0
        %v435 = vmax.f32 %v403, 0.0
        %v436 = vmax.f32 %v404, 0.0
        %v437 = vmax.f32 %v405, 0.0
        %v438 = vmax.f32 %v406, 0.0
        %v439 = vmax.f32 %v407, 0.0
        %v440 = vmax.f32 %v408, 0.0
        %v441 = vmax.f32 %v409, 0.0
        %v442 = vmax.f32 %v410, 0.0
        %v443 = vmax.f32 %v411, 0.0
        %v444 = vmax.f32 %v412, 0.0
        %v445 = vmax.f32 %v413, 0.0
        %v446 = vmax.f32 %v414, 0.0
        %v447 = vmin.f32 %v415, 1.0
        %v448 = vmin.f32 %v416, 1.0
        %v449 = vmin.f32 %v417, 1.0
        %v450 = vmin.f32 %v418, 1.0
        %v451 = vmin.f32 %v419, 1.0
        %v452 = vmin.f32 %v420, 1.0
        %v453 = vmin.f32 %v421, 1.0
        %v454 = vmin.f32 %v422, 1.0
        %v455 = vmin.f32 %v423, 1.0
        %v456 = vmin.f32 %v424, 1.0
        %v457 = vmin.f32 %v425, 1.0
        %v458 = vmin.f32 %v426, 1.0
        %v459 = vmin.f32 %v427, 1.0
        %v460 = vmin.f32 %v428, 1.0
        %v461 = vmin.f32 %v429, 1.0
        %v462 = vmin.f32 %v430, 1.0
        %v463 = vmin.f32 %v431, 1.0
        %v464 = vmin.f32 %v432, 1.0
        %v465 = vmin.f32 %v433, 1.0
        %v466 = vmin.f32 %v434, 1.0
        %v467 = vmin.f32 %v435, 1.0
        %v468 = vmin.f32 %v436, 1.0
        %v469 = vmin.f32 %v437, 1.0
        %v470 = vmin.f32 %v438, 1.0
        %v471 = vmin.f32 %v439, 1.0
        %v472 = vmin.f32 %v440, 1.0
        %v473 = vmin.f32 %v441, 1.0
        %v474 = vmin.f32 %v442, 1.0
        %v475 = vmin.f32 %v443, 1.0
        %v476 = vmin.f32 %v444, 1.0
        %v477 = vmin.f32 %v445, 1.0
        %v478 = vmin.f32 %v446, 1.0
        %v479 = vmul.f32 %v447, 15.0
        %v480 = vmul.f32 %v448, 15.0
        %v481 = vmul.f32 %v449, 15.0
        %v482 = vmul.f32 %v450, 15.0
        %v483 = vmul.f32 %v451, 15.0
        %v484 = vmul.f32 %v452, 15.0
        %v485 = vmul.f32 %v453, 15.0
        %v486 = vmul.f32 %v454, 15.0
        %v487 = vmul.f32 %v455, 15.0
        %v488 = vmul.f32 %v456, 15.0
        %v489 = vmul.f32 %v457, 15.0
        %v490 = vmul.f32 %v458, 15.0
        %v491 = vmul.f32 %v459, 15.0
        %v492 = vmul.f32 %v460, 15.0
        %v493 = vmul.f32 %v461, 15.0
        %v494 = vmul.f32 %v462, 15.0
        %v495 = vmul.f32 %v463, 15.0
        %v496 = vmul.f32 %v464, 15.0
        %v497 = vmul.f32 %v465, 15.0
        %v498 = vmul.f32 %v466, 15.0
        %v499 = vmul.f32 %v467, 15.0
        %v500 = vmul.f32 %v468, 15.0
        %v501 = vmul.f32 %v469, 15.0
        %v502 = vmul.f32 %v470, 15.0
        %v503 = vmul.f32 %v471, 15.0
        %v504 = vmul.f32 %v472, 15.0
        %v505 = vmul.f32 %v473, 15.0
        %v506 = vmul.f32 %v474, 15.0
        %v507 = vmul.f32 %v475, 15.0
        %v508 = vmul.f32 %v476, 15.0
        %v509 = vmul.f32 %v477, 15.0
        %v510 = vmul.f32 %v478, 15.0
        %v511 = vround.ne.pseudo %v479
        %v512 = vround.ne.pseudo %v480
        %v513 = vround.ne.pseudo %v481
        %v514 = vround.ne.pseudo %v482
        %v515 = vround.ne.pseudo %v483
        %v516 = vround.ne.pseudo %v484
        %v517 = vround.ne.pseudo %v485
        %v518 = vround.ne.pseudo %v486
        %v519 = vround.ne.pseudo %v487
        %v520 = vround.ne.pseudo %v488
        %v521 = vround.ne.pseudo %v489
        %v522 = vround.ne.pseudo %v490
        %v523 = vround.ne.pseudo %v491
        %v524 = vround.ne.pseudo %v492
        %v525 = vround.ne.pseudo %v493
        %v526 = vround.ne.pseudo %v494
        %v527 = vround.ne.pseudo %v495
        %v528 = vround.ne.pseudo %v496
        %v529 = vround.ne.pseudo %v497
        %v530 = vround.ne.pseudo %v498
        %v531 = vround.ne.pseudo %v499
        %v532 = vround.ne.pseudo %v500
        %v533 = vround.ne.pseudo %v501
        %v534 = vround.ne.pseudo %v502
        %v535 = vround.ne.pseudo %v503
        %v536 = vround.ne.pseudo %v504
        %v537 = vround.ne.pseudo %v505
        %v538 = vround.ne.pseudo %v506
        %v539 = vround.ne.pseudo %v507
        %v540 = vround.ne.pseudo %v508
        %v541 = vround.ne.pseudo %v509
        %v542 = vround.ne.pseudo %v510
        %v543 = vrcp.pop 15.0
        %v544 = vmul.f32 %v511, %v543
        %v545 = vmul.f32 %v512, %v543
        %v546 = vmul.f32 %v513, %v543
        %v547 = vmul.f32 %v514, %v543
        %v548 = vmul.f32 %v515, %v543
        %v549 = vmul.f32 %v516, %v543
        %v550 = vmul.f32 %v517, %v543
        %v551 = vmul.f32 %v518, %v543
        %v552 = vmul.f32 %v519, %v543
        %v553 = vmul.f32 %v520, %v543
        %v554 = vmul.f32 %v521, %v543
        %v555 = vmul.f32 %v522, %v543
        %v556 = vmul.f32 %v523, %v543
        %v557 = vmul.f32 %v524, %v543
        %v558 = vmul.f32 %v525, %v543
        %v559 = vmul.f32 %v526, %v543
        %v560 = vmul.f32 %v527, %v543
        %v561 = vmul.f32 %v528, %v543
        %v562 = vmul.f32 %v529, %v543
        %v563 = vmul.f32 %v530, %v543
        %v564 = vmul.f32 %v531, %v543
        %v565 = vmul.f32 %v532, %v543
        %v566 = vmul.f32 %v533, %v543
        %v567 = vmul.f32 %v534, %v543
        %v568 = vmul.f32 %v535, %v543
        %v569 = vmul.f32 %v536, %v543
        %v570 = vmul.f32 %v537, %v543
        %v571 = vmul.f32 %v538, %v543
        %v572 = vmul.f32 %v539, %v543
        %v573 = vmul.f32 %v540, %v543
        %v574 = vmul.f32 %v541, %v543
        %v575 = vmul.f32 %v542, %v543
        %v576 = vpack.c.bf16 %v545, %v544
        %v577 = vpack.c.bf16 %v547, %v546
        %v578 = vpack.c.bf16 %v549, %v548
        %v579 = vpack.c.bf16 %v551, %v550
        %v580 = vpack.c.bf16 %v553, %v552
        %v581 = vpack.c.bf16 %v555, %v554
        %v582 = vpack.c.bf16 %v557, %v556
        %v583 = vpack.c.bf16 %v559, %v558
        %v584 = vpack.c.bf16 %v561, %v560
        %v585 = vpack.c.bf16 %v563, %v562
        %v586 = vpack.c.bf16 %v565, %v564
        %v587 = vpack.c.bf16 %v567, %v566
        %v588 = vpack.c.bf16 %v569, %v568
        %v589 = vpack.c.bf16 %v571, %v570
        %v590 = vpack.c.bf16 %v573, %v572
        %v591 = vpack.c.bf16 %v575, %v574
        %vm592 = vcmask 257024
        %593 = vst.msk [vmem:[#allocation2] sm:$0xf] %vm592, 0
        %594 = vst.msk [vmem:[#allocation2 + $0x4] sm:$0xf] %vm592, 0
        %vm595 = vcmask 253952
        %596 = vst.msk [vmem:[#allocation2 + $0x8] sm:$0x1] %vm595, 0
        %597 = vst.msk [vmem:[#allocation2 + $0xc] sm:$0xf] %vm592, 0
        %598 = vst.msk [vmem:[#allocation2 + $0x10] sm:$0xf] %vm592, 0
        %599 = vst.msk [vmem:[#allocation2 + $0x14] sm:$0x1] %vm595, 0
        %600 = vst.msk [vmem:[#allocation2 + $0x18] sm:$0xf] %vm592, 0
        %601 = vst.msk [vmem:[#allocation2 + $0x1c] sm:$0xf] %vm592, 0
        %602 = vst.msk [vmem:[#allocation2 + $0x20] sm:$0x1] %vm595, 0
        %603 = vst.msk [vmem:[#allocation2 + $0x24] sm:$0xf] %vm592, 0
        %604 = vst.msk [vmem:[#allocation2 + $0x28] sm:$0xf] %vm592, 0
        %605 = vst.msk [vmem:[#allocation2 + $0x2c] sm:$0x1] %vm595, 0
        %606 = vst.msk [vmem:[#allocation2 + $0x30] sm:$0xf] %vm592, 0
        %607 = vst.msk [vmem:[#allocation2 + $0x34] sm:$0xf] %vm592, 0
        %608 = vst.msk [vmem:[#allocation2 + $0x38] sm:$0x1] %vm595, 0
        %609 = vst.msk [vmem:[#allocation2 + $0x3c] sm:$0xf] %vm592, 0
        %610 = vst.msk [vmem:[#allocation2 + $0x40] sm:$0xf] %vm592, 0
        %611 = vst.msk [vmem:[#allocation2 + $0x44] sm:$0x1] %vm595, 0
        %612 = vst.msk [vmem:[#allocation2 + $0x48] sm:$0xf] %vm592, 0
        %613 = vst.msk [vmem:[#allocation2 + $0x4c] sm:$0xf] %vm592, 0
        %614 = vst.msk [vmem:[#allocation2 + $0x50] sm:$0x1] %vm595, 0
        %615 = vst.msk [vmem:[#allocation2 + $0x54] sm:$0xf] %vm592, 0
        %616 = vst.msk [vmem:[#allocation2 + $0x58] sm:$0xf] %vm592, 0
        %617 = vst.msk [vmem:[#allocation2 + $0x5c] sm:$0x1] %vm595, 0
        %618 = vst.msk [vmem:[#allocation2 + $0x60] sm:$0xf] %vm592, 0
        %619 = vst.msk [vmem:[#allocation2 + $0x64] sm:$0xf] %vm592, 0
        %620 = vst.msk [vmem:[#allocation2 + $0x68] sm:$0x1] %vm595, 0
        %621 = vst.msk [vmem:[#allocation2 + $0x6c] sm:$0xf] %vm592, 0
        %622 = vst.msk [vmem:[#allocation2 + $0x70] sm:$0xf] %vm592, 0
        %623 = vst.msk [vmem:[#allocation2 + $0x74] sm:$0x1] %vm595, 0
        %624 = vst.msk [vmem:[#allocation2 + $0x78] sm:$0xf] %vm592, 0
        %625 = vst.msk [vmem:[#allocation2 + $0x7c] sm:$0xf] %vm592, 0
        %626 = vst.msk [vmem:[#allocation2 + $0x80] sm:$0x1] %vm595, 0
        %627 = vst.msk [vmem:[#allocation2 + $0x84] sm:$0xf] %vm592, 0
        %628 = vst.msk [vmem:[#allocation2 + $0x88] sm:$0xf] %vm592, 0
        %629 = vst.msk [vmem:[#allocation2 + $0x8c] sm:$0x1] %vm595, 0
        %630 = vst.msk [vmem:[#allocation2 + $0x90] sm:$0xf] %vm592, 0
        %631 = vst.msk [vmem:[#allocation2 + $0x94] sm:$0xf] %vm592, 0
        %632 = vst.msk [vmem:[#allocation2 + $0x98] sm:$0x1] %vm595, 0
        %633 = vst.msk [vmem:[#allocation2 + $0x9c] sm:$0xf] %vm592, 0
        %634 = vst.msk [vmem:[#allocation2 + $0xa0] sm:$0xf] %vm592, 0
        %635 = vst.msk [vmem:[#allocation2 + $0xa4] sm:$0x1] %vm595, 0
        %636 = vst.msk [vmem:[#allocation2 + $0xa8] sm:$0xf] %vm592, 0
        %637 = vst.msk [vmem:[#allocation2 + $0xac] sm:$0xf] %vm592, 0
        %638 = vst.msk [vmem:[#allocation2 + $0xb0] sm:$0x1] %vm595, 0
        %639 = vst.msk [vmem:[#allocation2 + $0xb4] sm:$0xf] %vm592, 0
        %640 = vst.msk [vmem:[#allocation2 + $0xb8] sm:$0xf] %vm592, 0
        %641 = vst.msk [vmem:[#allocation2 + $0xbc] sm:$0x1] %vm595, 0
        %642 = vst.msk [vmem:[#allocation2 + $0xc0] sm:$0xf] %vm592, 0
        %643 = vst.msk [vmem:[#allocation2 + $0xc4] sm:$0xf] %vm592, 0
        %644 = vst.msk [vmem:[#allocation2 + $0xc8] sm:$0x1] %vm595, 0
        %645 = vst.msk [vmem:[#allocation2 + $0xcc] sm:$0xf] %vm592, 0
        %646 = vst.msk [vmem:[#allocation2 + $0xd0] sm:$0xf] %vm592, 0
        %647 = vst.msk [vmem:[#allocation2 + $0xd4] sm:$0x1] %vm595, 0
        %v664 = vunpack.c.l.b16 %v576
        %v665 = vunpack.c.h.b16 %v576
        %v666 = vunpack.c.l.b16 %v577
        %v667 = vunpack.c.h.b16 %v577
        %v668 = vunpack.c.l.b16 %v578
        %v669 = vunpack.c.h.b16 %v578
        %v670 = vunpack.c.l.b16 %v579
        %v671 = vunpack.c.h.b16 %v579
        %v672 = vunpack.c.l.b16 %v580
        %v673 = vunpack.c.h.b16 %v580
        %v674 = vunpack.c.l.b16 %v581
        %v675 = vunpack.c.h.b16 %v581
        %v676 = vunpack.c.l.b16 %v582
        %v677 = vunpack.c.h.b16 %v582
        %v678 = vunpack.c.l.b16 %v583
        %v679 = vunpack.c.h.b16 %v583
        %v680 = vunpack.c.l.b16 %v584
        %v681 = vunpack.c.h.b16 %v584
        %v682 = vunpack.c.l.b16 %v585
        %v683 = vunpack.c.h.b16 %v585
        %v684 = vunpack.c.l.b16 %v586
        %v685 = vunpack.c.h.b16 %v586
        %v686 = vunpack.c.l.b16 %v587
        %v687 = vunpack.c.h.b16 %v587
        %v688 = vunpack.c.l.b16 %v588
        %v689 = vunpack.c.h.b16 %v588
        %v690 = vunpack.c.l.b16 %v589
        %v691 = vunpack.c.h.b16 %v589
        %v692 = vunpack.c.l.b16 %v590
        %v693 = vunpack.c.h.b16 %v590
        %v694 = vunpack.c.l.b16 %v591
        %v695 = vunpack.c.h.b16 %v591
        %v696 = vpack.c.b16 %v664, %v664
        %v697 = vpack.c.b16 %v665, %v665
        %v698 = vpack.c.b16 %v666, %v666
        %v699 = vpack.c.b16 %v667, %v667
        %v700 = vpack.c.b16 %v668, %v668
        %v701 = vpack.c.b16 %v669, %v669
        %v702 = vpack.c.b16 %v670, %v670
        %v703 = vpack.c.b16 %v671, %v671
        %v704 = vpack.c.b16 %v672, %v672
        %v705 = vpack.c.b16 %v673, %v673
        %v706 = vpack.c.b16 %v674, %v674
        %v707 = vpack.c.b16 %v675, %v675
        %v708 = vpack.c.b16 %v676, %v676
        %v709 = vpack.c.b16 %v677, %v677
        %v710 = vpack.c.b16 %v678, %v678
        %v711 = vpack.c.b16 %v679, %v679
        %v712 = vpack.c.b16 %v680, %v680
        %v713 = vpack.c.b16 %v681, %v681
        %v714 = vpack.c.b16 %v682, %v682
        %v715 = vpack.c.b16 %v683, %v683
        %v716 = vpack.c.b16 %v684, %v684
        %v717 = vpack.c.b16 %v685, %v685
        %v718 = vpack.c.b16 %v686, %v686
        %v719 = vpack.c.b16 %v687, %v687
        %v720 = vpack.c.b16 %v688, %v688
        %v721 = vpack.c.b16 %v689, %v689
        %v722 = vpack.c.b16 %v690, %v690
        %v723 = vpack.c.b16 %v691, %v691
        %v724 = vpack.c.b16 %v692, %v692
        %v725 = vpack.c.b16 %v693, %v693
        %v726 = vpack.c.b16 %v694, %v694
        %v727 = vpack.c.b16 %v695, %v695
        %vm728 = vsmask.f32 256
        %vm729 = vsmask.f32 4368
        %vm730 = vmor %vm728, %vm729
        %v732 = vshrl.u32 %v696, 16
        %v734 = vrot.slane %v732, 7
        %v735 = vshll.u32 %v696, 16
        %v737 = vor.u32 %v734, %v735
        %v738 = vrot.slane %v734, 4
        %v740 = vshrl.u32 %v697, 16
        %v742 = vrot.slane %v740, 7
        %v743 = vshll.u32 %v697, 16
        %v745 = vor.u32 %v742, %v743
        %v746 = vsel %vm730, %v738, %v745
        %v747 = vrot.slane %v742, 4
        %v749 = vshrl.u32 %v698, 16
        %v751 = vrot.slane %v749, 7
        %v752 = vshll.u32 %v698, 16
        %v754 = vor.u32 %v751, %v752
        %v755 = vrot.slane %v751, 4
        %v757 = vshrl.u32 %v699, 16
        %v759 = vrot.slane %v757, 7
        %v760 = vshll.u32 %v699, 16
        %v762 = vor.u32 %v759, %v760
        %v763 = vsel %vm730, %v755, %v762
        %v764 = vrot.slane %v759, 4
        %v766 = vshrl.u32 %v700, 16
        %v768 = vrot.slane %v766, 7
        %v769 = vshll.u32 %v700, 16
        %v771 = vor.u32 %v768, %v769
        %v772 = vrot.slane %v768, 4
        %v774 = vshrl.u32 %v701, 16
        %v776 = vrot.slane %v774, 7
        %v777 = vshll.u32 %v701, 16
        %v779 = vor.u32 %v776, %v777
        %v780 = vsel %vm730, %v772, %v779
        %v781 = vrot.slane %v776, 4
        %v783 = vshrl.u32 %v702, 16
        %v785 = vrot.slane %v783, 7
        %v786 = vshll.u32 %v702, 16
        %v788 = vor.u32 %v785, %v786
        %v789 = vrot.slane %v785, 4
        %v791 = vshrl.u32 %v703, 16
        %v793 = vrot.slane %v791, 7
        %v794 = vshll.u32 %v703, 16
        %v796 = vor.u32 %v793, %v794
        %v797 = vsel %vm730, %v789, %v796
        %v798 = vrot.slane %v793, 4
        %v800 = vshrl.u32 %v704, 16
        %v802 = vrot.slane %v800, 7
        %v803 = vshll.u32 %v704, 16
        %v805 = vor.u32 %v802, %v803
        %v806 = vrot.slane %v802, 4
        %v808 = vshrl.u32 %v705, 16
        %v810 = vrot.slane %v808, 7
        %v811 = vshll.u32 %v705, 16
        %v813 = vor.u32 %v810, %v811
        %v814 = vsel %vm730, %v806, %v813
        %v815 = vrot.slane %v810, 4
        %v817 = vshrl.u32 %v706, 16
        %v819 = vrot.slane %v817, 7
        %v820 = vshll.u32 %v706, 16
        %v822 = vor.u32 %v819, %v820
        %v823 = vrot.slane %v819, 4
        %v825 = vshrl.u32 %v707, 16
        %v827 = vrot.slane %v825, 7
        %v828 = vshll.u32 %v707, 16
        %v830 = vor.u32 %v827, %v828
        %v831 = vsel %vm730, %v823, %v830
        %v832 = vrot.slane %v827, 4
        %v834 = vshrl.u32 %v708, 16
        %v836 = vrot.slane %v834, 7
        %v837 = vshll.u32 %v708, 16
        %v839 = vor.u32 %v836, %v837
        %v840 = vrot.slane %v836, 4
        %v842 = vshrl.u32 %v709, 16
        %v844 = vrot.slane %v842, 7
        %v845 = vshll.u32 %v709, 16
        %v847 = vor.u32 %v844, %v845
        %v848 = vsel %vm730, %v840, %v847
        %v849 = vrot.slane %v844, 4
        %v851 = vshrl.u32 %v710, 16
        %v853 = vrot.slane %v851, 7
        %v854 = vshll.u32 %v710, 16
        %v856 = vor.u32 %v853, %v854
        %v857 = vrot.slane %v853, 4
        %v859 = vshrl.u32 %v711, 16
        %v861 = vrot.slane %v859, 7
        %v862 = vshll.u32 %v711, 16
        %v864 = vor.u32 %v861, %v862
        %v865 = vsel %vm730, %v857, %v864
        %v866 = vrot.slane %v861, 4
        %v868 = vshrl.u32 %v712, 16
        %v870 = vrot.slane %v868, 7
        %v871 = vshll.u32 %v712, 16
        %v873 = vor.u32 %v870, %v871
        %v874 = vrot.slane %v870, 4
        %v876 = vshrl.u32 %v713, 16
        %v878 = vrot.slane %v876, 7
        %v879 = vshll.u32 %v713, 16
        %v881 = vor.u32 %v878, %v879
        %v882 = vsel %vm730, %v874, %v881
        %v883 = vrot.slane %v878, 4
        %v885 = vshrl.u32 %v714, 16
        %v887 = vrot.slane %v885, 7
        %v888 = vshll.u32 %v714, 16
        %v890 = vor.u32 %v887, %v888
        %v891 = vrot.slane %v887, 4
        %v893 = vshrl.u32 %v715, 16
        %v895 = vrot.slane %v893, 7
        %v896 = vshll.u32 %v715, 16
        %v898 = vor.u32 %v895, %v896
        %v899 = vsel %vm730, %v891, %v898
        %v900 = vrot.slane %v895, 4
        %v902 = vshrl.u32 %v716, 16
        %v904 = vrot.slane %v902, 7
        %v905 = vshll.u32 %v716, 16
        %v907 = vor.u32 %v904, %v905
        %v908 = vrot.slane %v904, 4
        %v910 = vshrl.u32 %v717, 16
        %v912 = vrot.slane %v910, 7
        %v913 = vshll.u32 %v717, 16
        %v915 = vor.u32 %v912, %v913
        %v916 = vsel %vm730, %v908, %v915
        %v917 = vrot.slane %v912, 4
        %v919 = vshrl.u32 %v718, 16
        %v921 = vrot.slane %v919, 7
        %v922 = vshll.u32 %v718, 16
        %v924 = vor.u32 %v921, %v922
        %v925 = vrot.slane %v921, 4
        %v927 = vshrl.u32 %v719, 16
        %v929 = vrot.slane %v927, 7
        %v930 = vshll.u32 %v719, 16
        %v932 = vor.u32 %v929, %v930
        %v933 = vsel %vm730, %v925, %v932
        %v934 = vrot.slane %v929, 4
        %v936 = vshrl.u32 %v720, 16
        %v938 = vrot.slane %v936, 7
        %v939 = vshll.u32 %v720, 16
        %v941 = vor.u32 %v938, %v939
        %v942 = vrot.slane %v938, 4
        %v944 = vshrl.u32 %v721, 16
        %v946 = vrot.slane %v944, 7
        %v947 = vshll.u32 %v721, 16
        %v949 = vor.u32 %v946, %v947
        %v950 = vsel %vm730, %v942, %v949
        %v951 = vrot.slane %v946, 4
        %v953 = vshrl.u32 %v722, 16
        %v955 = vrot.slane %v953, 7
        %v956 = vshll.u32 %v722, 16
        %v958 = vor.u32 %v955, %v956
        %v959 = vrot.slane %v955, 4
        %v961 = vshrl.u32 %v723, 16
        %v963 = vrot.slane %v961, 7
        %v964 = vshll.u32 %v723, 16
        %v966 = vor.u32 %v963, %v964
        %v967 = vsel %vm730, %v959, %v966
        %v968 = vrot.slane %v963, 4
        %v970 = vshrl.u32 %v724, 16
        %v972 = vrot.slane %v970, 7
        %v973 = vshll.u32 %v724, 16
        %v975 = vor.u32 %v972, %v973
        %v976 = vrot.slane %v972, 4
        %v978 = vshrl.u32 %v725, 16
        %v980 = vrot.slane %v978, 7
        %v981 = vshll.u32 %v725, 16
        %v983 = vor.u32 %v980, %v981
        %v984 = vsel %vm730, %v976, %v983
        %v985 = vrot.slane %v980, 4
        %v987 = vshrl.u32 %v726, 16
        %v989 = vrot.slane %v987, 7
        %v990 = vshll.u32 %v726, 16
        %v992 = vor.u32 %v989, %v990
        %v993 = vrot.slane %v989, 4
        %v995 = vshrl.u32 %v727, 16
        %v997 = vrot.slane %v995, 7
        %v998 = vshll.u32 %v727, 16
        %v1000 = vor.u32 %v997, %v998
        %v1001 = vsel %vm730, %v993, %v1000
        %v1002 = vrot.slane %v997, 4
        %s1051 = scalar_lea.vmem [#allocation2], 12
        %vm1052 = vcmask 257024
        %vm1053 = vsmask.f32 7938
        %vm1054 = vmand %vm1052, %vm1053
        %v1055 = vld [vmem:[%s1051] sm:$0xf]
        %v1056 = vsel %vm1054, %v737, %v1055
        %1057 = vst [vmem:[%s1051] sm:$0xf] %v1056
        %1058 = vst.msk [vmem:[%s1051 + $0x4] sm:$0xf] %vm592, %v746
        %vm1059 = vcmask 253952
        %vm1060 = vmand %vm1059, %vm728
        %v1061 = vld [vmem:[%s1051 + $0x8] sm:$0x1]
        %v1062 = vsel %vm1060, %v747, %v1061
        %1063 = vst [vmem:[%s1051 + $0x8] sm:$0x1] %v1062
        %v1064 = vld [vmem:[%s1051 + $0xc] sm:$0xf]
        %v1065 = vsel %vm1054, %v754, %v1064
        %1066 = vst [vmem:[%s1051 + $0xc] sm:$0xf] %v1065
        %1067 = vst.msk [vmem:[%s1051 + $0x10] sm:$0xf] %vm592, %v763
        %v1068 = vld [vmem:[%s1051 + $0x14] sm:$0x1]
        %v1069 = vsel %vm1060, %v764, %v1068
        %1070 = vst [vmem:[%s1051 + $0x14] sm:$0x1] %v1069
        %v1071 = vld [vmem:[%s1051 + $0x18] sm:$0xf]
        %v1072 = vsel %vm1054, %v771, %v1071
        %1073 = vst [vmem:[%s1051 + $0x18] sm:$0xf] %v1072
        %1074 = vst.msk [vmem:[%s1051 + $0x1c] sm:$0xf] %vm592, %v780
        %v1075 = vld [vmem:[%s1051 + $0x20] sm:$0x1]
        %v1076 = vsel %vm1060, %v781, %v1075
        %1077 = vst [vmem:[%s1051 + $0x20] sm:$0x1] %v1076
        %v1078 = vld [vmem:[%s1051 + $0x24] sm:$0xf]
        %v1079 = vsel %vm1054, %v788, %v1078
        %1080 = vst [vmem:[%s1051 + $0x24] sm:$0xf] %v1079
        %1081 = vst.msk [vmem:[%s1051 + $0x28] sm:$0xf] %vm592, %v797
        %v1082 = vld [vmem:[%s1051 + $0x2c] sm:$0x1]
        %v1083 = vsel %vm1060, %v798, %v1082
        %1084 = vst [vmem:[%s1051 + $0x2c] sm:$0x1] %v1083
        %v1085 = vld [vmem:[%s1051 + $0x30] sm:$0xf]
        %v1086 = vsel %vm1054, %v805, %v1085
        %1087 = vst [vmem:[%s1051 + $0x30] sm:$0xf] %v1086
        %1088 = vst.msk [vmem:[%s1051 + $0x34] sm:$0xf] %vm592, %v814
        %v1089 = vld [vmem:[%s1051 + $0x38] sm:$0x1]
        %v1090 = vsel %vm1060, %v815, %v1089
        %1091 = vst [vmem:[%s1051 + $0x38] sm:$0x1] %v1090
        %v1092 = vld [vmem:[%s1051 + $0x3c] sm:$0xf]
        %v1093 = vsel %vm1054, %v822, %v1092
        %1094 = vst [vmem:[%s1051 + $0x3c] sm:$0xf] %v1093
        %1095 = vst.msk [vmem:[%s1051 + $0x40] sm:$0xf] %vm592, %v831
        %v1096 = vld [vmem:[%s1051 + $0x44] sm:$0x1]
        %v1097 = vsel %vm1060, %v832, %v1096
        %1098 = vst [vmem:[%s1051 + $0x44] sm:$0x1] %v1097
        %v1099 = vld [vmem:[%s1051 + $0x48] sm:$0xf]
        %v1100 = vsel %vm1054, %v839, %v1099
        %1101 = vst [vmem:[%s1051 + $0x48] sm:$0xf] %v1100
        %1102 = vst.msk [vmem:[%s1051 + $0x4c] sm:$0xf] %vm592, %v848
        %v1103 = vld [vmem:[%s1051 + $0x50] sm:$0x1]
        %v1104 = vsel %vm1060, %v849, %v1103
        %1105 = vst [vmem:[%s1051 + $0x50] sm:$0x1] %v1104
        %v1106 = vld [vmem:[%s1051 + $0x54] sm:$0xf]
        %v1107 = vsel %vm1054, %v856, %v1106
        %1108 = vst [vmem:[%s1051 + $0x54] sm:$0xf] %v1107
        %1109 = vst.msk [vmem:[%s1051 + $0x58] sm:$0xf] %vm592, %v865
        %v1110 = vld [vmem:[%s1051 + $0x5c] sm:$0x1]
        %v1111 = vsel %vm1060, %v866, %v1110
        %1112 = vst [vmem:[%s1051 + $0x5c] sm:$0x1] %v1111
        %v1113 = vld [vmem:[%s1051 + $0x60] sm:$0xf]
        %v1114 = vsel %vm1054, %v873, %v1113
        %1115 = vst [vmem:[%s1051 + $0x60] sm:$0xf] %v1114
        %1116 = vst.msk [vmem:[%s1051 + $0x64] sm:$0xf] %vm592, %v882
        %v1117 = vld [vmem:[%s1051 + $0x68] sm:$0x1]
        %v1118 = vsel %vm1060, %v883, %v1117
        %1119 = vst [vmem:[%s1051 + $0x68] sm:$0x1] %v1118
        %v1120 = vld [vmem:[%s1051 + $0x6c] sm:$0xf]
        %v1121 = vsel %vm1054, %v890, %v1120
        %1122 = vst [vmem:[%s1051 + $0x6c] sm:$0xf] %v1121
        %1123 = vst.msk [vmem:[%s1051 + $0x70] sm:$0xf] %vm592, %v899
        %v1124 = vld [vmem:[%s1051 + $0x74] sm:$0x1]
        %v1125 = vsel %vm1060, %v900, %v1124
        %1126 = vst [vmem:[%s1051 + $0x74] sm:$0x1] %v1125
        %v1127 = vld [vmem:[%s1051 + $0x78] sm:$0xf]
        %v1128 = vsel %vm1054, %v907, %v1127
        %1129 = vst [vmem:[%s1051 + $0x78] sm:$0xf] %v1128
        %1130 = vst.msk [vmem:[%s1051 + $0x7c] sm:$0xf] %vm592, %v916
        %v1131 = vld [vmem:[%s1051 + $0x80] sm:$0x1]
        %v1132 = vsel %vm1060, %v917, %v1131
        %1133 = vst [vmem:[%s1051 + $0x80] sm:$0x1] %v1132
        %v1134 = vld [vmem:[%s1051 + $0x84] sm:$0xf]
        %v1135 = vsel %vm1054, %v924, %v1134
        %1136 = vst [vmem:[%s1051 + $0x84] sm:$0xf] %v1135
        %1137 = vst.msk [vmem:[%s1051 + $0x88] sm:$0xf] %vm592, %v933
        %v1138 = vld [vmem:[%s1051 + $0x8c] sm:$0x1]
        %v1139 = vsel %vm1060, %v934, %v1138
        %1140 = vst [vmem:[%s1051 + $0x8c] sm:$0x1] %v1139
        %v1141 = vld [vmem:[%s1051 + $0x90] sm:$0xf]
        %v1142 = vsel %vm1054, %v941, %v1141
        %1143 = vst [vmem:[%s1051 + $0x90] sm:$0xf] %v1142
        %1144 = vst.msk [vmem:[%s1051 + $0x94] sm:$0xf] %vm592, %v950
        %v1145 = vld [vmem:[%s1051 + $0x98] sm:$0x1]
        %v1146 = vsel %vm1060, %v951, %v1145
        %1147 = vst [vmem:[%s1051 + $0x98] sm:$0x1] %v1146
        %v1148 = vld [vmem:[%s1051 + $0x9c] sm:$0xf]
        %v1149 = vsel %vm1054, %v958, %v1148
        %1150 = vst [vmem:[%s1051 + $0x9c] sm:$0xf] %v1149
        %1151 = vst.msk [vmem:[%s1051 + $0xa0] sm:$0xf] %vm592, %v967
        %v1152 = vld [vmem:[%s1051 + $0xa4] sm:$0x1]
        %v1153 = vsel %vm1060, %v968, %v1152
        %1154 = vst [vmem:[%s1051 + $0xa4] sm:$0x1] %v1153
        %v1155 = vld [vmem:[%s1051 + $0xa8] sm:$0xf]
        %v1156 = vsel %vm1054, %v975, %v1155
        %1157 = vst [vmem:[%s1051 + $0xa8] sm:$0xf] %v1156
        %1158 = vst.msk [vmem:[%s1051 + $0xac] sm:$0xf] %vm592, %v984
        %v1159 = vld [vmem:[%s1051 + $0xb0] sm:$0x1]
        %v1160 = vsel %vm1060, %v985, %v1159
        %1161 = vst [vmem:[%s1051 + $0xb0] sm:$0x1] %v1160
        %v1162 = vld [vmem:[%s1051 + $0xb4] sm:$0xf]
        %v1163 = vsel %vm1054, %v992, %v1162
        %1164 = vst [vmem:[%s1051 + $0xb4] sm:$0xf] %v1163
        %1165 = vst.msk [vmem:[%s1051 + $0xb8] sm:$0xf] %vm592, %v1001
        %v1166 = vld [vmem:[%s1051 + $0xbc] sm:$0x1]
        %v1167 = vsel %vm1060, %v1002, %v1166
        %1168 = vst [vmem:[%s1051 + $0xbc] sm:$0x1] %v1167
        %v1169 = vld [vmem:[#allocation2] sm:$0xf]
        %v1170 = vld [vmem:[#allocation2 + $0x4] sm:$0xf]
        %v1171 = vld [vmem:[#allocation2 + $0x8] sm:$0x1]
        %v1172 = vld [vmem:[#allocation2 + $0xc] sm:$0xf]
        %v1173 = vld [vmem:[#allocation2 + $0x10] sm:$0xf]
        %v1174 = vld [vmem:[#allocation2 + $0x14] sm:$0x1]
        %v1175 = vld [vmem:[#allocation2 + $0x18] sm:$0xf]
        %v1176 = vld [vmem:[#allocation2 + $0x1c] sm:$0xf]
        %v1177 = vld [vmem:[#allocation2 + $0x20] sm:$0x1]
        %v1178 = vld [vmem:[#allocation2 + $0x24] sm:$0xf]
        %v1179 = vld [vmem:[#allocation2 + $0x28] sm:$0xf]
        %v1180 = vld [vmem:[#allocation2 + $0x2c] sm:$0x1]
        %v1181 = vld [vmem:[#allocation2 + $0x30] sm:$0xf]
        %v1182 = vld [vmem:[#allocation2 + $0x34] sm:$0xf]
        %v1183 = vld [vmem:[#allocation2 + $0x38] sm:$0x1]
        %v1184 = vld [vmem:[#allocation2 + $0x3c] sm:$0xf]
        %v1185 = vld [vmem:[#allocation2 + $0x40] sm:$0xf]
        %v1186 = vld [vmem:[#allocation2 + $0x44] sm:$0x1]
        %v1187 = vld [vmem:[#allocation2 + $0x48] sm:$0xf]
        %v1188 = vld [vmem:[#allocation2 + $0x4c] sm:$0xf]
        %v1189 = vld [vmem:[#allocation2 + $0x50] sm:$0x1]
        %v1190 = vld [vmem:[#allocation2 + $0x54] sm:$0xf]
        %v1191 = vld [vmem:[#allocation2 + $0x58] sm:$0xf]
        %v1192 = vld [vmem:[#allocation2 + $0x5c] sm:$0x1]
        %v1193 = vld [vmem:[#allocation2 + $0x60] sm:$0xf]
        %v1194 = vld [vmem:[#allocation2 + $0x64] sm:$0xf]
        %v1195 = vld [vmem:[#allocation2 + $0x68] sm:$0x1]
        %v1196 = vld [vmem:[#allocation2 + $0x6c] sm:$0xf]
        %v1197 = vld [vmem:[#allocation2 + $0x70] sm:$0xf]
        %v1198 = vld [vmem:[#allocation2 + $0x74] sm:$0x1]
        %v1199 = vld [vmem:[#allocation2 + $0x78] sm:$0xf]
        %v1200 = vld [vmem:[#allocation2 + $0x7c] sm:$0xf]
        %v1201 = vld [vmem:[#allocation2 + $0x80] sm:$0x1]
        %v1202 = vld [vmem:[#allocation2 + $0x84] sm:$0xf]
        %v1203 = vld [vmem:[#allocation2 + $0x88] sm:$0xf]
        %v1204 = vld [vmem:[#allocation2 + $0x8c] sm:$0x1]
        %v1205 = vld [vmem:[#allocation2 + $0x90] sm:$0xf]
        %v1206 = vld [vmem:[#allocation2 + $0x94] sm:$0xf]
        %v1207 = vld [vmem:[#allocation2 + $0x98] sm:$0x1]
        %v1208 = vld [vmem:[#allocation2 + $0x9c] sm:$0xf]
        %v1209 = vld [vmem:[#allocation2 + $0xa0] sm:$0xf]
        %v1210 = vld [vmem:[#allocation2 + $0xa4] sm:$0x1]
        %v1211 = vld [vmem:[#allocation2 + $0xa8] sm:$0xf]
        %v1212 = vld [vmem:[#allocation2 + $0xac] sm:$0xf]
        %v1213 = vld [vmem:[#allocation2 + $0xb0] sm:$0x1]
        %v1214 = vld [vmem:[#allocation2 + $0xb4] sm:$0xf]
        %v1215 = vld [vmem:[#allocation2 + $0xb8] sm:$0xf]
        %v1216 = vld [vmem:[#allocation2 + $0xbc] sm:$0x1]
        %v1217 = vld [vmem:[#allocation2 + $0xc0] sm:$0xf]
        %v1218 = vld [vmem:[#allocation2 + $0xc4] sm:$0xf]
        %v1219 = vld [vmem:[#allocation2 + $0xc8] sm:$0x1]
        %v1220 = vld [vmem:[#allocation2 + $0xcc] sm:$0xf]
        %v1221 = vld [vmem:[#allocation2 + $0xd0] sm:$0xf]
        %v1222 = vld [vmem:[#allocation2 + $0xd4] sm:$0x1]
        %v1223 = vld [vmem:[%s3] sm:$0xf]
        %v1224 = vld [vmem:[%s3 + $0x4] sm:$0xf]
        %v1225 = vld [vmem:[%s3 + $0x8] sm:$0xf]
        %v1226 = vld [vmem:[%s3 + $0xc] sm:$0xf]
        %v1227 = vld [vmem:[%s3 + $0x10] sm:$0xf]
        %v1228 = vld [vmem:[%s3 + $0x14] sm:$0xf]
        %v1229 = vld [vmem:[%s3 + $0x18] sm:$0xf]
        %v1230 = vld [vmem:[%s3 + $0x1c] sm:$0xf]
        %v1231 = vld [vmem:[%s3 + $0x20] sm:$0xf]
        %v1232 = vld [vmem:[%s3 + $0x24] sm:$0xf]
        %v1233 = vld [vmem:[%s3 + $0x28] sm:$0xf]
        %v1234 = vld [vmem:[%s3 + $0x2c] sm:$0xf]
        %v1235 = vld [vmem:[%s3 + $0x30] sm:$0xf]
        %v1236 = vld [vmem:[%s3 + $0x34] sm:$0xf]
        %v1237 = vld [vmem:[%s3 + $0x38] sm:$0xf]
        %v1238 = vld [vmem:[%s3 + $0x3c] sm:$0xf]
        %v1239 = vld [vmem:[%s3 + $0x40] sm:$0xf]
        %v1240 = vld [vmem:[%s3 + $0x44] sm:$0xf]
        %v1241 = vld [vmem:[%s3 + $0x48] sm:$0xf]
        %v1242 = vld [vmem:[%s3 + $0x4c] sm:$0xf]
        %v1243 = vld [vmem:[%s3 + $0x50] sm:$0xf]
        %v1244 = vld [vmem:[%s3 + $0x54] sm:$0xf]
        %v1245 = vld [vmem:[%s3 + $0x58] sm:$0xf]
        %v1246 = vld [vmem:[%s3 + $0x5c] sm:$0xf]
        %v1247 = vld [vmem:[%s3 + $0x60] sm:$0xf]
        %v1248 = vld [vmem:[%s3 + $0x64] sm:$0xf]
        %v1249 = vld [vmem:[%s3 + $0x68] sm:$0xf]
        %v1250 = vld [vmem:[%s3 + $0x6c] sm:$0xf]
        %v1251 = vld [vmem:[%s3 + $0x70] sm:$0xf]
        %v1252 = vld [vmem:[%s3 + $0x74] sm:$0xf]
        %v1253 = vld [vmem:[%s3 + $0x78] sm:$0xf]
        %v1254 = vld [vmem:[%s3 + $0x7c] sm:$0xf]
        %v1255 = vld [vmem:[%s3 + $0x80] sm:$0xf]
        %v1256 = vld [vmem:[%s3 + $0x84] sm:$0xf]
        %v1257 = vld [vmem:[%s3 + $0x88] sm:$0xf]
        %v1258 = vld [vmem:[%s3 + $0x8c] sm:$0xf]
        %vm1259 = vsmask.f32 3328
        %vm1260 = vsmask.f32 7440
        %vm1261 = vmor %vm1259, %vm1260
        %v1263 = vshrl.u32 %v1169, 16
        %v1265 = vrot.slane %v1263, 4
        %v1266 = vshll.u32 %v1169, 16
        %v1268 = vrot.slane %v1266, 5
        %v1269 = vor.u32 %v1265, %v1268
        %v1270 = vrot.slane %v1269, 4
        %v1272 = vshll.u32 %v1170, 16
        %v1274 = vrot.slane %v1272, 5
        %v1275 = vsel %vm1261, %v1270, %v1274
        %v1276 = vshrl.u32 %v1170, 16
        %v1278 = vrot.slane %v1276, 4
        %v1279 = vor.u32 %v1278, %v1274
        %v1280 = vrot.slane %v1279, 4
        %v1282 = vshll.u32 %v1171, 16
        %v1284 = vrot.slane %v1282, 5
        %v1285 = vsel %vm1261, %v1280, %v1284
        %v1287 = vshrl.u32 %v1172, 16
        %v1289 = vrot.slane %v1287, 4
        %v1290 = vshll.u32 %v1172, 16
        %v1292 = vrot.slane %v1290, 5
        %v1293 = vor.u32 %v1289, %v1292
        %v1294 = vrot.slane %v1293, 4
        %v1296 = vshll.u32 %v1173, 16
        %v1298 = vrot.slane %v1296, 5
        %v1299 = vsel %vm1261, %v1294, %v1298
        %v1300 = vshrl.u32 %v1173, 16
        %v1302 = vrot.slane %v1300, 4
        %v1303 = vor.u32 %v1302, %v1298
        %v1304 = vrot.slane %v1303, 4
        %v1306 = vshll.u32 %v1174, 16
        %v1308 = vrot.slane %v1306, 5
        %v1309 = vsel %vm1261, %v1304, %v1308
        %v1311 = vshrl.u32 %v1175, 16
        %v1313 = vrot.slane %v1311, 4
        %v1314 = vshll.u32 %v1175, 16
        %v1316 = vrot.slane %v1314, 5
        %v1317 = vor.u32 %v1313, %v1316
        %v1318 = vrot.slane %v1317, 4
        %v1320 = vshll.u32 %v1176, 16
        %v1322 = vrot.slane %v1320, 5
        %v1323 = vsel %vm1261, %v1318, %v1322
        %v1324 = vshrl.u32 %v1176, 16
        %v1326 = vrot.slane %v1324, 4
        %v1327 = vor.u32 %v1326, %v1322
        %v1328 = vrot.slane %v1327, 4
        %v1330 = vshll.u32 %v1177, 16
        %v1332 = vrot.slane %v1330, 5
        %v1333 = vsel %vm1261, %v1328, %v1332
        %v1335 = vshrl.u32 %v1178, 16
        %v1337 = vrot.slane %v1335, 4
        %v1338 = vshll.u32 %v1178, 16
        %v1340 = vrot.slane %v1338, 5
        %v1341 = vor.u32 %v1337, %v1340
        %v1342 = vrot.slane %v1341, 4
        %v1344 = vshll.u32 %v1179, 16
        %v1346 = vrot.slane %v1344, 5
        %v1347 = vsel %vm1261, %v1342, %v1346
        %v1348 = vshrl.u32 %v1179, 16
        %v1350 = vrot.slane %v1348, 4
        %v1351 = vor.u32 %v1350, %v1346
        %v1352 = vrot.slane %v1351, 4
        %v1354 = vshll.u32 %v1180, 16
        %v1356 = vrot.slane %v1354, 5
        %v1357 = vsel %vm1261, %v1352, %v1356
        %v1359 = vshrl.u32 %v1181, 16
        %v1361 = vrot.slane %v1359, 4
        %v1362 = vshll.u32 %v1181, 16
        %v1364 = vrot.slane %v1362, 5
        %v1365 = vor.u32 %v1361, %v1364
        %v1366 = vrot.slane %v1365, 4
        %v1368 = vshll.u32 %v1182, 16
        %v1370 = vrot.slane %v1368, 5
        %v1371 = vsel %vm1261, %v1366, %v1370
        %v1372 = vshrl.u32 %v1182, 16
        %v1374 = vrot.slane %v1372, 4
        %v1375 = vor.u32 %v1374, %v1370
        %v1376 = vrot.slane %v1375, 4
        %v1378 = vshll.u32 %v1183, 16
        %v1380 = vrot.slane %v1378, 5
        %v1381 = vsel %vm1261, %v1376, %v1380
        %v1383 = vshrl.u32 %v1184, 16
        %v1385 = vrot.slane %v1383, 4
        %v1386 = vshll.u32 %v1184, 16
        %v1388 = vrot.slane %v1386, 5
        %v1389 = vor.u32 %v1385, %v1388
        %v1390 = vrot.slane %v1389, 4
        %v1392 = vshll.u32 %v1185, 16
        %v1394 = vrot.slane %v1392, 5
        %v1395 = vsel %vm1261, %v1390, %v1394
        %v1396 = vshrl.u32 %v1185, 16
        %v1398 = vrot.slane %v1396, 4
        %v1399 = vor.u32 %v1398, %v1394
        %v1400 = vrot.slane %v1399, 4
        %v1402 = vshll.u32 %v1186, 16
        %v1404 = vrot.slane %v1402, 5
        %v1405 = vsel %vm1261, %v1400, %v1404
        %v1407 = vshrl.u32 %v1187, 16
        %v1409 = vrot.slane %v1407, 4
        %v1410 = vshll.u32 %v1187, 16
        %v1412 = vrot.slane %v1410, 5
        %v1413 = vor.u32 %v1409, %v1412
        %v1414 = vrot.slane %v1413, 4
        %v1416 = vshll.u32 %v1188, 16
        %v1418 = vrot.slane %v1416, 5
        %v1419 = vsel %vm1261, %v1414, %v1418
        %v1420 = vshrl.u32 %v1188, 16
        %v1422 = vrot.slane %v1420, 4
        %v1423 = vor.u32 %v1422, %v1418
        %v1424 = vrot.slane %v1423, 4
        %v1426 = vshll.u32 %v1189, 16
        %v1428 = vrot.slane %v1426, 5
        %v1429 = vsel %vm1261, %v1424, %v1428
        %v1431 = vshrl.u32 %v1190, 16
        %v1433 = vrot.slane %v1431, 4
        %v1434 = vshll.u32 %v1190, 16
        %v1436 = vrot.slane %v1434, 5
        %v1437 = vor.u32 %v1433, %v1436
        %v1438 = vrot.slane %v1437, 4
        %v1440 = vshll.u32 %v1191, 16
        %v1442 = vrot.slane %v1440, 5
        %v1443 = vsel %vm1261, %v1438, %v1442
        %v1444 = vshrl.u32 %v1191, 16
        %v1446 = vrot.slane %v1444, 4
        %v1447 = vor.u32 %v1446, %v1442
        %v1448 = vrot.slane %v1447, 4
        %v1450 = vshll.u32 %v1192, 16
        %v1452 = vrot.slane %v1450, 5
        %v1453 = vsel %vm1261, %v1448, %v1452
        %v1455 = vshrl.u32 %v1193, 16
        %v1457 = vrot.slane %v1455, 4
        %v1458 = vshll.u32 %v1193, 16
        %v1460 = vrot.slane %v1458, 5
        %v1461 = vor.u32 %v1457, %v1460
        %v1462 = vrot.slane %v1461, 4
        %v1464 = vshll.u32 %v1194, 16
        %v1466 = vrot.slane %v1464, 5
        %v1467 = vsel %vm1261, %v1462, %v1466
        %v1468 = vshrl.u32 %v1194, 16
        %v1470 = vrot.slane %v1468, 4
        %v1471 = vor.u32 %v1470, %v1466
        %v1472 = vrot.slane %v1471, 4
        %v1474 = vshll.u32 %v1195, 16
        %v1476 = vrot.slane %v1474, 5
        %v1477 = vsel %vm1261, %v1472, %v1476
        %v1479 = vshrl.u32 %v1196, 16
        %v1481 = vrot.slane %v1479, 4
        %v1482 = vshll.u32 %v1196, 16
        %v1484 = vrot.slane %v1482, 5
        %v1485 = vor.u32 %v1481, %v1484
        %v1486 = vrot.slane %v1485, 4
        %v1488 = vshll.u32 %v1197, 16
        %v1490 = vrot.slane %v1488, 5
        %v1491 = vsel %vm1261, %v1486, %v1490
        %v1492 = vshrl.u32 %v1197, 16
        %v1494 = vrot.slane %v1492, 4
        %v1495 = vor.u32 %v1494, %v1490
        %v1496 = vrot.slane %v1495, 4
        %v1498 = vshll.u32 %v1198, 16
        %v1500 = vrot.slane %v1498, 5
        %v1501 = vsel %vm1261, %v1496, %v1500
        %v1503 = vshrl.u32 %v1199, 16
        %v1505 = vrot.slane %v1503, 4
        %v1506 = vshll.u32 %v1199, 16
        %v1508 = vrot.slane %v1506, 5
        %v1509 = vor.u32 %v1505, %v1508
        %v1510 = vrot.slane %v1509, 4
        %v1512 = vshll.u32 %v1200, 16
        %v1514 = vrot.slane %v1512, 5
        %v1515 = vsel %vm1261, %v1510, %v1514
        %v1516 = vshrl.u32 %v1200, 16
        %v1518 = vrot.slane %v1516, 4
        %v1519 = vor.u32 %v1518, %v1514
        %v1520 = vrot.slane %v1519, 4
        %v1522 = vshll.u32 %v1201, 16
        %v1524 = vrot.slane %v1522, 5
        %v1525 = vsel %vm1261, %v1520, %v1524
        %v1527 = vshrl.u32 %v1202, 16
        %v1529 = vrot.slane %v1527, 4
        %v1530 = vshll.u32 %v1202, 16
        %v1532 = vrot.slane %v1530, 5
        %v1533 = vor.u32 %v1529, %v1532
        %v1534 = vrot.slane %v1533, 4
        %v1536 = vshll.u32 %v1203, 16
        %v1538 = vrot.slane %v1536, 5
        %v1539 = vsel %vm1261, %v1534, %v1538
        %v1540 = vshrl.u32 %v1203, 16
        %v1542 = vrot.slane %v1540, 4
        %v1543 = vor.u32 %v1542, %v1538
        %v1544 = vrot.slane %v1543, 4
        %v1546 = vshll.u32 %v1204, 16
        %v1548 = vrot.slane %v1546, 5
        %v1549 = vsel %vm1261, %v1544, %v1548
        %v1551 = vshrl.u32 %v1205, 16
        %v1553 = vrot.slane %v1551, 4
        %v1554 = vshll.u32 %v1205, 16
        %v1556 = vrot.slane %v1554, 5
        %v1557 = vor.u32 %v1553, %v1556
        %v1558 = vrot.slane %v1557, 4
        %v1560 = vshll.u32 %v1206, 16
        %v1562 = vrot.slane %v1560, 5
        %v1563 = vsel %vm1261, %v1558, %v1562
        %v1564 = vshrl.u32 %v1206, 16
        %v1566 = vrot.slane %v1564, 4
        %v1567 = vor.u32 %v1566, %v1562
        %v1568 = vrot.slane %v1567, 4
        %v1570 = vshll.u32 %v1207, 16
        %v1572 = vrot.slane %v1570, 5
        %v1573 = vsel %vm1261, %v1568, %v1572
        %v1575 = vshrl.u32 %v1208, 16
        %v1577 = vrot.slane %v1575, 4
        %v1578 = vshll.u32 %v1208, 16
        %v1580 = vrot.slane %v1578, 5
        %v1581 = vor.u32 %v1577, %v1580
        %v1582 = vrot.slane %v1581, 4
        %v1584 = vshll.u32 %v1209, 16
        %v1586 = vrot.slane %v1584, 5
        %v1587 = vsel %vm1261, %v1582, %v1586
        %v1588 = vshrl.u32 %v1209, 16
        %v1590 = vrot.slane %v1588, 4
        %v1591 = vor.u32 %v1590, %v1586
        %v1592 = vrot.slane %v1591, 4
        %v1594 = vshll.u32 %v1210, 16
        %v1596 = vrot.slane %v1594, 5
        %v1597 = vsel %vm1261, %v1592, %v1596
        %v1599 = vshrl.u32 %v1211, 16
        %v1601 = vrot.slane %v1599, 4
        %v1602 = vshll.u32 %v1211, 16
        %v1604 = vrot.slane %v1602, 5
        %v1605 = vor.u32 %v1601, %v1604
        %v1606 = vrot.slane %v1605, 4
        %v1608 = vshll.u32 %v1212, 16
        %v1610 = vrot.slane %v1608, 5
        %v1611 = vsel %vm1261, %v1606, %v1610
        %v1612 = vshrl.u32 %v1212, 16
        %v1614 = vrot.slane %v1612, 4
        %v1615 = vor.u32 %v1614, %v1610
        %v1616 = vrot.slane %v1615, 4
        %v1618 = vshll.u32 %v1213, 16
        %v1620 = vrot.slane %v1618, 5
        %v1621 = vsel %vm1261, %v1616, %v1620
        %v1623 = vshrl.u32 %v1214, 16
        %v1625 = vrot.slane %v1623, 4
        %v1626 = vshll.u32 %v1214, 16
        %v1628 = vrot.slane %v1626, 5
        %v1629 = vor.u32 %v1625, %v1628
        %v1630 = vrot.slane %v1629, 4
        %v1632 = vshll.u32 %v1215, 16
        %v1634 = vrot.slane %v1632, 5
        %v1635 = vsel %vm1261, %v1630, %v1634
        %v1636 = vshrl.u32 %v1215, 16
        %v1638 = vrot.slane %v1636, 4
        %v1639 = vor.u32 %v1638, %v1634
        %v1640 = vrot.slane %v1639, 4
        %v1642 = vshll.u32 %v1216, 16
        %v1644 = vrot.slane %v1642, 5
        %v1645 = vsel %vm1261, %v1640, %v1644
        %vm1694 = vcmask 1042432
        %vm1695 = vcmask 1046532
        %vm1696 = vmor %vm1694, %vm1695
        %v1697 = vrot.slane %v1169, 5
        %v1698 = vrot.slane %v1697, 4
        %v1699 = vrot.slane %v1170, 5
        %v1700 = vsel %vm1696, %v1698, %v1699
        %v1701 = vrot.slane %v1699, 4
        %v1702 = vrot.slane %v1171, 5
        %v1703 = vsel %vm1696, %v1701, %v1702
        %v1704 = vrot.slane %v1172, 5
        %v1705 = vrot.slane %v1704, 4
        %v1706 = vrot.slane %v1173, 5
        %v1707 = vsel %vm1696, %v1705, %v1706
        %v1708 = vrot.slane %v1706, 4
        %v1709 = vrot.slane %v1174, 5
        %v1710 = vsel %vm1696, %v1708, %v1709
        %v1711 = vrot.slane %v1175, 5
        %v1712 = vrot.slane %v1711, 4
        %v1713 = vrot.slane %v1176, 5
        %v1714 = vsel %vm1696, %v1712, %v1713
        %v1715 = vrot.slane %v1713, 4
        %v1716 = vrot.slane %v1177, 5
        %v1717 = vsel %vm1696, %v1715, %v1716
        %v1718 = vrot.slane %v1178, 5
        %v1719 = vrot.slane %v1718, 4
        %v1720 = vrot.slane %v1179, 5
        %v1721 = vsel %vm1696, %v1719, %v1720
        %v1722 = vrot.slane %v1720, 4
        %v1723 = vrot.slane %v1180, 5
        %v1724 = vsel %vm1696, %v1722, %v1723
        %v1725 = vrot.slane %v1181, 5
        %v1726 = vrot.slane %v1725, 4
        %v1727 = vrot.slane %v1182, 5
        %v1728 = vsel %vm1696, %v1726, %v1727
        %v1729 = vrot.slane %v1727, 4
        %v1730 = vrot.slane %v1183, 5
        %v1731 = vsel %vm1696, %v1729, %v1730
        %v1732 = vrot.slane %v1184, 5
        %v1733 = vrot.slane %v1732, 4
        %v1734 = vrot.slane %v1185, 5
        %v1735 = vsel %vm1696, %v1733, %v1734
        %v1736 = vrot.slane %v1734, 4
        %v1737 = vrot.slane %v1186, 5
        %v1738 = vsel %vm1696, %v1736, %v1737
        %v1739 = vrot.slane %v1187, 5
        %v1740 = vrot.slane %v1739, 4
        %v1741 = vrot.slane %v1188, 5
        %v1742 = vsel %vm1696, %v1740, %v1741
        %v1743 = vrot.slane %v1741, 4
        %v1744 = vrot.slane %v1189, 5
        %v1745 = vsel %vm1696, %v1743, %v1744
        %v1746 = vrot.slane %v1190, 5
        %v1747 = vrot.slane %v1746, 4
        %v1748 = vrot.slane %v1191, 5
        %v1749 = vsel %vm1696, %v1747, %v1748
        %v1750 = vrot.slane %v1748, 4
        %v1751 = vrot.slane %v1192, 5
        %v1752 = vsel %vm1696, %v1750, %v1751
        %v1753 = vrot.slane %v1193, 5
        %v1754 = vrot.slane %v1753, 4
        %v1755 = vrot.slane %v1194, 5
        %v1756 = vsel %vm1696, %v1754, %v1755
        %v1757 = vrot.slane %v1755, 4
        %v1758 = vrot.slane %v1195, 5
        %v1759 = vsel %vm1696, %v1757, %v1758
        %v1760 = vrot.slane %v1196, 5
        %v1761 = vrot.slane %v1760, 4
        %v1762 = vrot.slane %v1197, 5
        %v1763 = vsel %vm1696, %v1761, %v1762
        %v1764 = vrot.slane %v1762, 4
        %v1765 = vrot.slane %v1198, 5
        %v1766 = vsel %vm1696, %v1764, %v1765
        %v1767 = vrot.slane %v1199, 5
        %v1768 = vrot.slane %v1767, 4
        %v1769 = vrot.slane %v1200, 5
        %v1770 = vsel %vm1696, %v1768, %v1769
        %v1771 = vrot.slane %v1769, 4
        %v1772 = vrot.slane %v1201, 5
        %v1773 = vsel %vm1696, %v1771, %v1772
        %v1774 = vrot.slane %v1202, 5
        %v1775 = vrot.slane %v1774, 4
        %v1776 = vrot.slane %v1203, 5
        %v1777 = vsel %vm1696, %v1775, %v1776
        %v1778 = vrot.slane %v1776, 4
        %v1779 = vrot.slane %v1204, 5
        %v1780 = vsel %vm1696, %v1778, %v1779
        %v1781 = vrot.slane %v1205, 5
        %v1782 = vrot.slane %v1781, 4
        %v1783 = vrot.slane %v1206, 5
        %v1784 = vsel %vm1696, %v1782, %v1783
        %v1785 = vrot.slane %v1783, 4
        %v1786 = vrot.slane %v1207, 5
        %v1787 = vsel %vm1696, %v1785, %v1786
        %v1788 = vrot.slane %v1208, 5
        %v1789 = vrot.slane %v1788, 4
        %v1790 = vrot.slane %v1209, 5
        %v1791 = vsel %vm1696, %v1789, %v1790
        %v1792 = vrot.slane %v1790, 4
        %v1793 = vrot.slane %v1210, 5
        %v1794 = vsel %vm1696, %v1792, %v1793
        %v1795 = vrot.slane %v1211, 5
        %v1796 = vrot.slane %v1795, 4
        %v1797 = vrot.slane %v1212, 5
        %v1798 = vsel %vm1696, %v1796, %v1797
        %v1799 = vrot.slane %v1797, 4
        %v1800 = vrot.slane %v1213, 5
        %v1801 = vsel %vm1696, %v1799, %v1800
        %v1802 = vrot.slane %v1214, 5
        %v1803 = vrot.slane %v1802, 4
        %v1804 = vrot.slane %v1215, 5
        %v1805 = vsel %vm1696, %v1803, %v1804
        %v1806 = vrot.slane %v1804, 4
        %v1807 = vrot.slane %v1216, 5
        %v1808 = vsel %vm1696, %v1806, %v1807
        %v1810 = vshrl.u32 %v1217, 16
        %v1812 = vrot.slane %v1810, 4
        %v1813 = vshll.u32 %v1217, 16
        %v1815 = vrot.slane %v1813, 5
        %v1816 = vor.u32 %v1812, %v1815
        %v1817 = vrot.slane %v1816, 4
        %v1819 = vshll.u32 %v1218, 16
        %v1821 = vrot.slane %v1819, 5
        %v1822 = vsel %vm1261, %v1817, %v1821
        %v1823 = vshrl.u32 %v1218, 16
        %v1825 = vrot.slane %v1823, 4
        %v1826 = vor.u32 %v1825, %v1821
        %v1827 = vrot.slane %v1826, 4
        %v1829 = vshll.u32 %v1219, 16
        %v1831 = vrot.slane %v1829, 5
        %v1832 = vsel %vm1261, %v1827, %v1831
        %v1836 = vrot.slane %v1217, 5
        %v1837 = vrot.slane %v1836, 4
        %v1838 = vrot.slane %v1218, 5
        %v1839 = vsel %vm1696, %v1837, %v1838
        %v1840 = vrot.slane %v1838, 4
        %v1841 = vrot.slane %v1219, 5
        %v1842 = vsel %vm1696, %v1840, %v1841
        %v1844 = vshrl.u32 %v1220, 16
        %v1846 = vrot.slane %v1844, 4
        %v1847 = vshll.u32 %v1220, 16
        %v1849 = vrot.slane %v1847, 5
        %v1850 = vor.u32 %v1846, %v1849
        %v1851 = vrot.slane %v1850, 4
        %v1853 = vshll.u32 %v1221, 16
        %v1855 = vrot.slane %v1853, 5
        %v1856 = vsel %vm1261, %v1851, %v1855
        %v1857 = vshrl.u32 %v1221, 16
        %v1859 = vrot.slane %v1857, 4
        %v1860 = vor.u32 %v1859, %v1855
        %v1861 = vrot.slane %v1860, 4
        %v1863 = vshll.u32 %v1222, 16
        %v1865 = vrot.slane %v1863, 5
        %v1866 = vsel %vm1261, %v1861, %v1865
        %v1870 = vrot.slane %v1220, 5
        %v1871 = vrot.slane %v1870, 4
        %v1872 = vrot.slane %v1221, 5
        %v1873 = vsel %vm1696, %v1871, %v1872
        %v1874 = vrot.slane %v1872, 4
        %v1875 = vrot.slane %v1222, 5
        %v1876 = vsel %vm1696, %v1874, %v1875
        %v1877 = vunpack.c.l.b16 %v1169
        %v1878 = vunpack.c.l.b16 %v1170
        %v1879 = vunpack.c.l.b16 %v1172
        %v1880 = vunpack.c.l.b16 %v1173
        %v1881 = vunpack.c.l.b16 %v1175
        %v1882 = vunpack.c.l.b16 %v1176
        %v1883 = vunpack.c.l.b16 %v1178
        %v1884 = vunpack.c.l.b16 %v1179
        %v1885 = vunpack.c.l.b16 %v1181
        %v1886 = vunpack.c.l.b16 %v1182
        %v1887 = vunpack.c.l.b16 %v1184
        %v1888 = vunpack.c.l.b16 %v1185
        %v1889 = vunpack.c.l.b16 %v1187
        %v1890 = vunpack.c.l.b16 %v1188
        %v1891 = vunpack.c.l.b16 %v1190
        %v1892 = vunpack.c.l.b16 %v1191
        %v1893 = vunpack.c.l.b16 %v1193
        %v1894 = vunpack.c.l.b16 %v1194
        %v1895 = vunpack.c.l.b16 %v1196
        %v1896 = vunpack.c.l.b16 %v1197
        %v1897 = vunpack.c.l.b16 %v1199
        %v1898 = vunpack.c.l.b16 %v1200
        %v1899 = vunpack.c.l.b16 %v1202
        %v1900 = vunpack.c.l.b16 %v1203
        %v1901 = vunpack.c.l.b16 %v1205
        %v1902 = vunpack.c.l.b16 %v1206
        %v1903 = vunpack.c.l.b16 %v1208
        %v1904 = vunpack.c.l.b16 %v1209
        %v1905 = vunpack.c.l.b16 %v1211
        %v1906 = vunpack.c.l.b16 %v1212
        %v1907 = vunpack.c.l.b16 %v1214
        %v1908 = vunpack.c.l.b16 %v1215
        %v1909 = vpack.c.b16 %v1878, %v1877
        %v1910 = vpack.c.b16 %v1880, %v1879
        %v1911 = vpack.c.b16 %v1882, %v1881
        %v1912 = vpack.c.b16 %v1884, %v1883
        %v1913 = vpack.c.b16 %v1886, %v1885
        %v1914 = vpack.c.b16 %v1888, %v1887
        %v1915 = vpack.c.b16 %v1890, %v1889
        %v1916 = vpack.c.b16 %v1892, %v1891
        %v1917 = vpack.c.b16 %v1894, %v1893
        %v1918 = vpack.c.b16 %v1896, %v1895
        %v1919 = vpack.c.b16 %v1898, %v1897
        %v1920 = vpack.c.b16 %v1900, %v1899
        %v1921 = vpack.c.b16 %v1902, %v1901
        %v1922 = vpack.c.b16 %v1904, %v1903
        %v1923 = vpack.c.b16 %v1906, %v1905
        %v1924 = vpack.c.b16 %v1908, %v1907
        %v1925 = vunpack.c.l.b16 %v1275
        %v1926 = vunpack.c.l.b16 %v1285
        %v1927 = vunpack.c.l.b16 %v1299
        %v1928 = vunpack.c.l.b16 %v1309
        %v1929 = vunpack.c.l.b16 %v1323
        %v1930 = vunpack.c.l.b16 %v1333
        %v1931 = vunpack.c.l.b16 %v1347
        %v1932 = vunpack.c.l.b16 %v1357
        %v1933 = vunpack.c.l.b16 %v1371
        %v1934 = vunpack.c.l.b16 %v1381
        %v1935 = vunpack.c.l.b16 %v1395
        %v1936 = vunpack.c.l.b16 %v1405
        %v1937 = vunpack.c.l.b16 %v1419
        %v1938 = vunpack.c.l.b16 %v1429
        %v1939 = vunpack.c.l.b16 %v1443
        %v1940 = vunpack.c.l.b16 %v1453
        %v1941 = vunpack.c.l.b16 %v1467
        %v1942 = vunpack.c.l.b16 %v1477
        %v1943 = vunpack.c.l.b16 %v1491
        %v1944 = vunpack.c.l.b16 %v1501
        %v1945 = vunpack.c.l.b16 %v1515
        %v1946 = vunpack.c.l.b16 %v1525
        %v1947 = vunpack.c.l.b16 %v1539
        %v1948 = vunpack.c.l.b16 %v1549
        %v1949 = vunpack.c.l.b16 %v1563
        %v1950 = vunpack.c.l.b16 %v1573
        %v1951 = vunpack.c.l.b16 %v1587
        %v1952 = vunpack.c.l.b16 %v1597
        %v1953 = vunpack.c.l.b16 %v1611
        %v1954 = vunpack.c.l.b16 %v1621
        %v1955 = vunpack.c.l.b16 %v1635
        %v1956 = vunpack.c.l.b16 %v1645
        %v1957 = vpack.c.b16 %v1926, %v1925
        %v1958 = vpack.c.b16 %v1928, %v1927
        %v1959 = vpack.c.b16 %v1930, %v1929
        %v1960 = vpack.c.b16 %v1932, %v1931
        %v1961 = vpack.c.b16 %v1934, %v1933
        %v1962 = vpack.c.b16 %v1936, %v1935
        %v1963 = vpack.c.b16 %v1938, %v1937
        %v1964 = vpack.c.b16 %v1940, %v1939
        %v1965 = vpack.c.b16 %v1942, %v1941
        %v1966 = vpack.c.b16 %v1944, %v1943
        %v1967 = vpack.c.b16 %v1946, %v1945
        %v1968 = vpack.c.b16 %v1948, %v1947
        %v1969 = vpack.c.b16 %v1950, %v1949
        %v1970 = vpack.c.b16 %v1952, %v1951
        %v1971 = vpack.c.b16 %v1954, %v1953
        %v1972 = vpack.c.b16 %v1956, %v1955
        %1973 = vrot.lane.b32.xlu0 %v1957, 32
        %v1974 = vpop.permute.xlu0 %1973
        %1975 = vrot.lane.b32.xlu0 %v1958, 32
        %v1976 = vpop.permute.xlu0 %1975
        %1977 = vrot.lane.b32.xlu0 %v1959, 32
        %v1978 = vpop.permute.xlu0 %1977
        %1979 = vrot.lane.b32.xlu0 %v1960, 32
        %v1980 = vpop.permute.xlu0 %1979
        %1981 = vrot.lane.b32.xlu0 %v1961, 32
        %v1982 = vpop.permute.xlu0 %1981
        %1983 = vrot.lane.b32.xlu0 %v1962, 32
        %v1984 = vpop.permute.xlu0 %1983
        %1985 = vrot.lane.b32.xlu0 %v1963, 32
        %v1986 = vpop.permute.xlu0 %1985
        %1987 = vrot.lane.b32.xlu0 %v1964, 32
        %v1988 = vpop.permute.xlu0 %1987
        %1989 = vrot.lane.b32.xlu0 %v1965, 32
        %v1990 = vpop.permute.xlu0 %1989
        %1991 = vrot.lane.b32.xlu0 %v1966, 32
        %v1992 = vpop.permute.xlu0 %1991
        %1993 = vrot.lane.b32.xlu0 %v1967, 32
        %v1994 = vpop.permute.xlu0 %1993
        %1995 = vrot.lane.b32.xlu0 %v1968, 32
        %v1996 = vpop.permute.xlu0 %1995
        %1997 = vrot.lane.b32.xlu0 %v1969, 32
        %v1998 = vpop.permute.xlu0 %1997
        %1999 = vrot.lane.b32.xlu0 %v1970, 32
        %v2000 = vpop.permute.xlu0 %1999
        %2001 = vrot.lane.b32.xlu0 %v1971, 32
        %v2002 = vpop.permute.xlu0 %2001
        %2003 = vrot.lane.b32.xlu0 %v1972, 32
        %v2004 = vpop.permute.xlu0 %2003
        %v2005 = vunpack.c.l.b16 %v1700
        %v2006 = vunpack.c.l.b16 %v1703
        %v2007 = vunpack.c.l.b16 %v1707
        %v2008 = vunpack.c.l.b16 %v1710
        %v2009 = vunpack.c.l.b16 %v1714
        %v2010 = vunpack.c.l.b16 %v1717
        %v2011 = vunpack.c.l.b16 %v1721
        %v2012 = vunpack.c.l.b16 %v1724
        %v2013 = vunpack.c.l.b16 %v1728
        %v2014 = vunpack.c.l.b16 %v1731
        %v2015 = vunpack.c.l.b16 %v1735
        %v2016 = vunpack.c.l.b16 %v1738
        %v2017 = vunpack.c.l.b16 %v1742
        %v2018 = vunpack.c.l.b16 %v1745
        %v2019 = vunpack.c.l.b16 %v1749
        %v2020 = vunpack.c.l.b16 %v1752
        %v2021 = vunpack.c.l.b16 %v1756
        %v2022 = vunpack.c.l.b16 %v1759
        %v2023 = vunpack.c.l.b16 %v1763
        %v2024 = vunpack.c.l.b16 %v1766
        %v2025 = vunpack.c.l.b16 %v1770
        %v2026 = vunpack.c.l.b16 %v1773
        %v2027 = vunpack.c.l.b16 %v1777
        %v2028 = vunpack.c.l.b16 %v1780
        %v2029 = vunpack.c.l.b16 %v1784
        %v2030 = vunpack.c.l.b16 %v1787
        %v2031 = vunpack.c.l.b16 %v1791
        %v2032 = vunpack.c.l.b16 %v1794
        %v2033 = vunpack.c.l.b16 %v1798
        %v2034 = vunpack.c.l.b16 %v1801
        %v2035 = vunpack.c.l.b16 %v1805
        %v2036 = vunpack.c.l.b16 %v1808
        %v2037 = vpack.c.b16 %v2006, %v2005
        %v2038 = vpack.c.b16 %v2008, %v2007
        %v2039 = vpack.c.b16 %v2010, %v2009
        %v2040 = vpack.c.b16 %v2012, %v2011
        %v2041 = vpack.c.b16 %v2014, %v2013
        %v2042 = vpack.c.b16 %v2016, %v2015
        %v2043 = vpack.c.b16 %v2018, %v2017
        %v2044 = vpack.c.b16 %v2020, %v2019
        %v2045 = vpack.c.b16 %v2022, %v2021
        %v2046 = vpack.c.b16 %v2024, %v2023
        %v2047 = vpack.c.b16 %v2026, %v2025
        %v2048 = vpack.c.b16 %v2028, %v2027
        %v2049 = vpack.c.b16 %v2030, %v2029
        %v2050 = vpack.c.b16 %v2032, %v2031
        %v2051 = vpack.c.b16 %v2034, %v2033
        %v2052 = vpack.c.b16 %v2036, %v2035
        %2053 = vrot.lane.b32.xlu0 %v2037, 64
        %v2054 = vpop.permute.xlu0 %2053
        %2055 = vrot.lane.b32.xlu0 %v2038, 64
        %v2056 = vpop.permute.xlu0 %2055
        %2057 = vrot.lane.b32.xlu0 %v2039, 64
        %v2058 = vpop.permute.xlu0 %2057
        %2059 = vrot.lane.b32.xlu0 %v2040, 64
        %v2060 = vpop.permute.xlu0 %2059
        %2061 = vrot.lane.b32.xlu0 %v2041, 64
        %v2062 = vpop.permute.xlu0 %2061
        %2063 = vrot.lane.b32.xlu0 %v2042, 64
        %v2064 = vpop.permute.xlu0 %2063
        %2065 = vrot.lane.b32.xlu0 %v2043, 64
        %v2066 = vpop.permute.xlu0 %2065
        %2067 = vrot.lane.b32.xlu0 %v2044, 64
        %v2068 = vpop.permute.xlu0 %2067
        %2069 = vrot.lane.b32.xlu0 %v2045, 64
        %v2070 = vpop.permute.xlu0 %2069
        %2071 = vrot.lane.b32.xlu0 %v2046, 64
        %v2072 = vpop.permute.xlu0 %2071
        %2073 = vrot.lane.b32.xlu0 %v2047, 64
        %v2074 = vpop.permute.xlu0 %2073
        %2075 = vrot.lane.b32.xlu0 %v2048, 64
        %v2076 = vpop.permute.xlu0 %2075
        %2077 = vrot.lane.b32.xlu0 %v2049, 64
        %v2078 = vpop.permute.xlu0 %2077
        %2079 = vrot.lane.b32.xlu0 %v2050, 64
        %v2080 = vpop.permute.xlu0 %2079
        %2081 = vrot.lane.b32.xlu0 %v2051, 64
        %v2082 = vpop.permute.xlu0 %2081
        %2083 = vrot.lane.b32.xlu0 %v2052, 64
        %v2084 = vpop.permute.xlu0 %2083
        %v2085 = vunpack.c.l.b16 %v1217
        %v2086 = vunpack.c.l.b16 %v1218
        %v2087 = vpack.c.b16 %v2086, %v2085
        %2088 = vrot.lane.b32.xlu0 %v1910, 96
        %v2089 = vpop.permute.xlu0 %2088
        %2090 = vrot.lane.b32.xlu0 %v1911, 96
        %v2091 = vpop.permute.xlu0 %2090
        %2092 = vrot.lane.b32.xlu0 %v1912, 96
        %v2093 = vpop.permute.xlu0 %2092
        %2094 = vrot.lane.b32.xlu0 %v1913, 96
        %v2095 = vpop.permute.xlu0 %2094
        %2096 = vrot.lane.b32.xlu0 %v1914, 96
        %v2097 = vpop.permute.xlu0 %2096
        %2098 = vrot.lane.b32.xlu0 %v1915, 96
        %v2099 = vpop.permute.xlu0 %2098
        %2100 = vrot.lane.b32.xlu0 %v1916, 96
        %v2101 = vpop.permute.xlu0 %2100
        %2102 = vrot.lane.b32.xlu0 %v1917, 96
        %v2103 = vpop.permute.xlu0 %2102
        %2104 = vrot.lane.b32.xlu0 %v1918, 96
        %v2105 = vpop.permute.xlu0 %2104
        %2106 = vrot.lane.b32.xlu0 %v1919, 96
        %v2107 = vpop.permute.xlu0 %2106
        %2108 = vrot.lane.b32.xlu0 %v1920, 96
        %v2109 = vpop.permute.xlu0 %2108
        %2110 = vrot.lane.b32.xlu0 %v1921, 96
        %v2111 = vpop.permute.xlu0 %2110
        %2112 = vrot.lane.b32.xlu0 %v1922, 96
        %v2113 = vpop.permute.xlu0 %2112
        %2114 = vrot.lane.b32.xlu0 %v1923, 96
        %v2115 = vpop.permute.xlu0 %2114
        %2116 = vrot.lane.b32.xlu0 %v1924, 96
        %v2117 = vpop.permute.xlu0 %2116
        %2118 = vrot.lane.b32.xlu0 %v2087, 96
        %v2119 = vpop.permute.xlu0 %2118
        %v2120 = vunpack.c.l.b16 %v1822
        %v2121 = vunpack.c.l.b16 %v1832
        %v2122 = vpack.c.b16 %v2121, %v2120
        %v2123 = vunpack.c.l.b16 %v1839
        %v2124 = vunpack.c.l.b16 %v1842
        %v2125 = vpack.c.b16 %v2124, %v2123
        %2126 = vrot.lane.b32.xlu0 %v2038, 32
        %v2127 = vpop.permute.xlu0 %2126
        %2128 = vrot.lane.b32.xlu0 %v2039, 32
        %v2129 = vpop.permute.xlu0 %2128
        %2130 = vrot.lane.b32.xlu0 %v2040, 32
        %v2131 = vpop.permute.xlu0 %2130
        %2132 = vrot.lane.b32.xlu0 %v2041, 32
        %v2133 = vpop.permute.xlu0 %2132
        %2134 = vrot.lane.b32.xlu0 %v2042, 32
        %v2135 = vpop.permute.xlu0 %2134
        %2136 = vrot.lane.b32.xlu0 %v2043, 32
        %v2137 = vpop.permute.xlu0 %2136
        %2138 = vrot.lane.b32.xlu0 %v2044, 32
        %v2139 = vpop.permute.xlu0 %2138
        %2140 = vrot.lane.b32.xlu0 %v2045, 32
        %v2141 = vpop.permute.xlu0 %2140
        %2142 = vrot.lane.b32.xlu0 %v2046, 32
        %v2143 = vpop.permute.xlu0 %2142
        %2144 = vrot.lane.b32.xlu0 %v2047, 32
        %v2145 = vpop.permute.xlu0 %2144
        %2146 = vrot.lane.b32.xlu0 %v2048, 32
        %v2147 = vpop.permute.xlu0 %2146
        %2148 = vrot.lane.b32.xlu0 %v2049, 32
        %v2149 = vpop.permute.xlu0 %2148
        %2150 = vrot.lane.b32.xlu0 %v2050, 32
        %v2151 = vpop.permute.xlu0 %2150
        %2152 = vrot.lane.b32.xlu0 %v2051, 32
        %v2153 = vpop.permute.xlu0 %2152
        %2154 = vrot.lane.b32.xlu0 %v2052, 32
        %v2155 = vpop.permute.xlu0 %2154
        %2156 = vrot.lane.b32.xlu0 %v2125, 32
        %v2157 = vpop.permute.xlu0 %2156
        %v2158 = vunpack.c.l.b16 %v1220
        %v2159 = vunpack.c.l.b16 %v1221
        %v2160 = vpack.c.b16 %v2159, %v2158
        %2161 = vrot.lane.b32.xlu0 %v1911, 64
        %v2162 = vpop.permute.xlu0 %2161
        %2163 = vrot.lane.b32.xlu0 %v1912, 64
        %v2164 = vpop.permute.xlu0 %2163
        %2165 = vrot.lane.b32.xlu0 %v1913, 64
        %v2166 = vpop.permute.xlu0 %2165
        %2167 = vrot.lane.b32.xlu0 %v1914, 64
        %v2168 = vpop.permute.xlu0 %2167
        %2169 = vrot.lane.b32.xlu0 %v1915, 64
        %v2170 = vpop.permute.xlu0 %2169
        %2171 = vrot.lane.b32.xlu0 %v1916, 64
        %v2172 = vpop.permute.xlu0 %2171
        %2173 = vrot.lane.b32.xlu0 %v1917, 64
        %v2174 = vpop.permute.xlu0 %2173
        %2175 = vrot.lane.b32.xlu0 %v1918, 64
        %v2176 = vpop.permute.xlu0 %2175
        %2177 = vrot.lane.b32.xlu0 %v1919, 64
        %v2178 = vpop.permute.xlu0 %2177
        %2179 = vrot.lane.b32.xlu0 %v1920, 64
        %v2180 = vpop.permute.xlu0 %2179
        %2181 = vrot.lane.b32.xlu0 %v1921, 64
        %v2182 = vpop.permute.xlu0 %2181
        %2183 = vrot.lane.b32.xlu0 %v1922, 64
        %v2184 = vpop.permute.xlu0 %2183
        %2185 = vrot.lane.b32.xlu0 %v1923, 64
        %v2186 = vpop.permute.xlu0 %2185
        %2187 = vrot.lane.b32.xlu0 %v1924, 64
        %v2188 = vpop.permute.xlu0 %2187
        %2189 = vrot.lane.b32.xlu0 %v2087, 64
        %v2190 = vpop.permute.xlu0 %2189
        %2191 = vrot.lane.b32.xlu0 %v2160, 64
        %v2192 = vpop.permute.xlu0 %2191
        %v2193 = vunpack.c.l.b16 %v1856
        %v2194 = vunpack.c.l.b16 %v1866
        %v2195 = vpack.c.b16 %v2194, %v2193
        %2196 = vrot.lane.b32.xlu0 %v1959, 96
        %v2197 = vpop.permute.xlu0 %2196
        %2198 = vrot.lane.b32.xlu0 %v1960, 96
        %v2199 = vpop.permute.xlu0 %2198
        %2200 = vrot.lane.b32.xlu0 %v1961, 96
        %v2201 = vpop.permute.xlu0 %2200
        %2202 = vrot.lane.b32.xlu0 %v1962, 96
        %v2203 = vpop.permute.xlu0 %2202
        %2204 = vrot.lane.b32.xlu0 %v1963, 96
        %v2205 = vpop.permute.xlu0 %2204
        %2206 = vrot.lane.b32.xlu0 %v1964, 96
        %v2207 = vpop.permute.xlu0 %2206
        %2208 = vrot.lane.b32.xlu0 %v1965, 96
        %v2209 = vpop.permute.xlu0 %2208
        %2210 = vrot.lane.b32.xlu0 %v1966, 96
        %v2211 = vpop.permute.xlu0 %2210
        %2212 = vrot.lane.b32.xlu0 %v1967, 96
        %v2213 = vpop.permute.xlu0 %2212
        %2214 = vrot.lane.b32.xlu0 %v1968, 96
        %v2215 = vpop.permute.xlu0 %2214
        %2216 = vrot.lane.b32.xlu0 %v1969, 96
        %v2217 = vpop.permute.xlu0 %2216
        %2218 = vrot.lane.b32.xlu0 %v1970, 96
        %v2219 = vpop.permute.xlu0 %2218
        %2220 = vrot.lane.b32.xlu0 %v1971, 96
        %v2221 = vpop.permute.xlu0 %2220
        %2222 = vrot.lane.b32.xlu0 %v1972, 96
        %v2223 = vpop.permute.xlu0 %2222
        %2224 = vrot.lane.b32.xlu0 %v2122, 96
        %v2225 = vpop.permute.xlu0 %2224
        %2226 = vrot.lane.b32.xlu0 %v2195, 96
        %v2227 = vpop.permute.xlu0 %2226
        %v2228 = vunpack.c.l.b16 %v1873
        %v2229 = vunpack.c.l.b16 %v1876
        %v2230 = vpack.c.b16 %v2229, %v2228
        %vm2231 = vcmask 261120
        %v2234 = vsel %vm2231, %v1909, %v1974
        %v2237 = vsel %vm2231, %v1910, %v1976
        %v2240 = vsel %vm2231, %v1911, %v1978
        %v2243 = vsel %vm2231, %v1912, %v1980
        %v2246 = vsel %vm2231, %v1913, %v1982
        %v2249 = vsel %vm2231, %v1914, %v1984
        %v2252 = vsel %vm2231, %v1915, %v1986
        %v2255 = vsel %vm2231, %v1916, %v1988
        %v2258 = vsel %vm2231, %v1917, %v1990
        %v2261 = vsel %vm2231, %v1918, %v1992
        %v2264 = vsel %vm2231, %v1919, %v1994
        %v2267 = vsel %vm2231, %v1920, %v1996
        %v2270 = vsel %vm2231, %v1921, %v1998
        %v2273 = vsel %vm2231, %v1922, %v2000
        %v2276 = vsel %vm2231, %v1923, %v2002
        %v2279 = vsel %vm2231, %v1924, %v2004
        %vm2280 = vcmask 523264
        %v2282 = vsel %vm2280, %v2234, %v2054
        %v2284 = vsel %vm2280, %v2237, %v2056
        %v2286 = vsel %vm2280, %v2240, %v2058
        %v2288 = vsel %vm2280, %v2243, %v2060
        %v2290 = vsel %vm2280, %v2246, %v2062
        %v2292 = vsel %vm2280, %v2249, %v2064
        %v2294 = vsel %vm2280, %v2252, %v2066
        %v2296 = vsel %vm2280, %v2255, %v2068
        %v2298 = vsel %vm2280, %v2258, %v2070
        %v2300 = vsel %vm2280, %v2261, %v2072
        %v2302 = vsel %vm2280, %v2264, %v2074
        %v2304 = vsel %vm2280, %v2267, %v2076
        %v2306 = vsel %vm2280, %v2270, %v2078
        %v2308 = vsel %vm2280, %v2273, %v2080
        %v2310 = vsel %vm2280, %v2276, %v2082
        %v2312 = vsel %vm2280, %v2279, %v2084
        %vm2313 = vcmask 785408
        %v2315 = vsel %vm2313, %v2282, %v2089
        %v2318 = vsel %vm2313, %v2284, %v2091
        %v2321 = vsel %vm2313, %v2286, %v2093
        %v2324 = vsel %vm2313, %v2288, %v2095
        %v2327 = vsel %vm2313, %v2290, %v2097
        %v2330 = vsel %vm2313, %v2292, %v2099
        %v2333 = vsel %vm2313, %v2294, %v2101
        %v2336 = vsel %vm2313, %v2296, %v2103
        %v2339 = vsel %vm2313, %v2298, %v2105
        %v2342 = vsel %vm2313, %v2300, %v2107
        %v2345 = vsel %vm2313, %v2302, %v2109
        %v2348 = vsel %vm2313, %v2304, %v2111
        %v2351 = vsel %vm2313, %v2306, %v2113
        %v2354 = vsel %vm2313, %v2308, %v2115
        %v2357 = vsel %vm2313, %v2310, %v2117
        %v2360 = vsel %vm2313, %v2312, %v2119
        %v2364 = vsel %vm2231, %v1958, %v2127
        %v2367 = vsel %vm2231, %v1959, %v2129
        %v2370 = vsel %vm2231, %v1960, %v2131
        %v2373 = vsel %vm2231, %v1961, %v2133
        %v2376 = vsel %vm2231, %v1962, %v2135
        %v2379 = vsel %vm2231, %v1963, %v2137
        %v2382 = vsel %vm2231, %v1964, %v2139
        %v2385 = vsel %vm2231, %v1965, %v2141
        %v2388 = vsel %vm2231, %v1966, %v2143
        %v2391 = vsel %vm2231, %v1967, %v2145
        %v2394 = vsel %vm2231, %v1968, %v2147
        %v2397 = vsel %vm2231, %v1969, %v2149
        %v2400 = vsel %vm2231, %v1970, %v2151
        %v2403 = vsel %vm2231, %v1971, %v2153
        %v2406 = vsel %vm2231, %v1972, %v2155
        %v2409 = vsel %vm2231, %v2122, %v2157
        %v2411 = vsel %vm2280, %v2364, %v2162
        %v2413 = vsel %vm2280, %v2367, %v2164
        %v2415 = vsel %vm2280, %v2370, %v2166
        %v2417 = vsel %vm2280, %v2373, %v2168
        %v2419 = vsel %vm2280, %v2376, %v2170
        %v2421 = vsel %vm2280, %v2379, %v2172
        %v2423 = vsel %vm2280, %v2382, %v2174
        %v2425 = vsel %vm2280, %v2385, %v2176
        %v2427 = vsel %vm2280, %v2388, %v2178
        %v2429 = vsel %vm2280, %v2391, %v2180
        %v2431 = vsel %vm2280, %v2394, %v2182
        %v2433 = vsel %vm2280, %v2397, %v2184
        %v2435 = vsel %vm2280, %v2400, %v2186
        %v2437 = vsel %vm2280, %v2403, %v2188
        %v2439 = vsel %vm2280, %v2406, %v2190
        %v2441 = vsel %vm2280, %v2409, %v2192
        %v2443 = vsel %vm2313, %v2411, %v2197
        %v2446 = vsel %vm2313, %v2413, %v2199
        %v2449 = vsel %vm2313, %v2415, %v2201
        %v2452 = vsel %vm2313, %v2417, %v2203
        %v2455 = vsel %vm2313, %v2419, %v2205
        %v2458 = vsel %vm2313, %v2421, %v2207
        %v2461 = vsel %vm2313, %v2423, %v2209
        %v2464 = vsel %vm2313, %v2425, %v2211
        %v2467 = vsel %vm2313, %v2427, %v2213
        %v2470 = vsel %vm2313, %v2429, %v2215
        %v2473 = vsel %vm2313, %v2431, %v2217
        %v2476 = vsel %vm2313, %v2433, %v2219
        %v2479 = vsel %vm2313, %v2435, %v2221
        %v2482 = vsel %vm2313, %v2437, %v2223
        %v2485 = vsel %vm2313, %v2439, %v2225
        %v2488 = vsel %vm2313, %v2441, %v2227
        %v2526 = vunpack.c.l.b16 %v1223
        %v2527 = vunpack.c.l.b16 %v1224
        %v2528 = vunpack.c.l.b16 %v1225
        %v2529 = vunpack.c.l.b16 %v1226
        %v2530 = vunpack.c.l.b16 %v1227
        %v2531 = vunpack.c.l.b16 %v1228
        %v2532 = vunpack.c.l.b16 %v1229
        %v2533 = vunpack.c.l.b16 %v1230
        %v2534 = vunpack.c.l.b16 %v1231
        %v2535 = vunpack.c.l.b16 %v1232
        %v2536 = vunpack.c.l.b16 %v1233
        %v2537 = vunpack.c.l.b16 %v1234
        %v2538 = vunpack.c.l.b16 %v1235
        %v2539 = vunpack.c.l.b16 %v1236
        %v2540 = vunpack.c.l.b16 %v1237
        %v2541 = vunpack.c.l.b16 %v1238
        %v2542 = vunpack.c.l.b16 %v1239
        %v2543 = vunpack.c.l.b16 %v1240
        %v2544 = vunpack.c.l.b16 %v1241
        %v2545 = vunpack.c.l.b16 %v1242
        %v2546 = vunpack.c.l.b16 %v1243
        %v2547 = vunpack.c.l.b16 %v1244
        %v2548 = vunpack.c.l.b16 %v1245
        %v2549 = vunpack.c.l.b16 %v1246
        %v2550 = vunpack.c.l.b16 %v1247
        %v2551 = vunpack.c.l.b16 %v1248
        %v2552 = vunpack.c.l.b16 %v1249
        %v2553 = vunpack.c.l.b16 %v1250
        %v2554 = vunpack.c.l.b16 %v1251
        %v2555 = vunpack.c.l.b16 %v1252
        %v2556 = vunpack.c.l.b16 %v1253
        %v2557 = vunpack.c.l.b16 %v1254
        %v2558 = vunpack.c.l.b16 %v1255
        %v2559 = vunpack.c.l.b16 %v1256
        %v2560 = vunpack.c.l.b16 %v1257
        %v2561 = vunpack.c.l.b16 %v1258
        %v2562 = vpack.c.b16 %v2527, %v2526
        %v2563 = vpack.c.b16 %v2529, %v2528
        %v2564 = vpack.c.b16 %v2531, %v2530
        %v2565 = vpack.c.b16 %v2533, %v2532
        %v2566 = vpack.c.b16 %v2535, %v2534
        %v2567 = vpack.c.b16 %v2537, %v2536
        %v2568 = vpack.c.b16 %v2539, %v2538
        %v2569 = vpack.c.b16 %v2541, %v2540
        %v2570 = vpack.c.b16 %v2543, %v2542
        %v2571 = vpack.c.b16 %v2545, %v2544
        %v2572 = vpack.c.b16 %v2547, %v2546
        %v2573 = vpack.c.b16 %v2549, %v2548
        %v2574 = vpack.c.b16 %v2551, %v2550
        %v2575 = vpack.c.b16 %v2553, %v2552
        %v2576 = vpack.c.b16 %v2555, %v2554
        %v2577 = vpack.c.b16 %v2557, %v2556
        %v2578 = vpack.c.b16 %v2559, %v2558
        %v2579 = vpack.c.b16 %v2561, %v2560
        %v2599 = vsel %vm2231, %v2039, 0
        %v2602 = vsel %vm2231, %v2040, 0
        %v2605 = vsel %vm2231, %v2041, 0
        %v2608 = vsel %vm2231, %v2042, 0
        %v2611 = vsel %vm2231, %v2043, 0
        %v2614 = vsel %vm2231, %v2044, 0
        %v2617 = vsel %vm2231, %v2045, 0
        %v2620 = vsel %vm2231, %v2046, 0
        %v2623 = vsel %vm2231, %v2047, 0
        %v2626 = vsel %vm2231, %v2048, 0
        %v2629 = vsel %vm2231, %v2049, 0
        %v2632 = vsel %vm2231, %v2050, 0
        %v2635 = vsel %vm2231, %v2051, 0
        %v2638 = vsel %vm2231, %v2052, 0
        %v2641 = vsel %vm2231, %v2125, 0
        %v2644 = vsel %vm2231, %v2230, 0
        %2646 = vmatprep.subr.bf16.mxu0 0
        %2647 = vmatpush1.bf16.msra.mxu0 %v2569
        %2648 = vmatprep.subr.bf16.mxu0 0
        %2649 = vmatpush1.bf16.msra.mxu0 %v2568
        %2650 = vmatprep.subr.bf16.mxu0 0
        %2651 = vmatpush1.bf16.msra.mxu0 %v2567
        %2652 = vmatprep.subr.bf16.mxu0 0
        %2653 = vmatpush1.bf16.msra.mxu0 %v2566
        %2654 = vmatprep.subr.bf16.mxu0 0
        %2655 = vmatpush1.bf16.msra.mxu0 %v2565
        %2656 = vmatprep.subr.bf16.mxu0 0
        %2657 = vmatpush1.bf16.msra.mxu0 %v2564
        %2658 = vmatprep.subr.bf16.mxu0 0
        %2659 = vmatpush1.bf16.msra.mxu0 %v2563
        %2660 = vmatprep.subr.bf16.mxu0 0
        %2661 = vmatpush1.bf16.msra.mxu0 %v2562
        %2662 = vmatprep.subr.bf16.mxu0 0
        %2663 = vmatpush2.bf16.msra.mxu0 %v2577
        %2664 = vmatprep.subr.bf16.mxu0 0
        %2665 = vmatpush2.bf16.msra.mxu0 %v2576
        %2666 = vmatprep.subr.bf16.mxu0 0
        %2667 = vmatpush2.bf16.msra.mxu0 %v2575
        %2668 = vmatprep.subr.bf16.mxu0 0
        %2669 = vmatpush2.bf16.msra.mxu0 %v2574
        %2670 = vmatprep.subr.bf16.mxu0 0
        %2671 = vmatpush2.bf16.msra.mxu0 %v2573
        %2672 = vmatprep.subr.bf16.mxu0 0
        %2673 = vmatpush2.bf16.msra.mxu0 %v2572
        %2674 = vmatprep.subr.bf16.mxu0 0
        %2675 = vmatpush2.bf16.msra.mxu0 %v2571
        %2676 = vmatprep.subr.bf16.mxu0 0
        %2677 = vmatpush2.bf16.msra.mxu0 %v2570
        %2678 = vmatprep.mubr.bf16.mxu0 %v2443
        %2679 = vmatmul.mubr.bf16.gmra.mxu0 %v2315
        %v2680 = vpop.f32.mrf.mxu0
        %v2681 = vadd.f32 0.0, %v2680
        %v2682 = vpop.f32.mrf.mxu0
        %v2683 = vpop.f32.mrf.mxu0
        %v2684 = vadd.f32 0.0, %v2683
        %v2685 = vpop.f32.mrf.mxu0
        %2686 = vmatprep.mubr.bf16.mxu0 %v2446
        %2687 = vmatmul.mubr.bf16.gmra.mxu0 %v2318
        %v2688 = vpop.f32.mrf.mxu0
        %v2689 = vadd.f32 0.0, %v2688
        %v2690 = vpop.f32.mrf.mxu0
        %v2691 = vpop.f32.mrf.mxu0
        %v2692 = vadd.f32 0.0, %v2691
        %v2693 = vpop.f32.mrf.mxu0
        %2694 = vmatprep.mubr.bf16.mxu0 %v2449
        %2695 = vmatmul.mubr.bf16.gmra.mxu0 %v2321
        %v2696 = vpop.f32.mrf.mxu0
        %v2697 = vadd.f32 0.0, %v2696
        %v2698 = vpop.f32.mrf.mxu0
        %v2699 = vpop.f32.mrf.mxu0
        %v2700 = vadd.f32 0.0, %v2699
        %v2701 = vpop.f32.mrf.mxu0
        %2702 = vmatprep.mubr.bf16.mxu0 %v2452
        %2703 = vmatmul.mubr.bf16.gmra.mxu0 %v2324
        %v2704 = vpop.f32.mrf.mxu0
        %v2705 = vadd.f32 0.0, %v2704
        %v2706 = vpop.f32.mrf.mxu0
        %v2707 = vpop.f32.mrf.mxu0
        %v2708 = vadd.f32 0.0, %v2707
        %v2709 = vpop.f32.mrf.mxu0
        %2710 = vmatprep.mubr.bf16.mxu0 %v2455
        %2711 = vmatmul.mubr.bf16.gmra.mxu0 %v2327
        %v2712 = vpop.f32.mrf.mxu0
        %v2713 = vadd.f32 0.0, %v2712
        %v2714 = vpop.f32.mrf.mxu0
        %v2715 = vpop.f32.mrf.mxu0
        %v2716 = vadd.f32 0.0, %v2715
        %v2717 = vpop.f32.mrf.mxu0
        %2718 = vmatprep.mubr.bf16.mxu0 %v2458
        %2719 = vmatmul.mubr.bf16.gmra.mxu0 %v2330
        %v2720 = vpop.f32.mrf.mxu0
        %v2721 = vadd.f32 0.0, %v2720
        %v2722 = vpop.f32.mrf.mxu0
        %v2723 = vpop.f32.mrf.mxu0
        %v2724 = vadd.f32 0.0, %v2723
        %v2725 = vpop.f32.mrf.mxu0
        %2726 = vmatprep.mubr.bf16.mxu0 %v2461
        %2727 = vmatmul.mubr.bf16.gmra.mxu0 %v2333
        %v2728 = vpop.f32.mrf.mxu0
        %v2729 = vadd.f32 0.0, %v2728
        %v2730 = vpop.f32.mrf.mxu0
        %v2731 = vpop.f32.mrf.mxu0
        %v2732 = vadd.f32 0.0, %v2731
        %v2733 = vpop.f32.mrf.mxu0
        %2734 = vmatprep.mubr.bf16.mxu0 %v2464
        %2735 = vmatmul.mubr.bf16.gmra.mxu0 %v2336
        %v2736 = vpop.f32.mrf.mxu0
        %v2737 = vadd.f32 0.0, %v2736
        %v2738 = vpop.f32.mrf.mxu0
        %v2739 = vpop.f32.mrf.mxu0
        %v2740 = vadd.f32 0.0, %v2739
        %v2741 = vpop.f32.mrf.mxu0
        %2742 = vmatprep.mubr.bf16.mxu0 %v2467
        %2743 = vmatmul.mubr.bf16.gmra.mxu0 %v2339
        %v2744 = vpop.f32.mrf.mxu0
        %v2745 = vadd.f32 0.0, %v2744
        %v2746 = vpop.f32.mrf.mxu0
        %v2747 = vpop.f32.mrf.mxu0
        %v2748 = vadd.f32 0.0, %v2747
        %v2749 = vpop.f32.mrf.mxu0
        %2750 = vmatprep.mubr.bf16.mxu0 %v2470
        %2751 = vmatmul.mubr.bf16.gmra.mxu0 %v2342
        %v2752 = vpop.f32.mrf.mxu0
        %v2753 = vadd.f32 0.0, %v2752
        %v2754 = vpop.f32.mrf.mxu0
        %v2755 = vpop.f32.mrf.mxu0
        %v2756 = vadd.f32 0.0, %v2755
        %v2757 = vpop.f32.mrf.mxu0
        %2758 = vmatprep.mubr.bf16.mxu0 %v2473
        %2759 = vmatmul.mubr.bf16.gmra.mxu0 %v2345
        %v2760 = vpop.f32.mrf.mxu0
        %v2761 = vadd.f32 0.0, %v2760
        %v2762 = vpop.f32.mrf.mxu0
        %v2763 = vpop.f32.mrf.mxu0
        %v2764 = vadd.f32 0.0, %v2763
        %v2765 = vpop.f32.mrf.mxu0
        %2766 = vmatprep.mubr.bf16.mxu0 %v2476
        %2767 = vmatmul.mubr.bf16.gmra.mxu0 %v2348
        %v2768 = vpop.f32.mrf.mxu0
        %v2769 = vadd.f32 0.0, %v2768
        %v2770 = vpop.f32.mrf.mxu0
        %v2771 = vpop.f32.mrf.mxu0
        %v2772 = vadd.f32 0.0, %v2771
        %v2773 = vpop.f32.mrf.mxu0
        %2774 = vmatprep.mubr.bf16.mxu0 %v2479
        %2775 = vmatmul.mubr.bf16.gmra.mxu0 %v2351
        %v2776 = vpop.f32.mrf.mxu0
        %v2777 = vadd.f32 0.0, %v2776
        %v2778 = vpop.f32.mrf.mxu0
        %v2779 = vpop.f32.mrf.mxu0
        %v2780 = vadd.f32 0.0, %v2779
        %v2781 = vpop.f32.mrf.mxu0
        %2782 = vmatprep.mubr.bf16.mxu0 %v2482
        %2783 = vmatmul.mubr.bf16.gmra.mxu0 %v2354
        %v2784 = vpop.f32.mrf.mxu0
        %v2785 = vadd.f32 0.0, %v2784
        %v2786 = vpop.f32.mrf.mxu0
        %v2787 = vpop.f32.mrf.mxu0
        %v2788 = vadd.f32 0.0, %v2787
        %v2789 = vpop.f32.mrf.mxu0
        %2790 = vmatprep.mubr.bf16.mxu0 %v2485
        %2791 = vmatmul.mubr.bf16.gmra.mxu0 %v2357
        %v2792 = vpop.f32.mrf.mxu0
        %v2793 = vadd.f32 0.0, %v2792
        %v2794 = vpop.f32.mrf.mxu0
        %v2795 = vpop.f32.mrf.mxu0
        %v2796 = vadd.f32 0.0, %v2795
        %v2797 = vpop.f32.mrf.mxu0
        %2798 = vmatprep.mubr.bf16.mxu0 %v2488
        %2799 = vmatmul.mubr.bf16.gmra.mxu0 %v2360
        %v2800 = vpop.f32.mrf.mxu0
        %v2801 = vadd.f32 0.0, %v2800
        %v2802 = vpop.f32.mrf.mxu0
        %v2803 = vpop.f32.mrf.mxu0
        %v2804 = vadd.f32 0.0, %v2803
        %v2805 = vpop.f32.mrf.mxu0
        %2806 = vdwg.mxu0
        %2807 = vmatprep.subr.bf16.mxu0 0
        %2808 = vmatpush1.bf16.msra.mxu0 0
        %2809 = vmatprep.subr.bf16.mxu0 0
        %2810 = vmatpush1.bf16.msra.mxu0 0
        %2811 = vmatprep.subr.bf16.mxu0 0
        %2812 = vmatpush1.bf16.msra.mxu0 0
        %2813 = vmatprep.subr.bf16.mxu0 0
        %2814 = vmatpush1.bf16.msra.mxu0 0
        %2815 = vmatprep.subr.bf16.mxu0 0
        %2816 = vmatpush1.bf16.msra.mxu0 0
        %2817 = vmatprep.subr.bf16.mxu0 0
        %2818 = vmatpush1.bf16.msra.mxu0 0
        %2819 = vmatprep.subr.bf16.mxu0 0
        %2820 = vmatpush1.bf16.msra.mxu0 %v2579
        %2821 = vmatprep.subr.bf16.mxu0 0
        %2822 = vmatpush1.bf16.msra.mxu0 %v2578
        %2823 = vmatprep.subr.bf16.mxu0 0
        %2824 = vmatpush2.bf16.msra.mxu0 0
        %2825 = vmatprep.subr.bf16.mxu0 0
        %2826 = vmatpush2.bf16.msra.mxu0 0
        %2827 = vmatprep.subr.bf16.mxu0 0
        %2828 = vmatpush2.bf16.msra.mxu0 0
        %2829 = vmatprep.subr.bf16.mxu0 0
        %2830 = vmatpush2.bf16.msra.mxu0 0
        %2831 = vmatprep.subr.bf16.mxu0 0
        %2832 = vmatpush2.bf16.msra.mxu0 0
        %2833 = vmatprep.subr.bf16.mxu0 0
        %2834 = vmatpush2.bf16.msra.mxu0 0
        %2835 = vmatprep.subr.bf16.mxu0 0
        %2836 = vmatpush2.bf16.msra.mxu0 0
        %2837 = vmatprep.subr.bf16.mxu0 0
        %2838 = vmatpush2.bf16.msra.mxu0 0
        %2839 = vmatprep.mubr.bf16.mxu0 0
        %2840 = vmatmul.mubr.bf16.gmra.mxu0 %v2599
        %v2841 = vpop.f32.mrf.mxu0
        %v2842 = vadd.f32 %v2681, %v2841
        %v2843 = vpop.f32.mrf.mxu0
        %v2844 = vpop.f32.mrf.mxu0
        %v2845 = vadd.f32 %v2684, %v2844
        %v2846 = vpop.f32.mrf.mxu0
        %2847 = vmatprep.mubr.bf16.mxu0 0
        %2848 = vmatmul.mubr.bf16.gmra.mxu0 %v2602
        %v2849 = vpop.f32.mrf.mxu0
        %v2850 = vadd.f32 %v2689, %v2849
        %v2851 = vpop.f32.mrf.mxu0
        %v2852 = vpop.f32.mrf.mxu0
        %v2853 = vadd.f32 %v2692, %v2852
        %v2854 = vpop.f32.mrf.mxu0
        %2855 = vmatprep.mubr.bf16.mxu0 0
        %2856 = vmatmul.mubr.bf16.gmra.mxu0 %v2605
        %v2857 = vpop.f32.mrf.mxu0
        %v2858 = vadd.f32 %v2697, %v2857
        %v2859 = vpop.f32.mrf.mxu0
        %v2860 = vpop.f32.mrf.mxu0
        %v2861 = vadd.f32 %v2700, %v2860
        %v2862 = vpop.f32.mrf.mxu0
        %2863 = vmatprep.mubr.bf16.mxu0 0
        %2864 = vmatmul.mubr.bf16.gmra.mxu0 %v2608
        %v2865 = vpop.f32.mrf.mxu0
        %v2866 = vadd.f32 %v2705, %v2865
        %v2867 = vpop.f32.mrf.mxu0
        %v2868 = vpop.f32.mrf.mxu0
        %v2869 = vadd.f32 %v2708, %v2868
        %v2870 = vpop.f32.mrf.mxu0
        %2871 = vmatprep.mubr.bf16.mxu0 0
        %2872 = vmatmul.mubr.bf16.gmra.mxu0 %v2611
        %v2873 = vpop.f32.mrf.mxu0
        %v2874 = vadd.f32 %v2713, %v2873
        %v2875 = vpop.f32.mrf.mxu0
        %v2876 = vpop.f32.mrf.mxu0
        %v2877 = vadd.f32 %v2716, %v2876
        %v2878 = vpop.f32.mrf.mxu0
        %2879 = vmatprep.mubr.bf16.mxu0 0
        %2880 = vmatmul.mubr.bf16.gmra.mxu0 %v2614
        %v2881 = vpop.f32.mrf.mxu0
        %v2882 = vadd.f32 %v2721, %v2881
        %v2883 = vpop.f32.mrf.mxu0
        %v2884 = vpop.f32.mrf.mxu0
        %v2885 = vadd.f32 %v2724, %v2884
        %v2886 = vpop.f32.mrf.mxu0
        %2887 = vmatprep.mubr.bf16.mxu0 0
        %2888 = vmatmul.mubr.bf16.gmra.mxu0 %v2617
        %v2889 = vpop.f32.mrf.mxu0
        %v2890 = vadd.f32 %v2729, %v2889
        %v2891 = vpop.f32.mrf.mxu0
        %v2892 = vpop.f32.mrf.mxu0
        %v2893 = vadd.f32 %v2732, %v2892
        %v2894 = vpop.f32.mrf.mxu0
        %2895 = vmatprep.mubr.bf16.mxu0 0
        %2896 = vmatmul.mubr.bf16.gmra.mxu0 %v2620
        %v2897 = vpop.f32.mrf.mxu0
        %v2898 = vadd.f32 %v2737, %v2897
        %v2899 = vpop.f32.mrf.mxu0
        %v2900 = vpop.f32.mrf.mxu0
        %v2901 = vadd.f32 %v2740, %v2900
        %v2902 = vpop.f32.mrf.mxu0
        %2903 = vmatprep.mubr.bf16.mxu0 0
        %2904 = vmatmul.mubr.bf16.gmra.mxu0 %v2623
        %v2905 = vpop.f32.mrf.mxu0
        %v2906 = vadd.f32 %v2745, %v2905
        %v2907 = vpop.f32.mrf.mxu0
        %v2908 = vpop.f32.mrf.mxu0
        %v2909 = vadd.f32 %v2748, %v2908
        %v2910 = vpop.f32.mrf.mxu0
        %2911 = vmatprep.mubr.bf16.mxu0 0
        %2912 = vmatmul.mubr.bf16.gmra.mxu0 %v2626
        %v2913 = vpop.f32.mrf.mxu0
        %v2914 = vadd.f32 %v2753, %v2913
        %v2915 = vpop.f32.mrf.mxu0
        %v2916 = vpop.f32.mrf.mxu0
        %v2917 = vadd.f32 %v2756, %v2916
        %v2918 = vpop.f32.mrf.mxu0
        %2919 = vmatprep.mubr.bf16.mxu0 0
        %2920 = vmatmul.mubr.bf16.gmra.mxu0 %v2629
        %v2921 = vpop.f32.mrf.mxu0
        %v2922 = vadd.f32 %v2761, %v2921
        %v2923 = vpop.f32.mrf.mxu0
        %v2924 = vpop.f32.mrf.mxu0
        %v2925 = vadd.f32 %v2764, %v2924
        %v2926 = vpop.f32.mrf.mxu0
        %2927 = vmatprep.mubr.bf16.mxu0 0
        %2928 = vmatmul.mubr.bf16.gmra.mxu0 %v2632
        %v2929 = vpop.f32.mrf.mxu0
        %v2930 = vadd.f32 %v2769, %v2929
        %v2931 = vpop.f32.mrf.mxu0
        %v2932 = vpop.f32.mrf.mxu0
        %v2933 = vadd.f32 %v2772, %v2932
        %v2934 = vpop.f32.mrf.mxu0
        %2935 = vmatprep.mubr.bf16.mxu0 0
        %2936 = vmatmul.mubr.bf16.gmra.mxu0 %v2635
        %v2937 = vpop.f32.mrf.mxu0
        %v2938 = vadd.f32 %v2777, %v2937
        %v2939 = vpop.f32.mrf.mxu0
        %v2940 = vpop.f32.mrf.mxu0
        %v2941 = vadd.f32 %v2780, %v2940
        %v2942 = vpop.f32.mrf.mxu0
        %2943 = vmatprep.mubr.bf16.mxu0 0
        %2944 = vmatmul.mubr.bf16.gmra.mxu0 %v2638
        %v2945 = vpop.f32.mrf.mxu0
        %v2946 = vadd.f32 %v2785, %v2945
        %v2947 = vpop.f32.mrf.mxu0
        %v2948 = vpop.f32.mrf.mxu0
        %v2949 = vadd.f32 %v2788, %v2948
        %v2950 = vpop.f32.mrf.mxu0
        %2951 = vmatprep.mubr.bf16.mxu0 0
        %2952 = vmatmul.mubr.bf16.gmra.mxu0 %v2641
        %v2953 = vpop.f32.mrf.mxu0
        %v2954 = vadd.f32 %v2793, %v2953
        %v2955 = vpop.f32.mrf.mxu0
        %v2956 = vpop.f32.mrf.mxu0
        %v2957 = vadd.f32 %v2796, %v2956
        %v2958 = vpop.f32.mrf.mxu0
        %2959 = vmatprep.mubr.bf16.mxu0 0
        %2960 = vmatmul.mubr.bf16.gmra.mxu0 %v2644
        %v2961 = vpop.f32.mrf.mxu0
        %v2962 = vadd.f32 %v2801, %v2961
        %v2963 = vpop.f32.mrf.mxu0
        %v2964 = vpop.f32.mrf.mxu0
        %v2965 = vadd.f32 %v2804, %v2964
        %v2966 = vpop.f32.mrf.mxu0
        %2967 = vdwg.mxu0
        %v2968 = vld [vmem:[%s4] sm:$0x1]
        %v2969 = vld [vmem:[%s5] sm:$0x1]
        %v2971 = vlaneseq
        %v2972 = vshrl.u32 %v2971, 7
        %v2973 = vsub.s32 0, %v2972
        %v2974 = vrot.slane %v2968, %v2973
        %v2976 = vmul.f32 %v2842, %v2974
        %v2977 = vmul.f32 %v2845, %v2974
        %v2978 = vmul.f32 %v2850, %v2974
        %v2979 = vmul.f32 %v2853, %v2974
        %v2980 = vmul.f32 %v2858, %v2974
        %v2981 = vmul.f32 %v2861, %v2974
        %v2982 = vmul.f32 %v2866, %v2974
        %v2983 = vmul.f32 %v2869, %v2974
        %v2984 = vmul.f32 %v2874, %v2974
        %v2985 = vmul.f32 %v2877, %v2974
        %v2986 = vmul.f32 %v2882, %v2974
        %v2987 = vmul.f32 %v2885, %v2974
        %v2988 = vmul.f32 %v2890, %v2974
        %v2989 = vmul.f32 %v2893, %v2974
        %v2990 = vmul.f32 %v2898, %v2974
        %v2991 = vmul.f32 %v2901, %v2974
        %v2992 = vmul.f32 %v2906, %v2974
        %v2993 = vmul.f32 %v2909, %v2974
        %v2994 = vmul.f32 %v2914, %v2974
        %v2995 = vmul.f32 %v2917, %v2974
        %v2996 = vmul.f32 %v2922, %v2974
        %v2997 = vmul.f32 %v2925, %v2974
        %v2998 = vmul.f32 %v2930, %v2974
        %v2999 = vmul.f32 %v2933, %v2974
        %v3000 = vmul.f32 %v2938, %v2974
        %v3001 = vmul.f32 %v2941, %v2974
        %v3002 = vmul.f32 %v2946, %v2974
        %v3003 = vmul.f32 %v2949, %v2974
        %v3004 = vmul.f32 %v2954, %v2974
        %v3005 = vmul.f32 %v2957, %v2974
        %v3006 = vmul.f32 %v2962, %v2974
        %v3007 = vmul.f32 %v2965, %v2974
        %v3009 = vlaneseq
        %v3010 = vshrl.u32 %v3009, 7
        %v3011 = vsub.s32 0, %v3010
        %v3012 = vrot.slane %v2969, %v3011
        %v3014 = vadd.f32 %v2976, %v3012
        %v3015 = vadd.f32 %v2977, %v3012
        %v3016 = vadd.f32 %v2978, %v3012
        %v3017 = vadd.f32 %v2979, %v3012
        %v3018 = vadd.f32 %v2980, %v3012
        %v3019 = vadd.f32 %v2981, %v3012
        %v3020 = vadd.f32 %v2982, %v3012
        %v3021 = vadd.f32 %v2983, %v3012
        %v3022 = vadd.f32 %v2984, %v3012
        %v3023 = vadd.f32 %v2985, %v3012
        %v3024 = vadd.f32 %v2986, %v3012
        %v3025 = vadd.f32 %v2987, %v3012
        %v3026 = vadd.f32 %v2988, %v3012
        %v3027 = vadd.f32 %v2989, %v3012
        %v3028 = vadd.f32 %v2990, %v3012
        %v3029 = vadd.f32 %v2991, %v3012
        %v3030 = vadd.f32 %v2992, %v3012
        %v3031 = vadd.f32 %v2993, %v3012
        %v3032 = vadd.f32 %v2994, %v3012
        %v3033 = vadd.f32 %v2995, %v3012
        %v3034 = vadd.f32 %v2996, %v3012
        %v3035 = vadd.f32 %v2997, %v3012
        %v3036 = vadd.f32 %v2998, %v3012
        %v3037 = vadd.f32 %v2999, %v3012
        %v3038 = vadd.f32 %v3000, %v3012
        %v3039 = vadd.f32 %v3001, %v3012
        %v3040 = vadd.f32 %v3002, %v3012
        %v3041 = vadd.f32 %v3003, %v3012
        %v3042 = vadd.f32 %v3004, %v3012
        %v3043 = vadd.f32 %v3005, %v3012
        %v3044 = vadd.f32 %v3006, %v3012
        %v3045 = vadd.f32 %v3007, %v3012
        %v3046 = vmax.f32 %v3014, 0.0
        %v3047 = vmax.f32 %v3015, 0.0
        %v3048 = vmax.f32 %v3016, 0.0
        %v3049 = vmax.f32 %v3017, 0.0
        %v3050 = vmax.f32 %v3018, 0.0
        %v3051 = vmax.f32 %v3019, 0.0
        %v3052 = vmax.f32 %v3020, 0.0
        %v3053 = vmax.f32 %v3021, 0.0
        %v3054 = vmax.f32 %v3022, 0.0
        %v3055 = vmax.f32 %v3023, 0.0
        %v3056 = vmax.f32 %v3024, 0.0
        %v3057 = vmax.f32 %v3025, 0.0
        %v3058 = vmax.f32 %v3026, 0.0
        %v3059 = vmax.f32 %v3027, 0.0
        %v3060 = vmax.f32 %v3028, 0.0
        %v3061 = vmax.f32 %v3029, 0.0
        %v3062 = vmax.f32 %v3030, 0.0
        %v3063 = vmax.f32 %v3031, 0.0
        %v3064 = vmax.f32 %v3032, 0.0
        %v3065 = vmax.f32 %v3033, 0.0
        %v3066 = vmax.f32 %v3034, 0.0
        %v3067 = vmax.f32 %v3035, 0.0
        %v3068 = vmax.f32 %v3036, 0.0
        %v3069 = vmax.f32 %v3037, 0.0
        %v3070 = vmax.f32 %v3038, 0.0
        %v3071 = vmax.f32 %v3039, 0.0
        %v3072 = vmax.f32 %v3040, 0.0
        %v3073 = vmax.f32 %v3041, 0.0
        %v3074 = vmax.f32 %v3042, 0.0
        %v3075 = vmax.f32 %v3043, 0.0
        %v3076 = vmax.f32 %v3044, 0.0
        %v3077 = vmax.f32 %v3045, 0.0
        %v3078 = vmin.f32 %v3046, 1.0
        %v3079 = vmin.f32 %v3047, 1.0
        %v3080 = vmin.f32 %v3048, 1.0
        %v3081 = vmin.f32 %v3049, 1.0
        %v3082 = vmin.f32 %v3050, 1.0
        %v3083 = vmin.f32 %v3051, 1.0
        %v3084 = vmin.f32 %v3052, 1.0
        %v3085 = vmin.f32 %v3053, 1.0
        %v3086 = vmin.f32 %v3054, 1.0
        %v3087 = vmin.f32 %v3055, 1.0
        %v3088 = vmin.f32 %v3056, 1.0
        %v3089 = vmin.f32 %v3057, 1.0
        %v3090 = vmin.f32 %v3058, 1.0
        %v3091 = vmin.f32 %v3059, 1.0
        %v3092 = vmin.f32 %v3060, 1.0
        %v3093 = vmin.f32 %v3061, 1.0
        %v3094 = vmin.f32 %v3062, 1.0
        %v3095 = vmin.f32 %v3063, 1.0
        %v3096 = vmin.f32 %v3064, 1.0
        %v3097 = vmin.f32 %v3065, 1.0
        %v3098 = vmin.f32 %v3066, 1.0
        %v3099 = vmin.f32 %v3067, 1.0
        %v3100 = vmin.f32 %v3068, 1.0
        %v3101 = vmin.f32 %v3069, 1.0
        %v3102 = vmin.f32 %v3070, 1.0
        %v3103 = vmin.f32 %v3071, 1.0
        %v3104 = vmin.f32 %v3072, 1.0
        %v3105 = vmin.f32 %v3073, 1.0
        %v3106 = vmin.f32 %v3074, 1.0
        %v3107 = vmin.f32 %v3075, 1.0
        %v3108 = vmin.f32 %v3076, 1.0
        %v3109 = vmin.f32 %v3077, 1.0
        %v3110 = vmul.f32 %v3078, 15.0
        %v3111 = vmul.f32 %v3079, 15.0
        %v3112 = vmul.f32 %v3080, 15.0
        %v3113 = vmul.f32 %v3081, 15.0
        %v3114 = vmul.f32 %v3082, 15.0
        %v3115 = vmul.f32 %v3083, 15.0
        %v3116 = vmul.f32 %v3084, 15.0
        %v3117 = vmul.f32 %v3085, 15.0
        %v3118 = vmul.f32 %v3086, 15.0
        %v3119 = vmul.f32 %v3087, 15.0
        %v3120 = vmul.f32 %v3088, 15.0
        %v3121 = vmul.f32 %v3089, 15.0
        %v3122 = vmul.f32 %v3090, 15.0
        %v3123 = vmul.f32 %v3091, 15.0
        %v3124 = vmul.f32 %v3092, 15.0
        %v3125 = vmul.f32 %v3093, 15.0
        %v3126 = vmul.f32 %v3094, 15.0
        %v3127 = vmul.f32 %v3095, 15.0
        %v3128 = vmul.f32 %v3096, 15.0
        %v3129 = vmul.f32 %v3097, 15.0
        %v3130 = vmul.f32 %v3098, 15.0
        %v3131 = vmul.f32 %v3099, 15.0
        %v3132 = vmul.f32 %v3100, 15.0
        %v3133 = vmul.f32 %v3101, 15.0
        %v3134 = vmul.f32 %v3102, 15.0
        %v3135 = vmul.f32 %v3103, 15.0
        %v3136 = vmul.f32 %v3104, 15.0
        %v3137 = vmul.f32 %v3105, 15.0
        %v3138 = vmul.f32 %v3106, 15.0
        %v3139 = vmul.f32 %v3107, 15.0
        %v3140 = vmul.f32 %v3108, 15.0
        %v3141 = vmul.f32 %v3109, 15.0
        %v3142 = vround.ne.pseudo %v3110
        %v3143 = vround.ne.pseudo %v3111
        %v3144 = vround.ne.pseudo %v3112
        %v3145 = vround.ne.pseudo %v3113
        %v3146 = vround.ne.pseudo %v3114
        %v3147 = vround.ne.pseudo %v3115
        %v3148 = vround.ne.pseudo %v3116
        %v3149 = vround.ne.pseudo %v3117
        %v3150 = vround.ne.pseudo %v3118
        %v3151 = vround.ne.pseudo %v3119
        %v3152 = vround.ne.pseudo %v3120
        %v3153 = vround.ne.pseudo %v3121
        %v3154 = vround.ne.pseudo %v3122
        %v3155 = vround.ne.pseudo %v3123
        %v3156 = vround.ne.pseudo %v3124
        %v3157 = vround.ne.pseudo %v3125
        %v3158 = vround.ne.pseudo %v3126
        %v3159 = vround.ne.pseudo %v3127
        %v3160 = vround.ne.pseudo %v3128
        %v3161 = vround.ne.pseudo %v3129
        %v3162 = vround.ne.pseudo %v3130
        %v3163 = vround.ne.pseudo %v3131
        %v3164 = vround.ne.pseudo %v3132
        %v3165 = vround.ne.pseudo %v3133
        %v3166 = vround.ne.pseudo %v3134
        %v3167 = vround.ne.pseudo %v3135
        %v3168 = vround.ne.pseudo %v3136
        %v3169 = vround.ne.pseudo %v3137
        %v3170 = vround.ne.pseudo %v3138
        %v3171 = vround.ne.pseudo %v3139
        %v3172 = vround.ne.pseudo %v3140
        %v3173 = vround.ne.pseudo %v3141
        %v3174 = vmul.f32 %v3142, %v543
        %v3175 = vmul.f32 %v3143, %v543
        %v3176 = vmul.f32 %v3144, %v543
        %v3177 = vmul.f32 %v3145, %v543
        %v3178 = vmul.f32 %v3146, %v543
        %v3179 = vmul.f32 %v3147, %v543
        %v3180 = vmul.f32 %v3148, %v543
        %v3181 = vmul.f32 %v3149, %v543
        %v3182 = vmul.f32 %v3150, %v543
        %v3183 = vmul.f32 %v3151, %v543
        %v3184 = vmul.f32 %v3152, %v543
        %v3185 = vmul.f32 %v3153, %v543
        %v3186 = vmul.f32 %v3154, %v543
        %v3187 = vmul.f32 %v3155, %v543
        %v3188 = vmul.f32 %v3156, %v543
        %v3189 = vmul.f32 %v3157, %v543
        %v3190 = vmul.f32 %v3158, %v543
        %v3191 = vmul.f32 %v3159, %v543
        %v3192 = vmul.f32 %v3160, %v543
        %v3193 = vmul.f32 %v3161, %v543
        %v3194 = vmul.f32 %v3162, %v543
        %v3195 = vmul.f32 %v3163, %v543
        %v3196 = vmul.f32 %v3164, %v543
        %v3197 = vmul.f32 %v3165, %v543
        %v3198 = vmul.f32 %v3166, %v543
        %v3199 = vmul.f32 %v3167, %v543
        %v3200 = vmul.f32 %v3168, %v543
        %v3201 = vmul.f32 %v3169, %v543
        %v3202 = vmul.f32 %v3170, %v543
        %v3203 = vmul.f32 %v3171, %v543
        %v3204 = vmul.f32 %v3172, %v543
        %v3205 = vmul.f32 %v3173, %v543
        %v3206 = vpack.c.bf16 %v3175, %v3174
        %v3207 = vpack.c.bf16 %v3177, %v3176
        %v3208 = vpack.c.bf16 %v3179, %v3178
        %v3209 = vpack.c.bf16 %v3181, %v3180
        %v3210 = vpack.c.bf16 %v3183, %v3182
        %v3211 = vpack.c.bf16 %v3185, %v3184
        %v3212 = vpack.c.bf16 %v3187, %v3186
        %v3213 = vpack.c.bf16 %v3189, %v3188
        %v3214 = vpack.c.bf16 %v3191, %v3190
        %v3215 = vpack.c.bf16 %v3193, %v3192
        %v3216 = vpack.c.bf16 %v3195, %v3194
        %v3217 = vpack.c.bf16 %v3197, %v3196
        %v3218 = vpack.c.bf16 %v3199, %v3198
        %v3219 = vpack.c.bf16 %v3201, %v3200
        %v3220 = vpack.c.bf16 %v3203, %v3202
        %v3221 = vpack.c.bf16 %v3205, %v3204
        %vm3222 = vcmask 519168
        %3223 = vst.msk [vmem:[#allocation3] sm:$0xf] %vm3222, 0
        %3224 = vst.msk [vmem:[#allocation3 + $0x4] sm:$0xf] %vm3222, 0
        %vm3225 = vcmask 516096
        %3226 = vst.msk [vmem:[#allocation3 + $0x8] sm:$0x1] %vm3225, 0
        %3227 = vst.msk [vmem:[#allocation3 + $0xc] sm:$0xf] %vm3222, 0
        %3228 = vst.msk [vmem:[#allocation3 + $0x10] sm:$0xf] %vm3222, 0
        %3229 = vst.msk [vmem:[#allocation3 + $0x14] sm:$0x1] %vm3225, 0
        %3230 = vst.msk [vmem:[#allocation3 + $0x18] sm:$0xf] %vm3222, 0
        %3231 = vst.msk [vmem:[#allocation3 + $0x1c] sm:$0xf] %vm3222, 0
        %3232 = vst.msk [vmem:[#allocation3 + $0x20] sm:$0x1] %vm3225, 0
        %3233 = vst.msk [vmem:[#allocation3 + $0x24] sm:$0xf] %vm3222, 0
        %3234 = vst.msk [vmem:[#allocation3 + $0x28] sm:$0xf] %vm3222, 0
        %3235 = vst.msk [vmem:[#allocation3 + $0x2c] sm:$0x1] %vm3225, 0
        %3236 = vst.msk [vmem:[#allocation3 + $0x30] sm:$0xf] %vm3222, 0
        %3237 = vst.msk [vmem:[#allocation3 + $0x34] sm:$0xf] %vm3222, 0
        %3238 = vst.msk [vmem:[#allocation3 + $0x38] sm:$0x1] %vm3225, 0
        %3239 = vst.msk [vmem:[#allocation3 + $0x3c] sm:$0xf] %vm3222, 0
        %3240 = vst.msk [vmem:[#allocation3 + $0x40] sm:$0xf] %vm3222, 0
        %3241 = vst.msk [vmem:[#allocation3 + $0x44] sm:$0x1] %vm3225, 0
        %3242 = vst.msk [vmem:[#allocation3 + $0x48] sm:$0xf] %vm3222, 0
        %3243 = vst.msk [vmem:[#allocation3 + $0x4c] sm:$0xf] %vm3222, 0
        %3244 = vst.msk [vmem:[#allocation3 + $0x50] sm:$0x1] %vm3225, 0
        %3245 = vst.msk [vmem:[#allocation3 + $0x54] sm:$0xf] %vm3222, 0
        %3246 = vst.msk [vmem:[#allocation3 + $0x58] sm:$0xf] %vm3222, 0
        %3247 = vst.msk [vmem:[#allocation3 + $0x5c] sm:$0x1] %vm3225, 0
        %3248 = vst.msk [vmem:[#allocation3 + $0x60] sm:$0xf] %vm3222, 0
        %3249 = vst.msk [vmem:[#allocation3 + $0x64] sm:$0xf] %vm3222, 0
        %3250 = vst.msk [vmem:[#allocation3 + $0x68] sm:$0x1] %vm3225, 0
        %3251 = vst.msk [vmem:[#allocation3 + $0x6c] sm:$0xf] %vm3222, 0
        %3252 = vst.msk [vmem:[#allocation3 + $0x70] sm:$0xf] %vm3222, 0
        %3253 = vst.msk [vmem:[#allocation3 + $0x74] sm:$0x1] %vm3225, 0
        %3254 = vst.msk [vmem:[#allocation3 + $0x78] sm:$0xf] %vm3222, 0
        %3255 = vst.msk [vmem:[#allocation3 + $0x7c] sm:$0xf] %vm3222, 0
        %3256 = vst.msk [vmem:[#allocation3 + $0x80] sm:$0x1] %vm3225, 0
        %3257 = vst.msk [vmem:[#allocation3 + $0x84] sm:$0xf] %vm3222, 0
        %3258 = vst.msk [vmem:[#allocation3 + $0x88] sm:$0xf] %vm3222, 0
        %3259 = vst.msk [vmem:[#allocation3 + $0x8c] sm:$0x1] %vm3225, 0
        %3260 = vst.msk [vmem:[#allocation3 + $0x90] sm:$0xf] %vm3222, 0
        %3261 = vst.msk [vmem:[#allocation3 + $0x94] sm:$0xf] %vm3222, 0
        %3262 = vst.msk [vmem:[#allocation3 + $0x98] sm:$0x1] %vm3225, 0
        %3263 = vst.msk [vmem:[#allocation3 + $0x9c] sm:$0xf] %vm3222, 0
        %3264 = vst.msk [vmem:[#allocation3 + $0xa0] sm:$0xf] %vm3222, 0
        %3265 = vst.msk [vmem:[#allocation3 + $0xa4] sm:$0x1] %vm3225, 0
        %3266 = vst.msk [vmem:[#allocation3 + $0xa8] sm:$0xf] %vm3222, 0
        %3267 = vst.msk [vmem:[#allocation3 + $0xac] sm:$0xf] %vm3222, 0
        %3268 = vst.msk [vmem:[#allocation3 + $0xb0] sm:$0x1] %vm3225, 0
        %3269 = vst.msk [vmem:[#allocation3 + $0xb4] sm:$0xf] %vm3222, 0
        %3270 = vst.msk [vmem:[#allocation3 + $0xb8] sm:$0xf] %vm3222, 0
        %3271 = vst.msk [vmem:[#allocation3 + $0xbc] sm:$0x1] %vm3225, 0
        %3272 = vst.msk [vmem:[#allocation3 + $0xc0] sm:$0xf] %vm3222, 0
        %3273 = vst.msk [vmem:[#allocation3 + $0xc4] sm:$0xf] %vm3222, 0
        %3274 = vst.msk [vmem:[#allocation3 + $0xc8] sm:$0x1] %vm3225, 0
        %3275 = vst.msk [vmem:[#allocation3 + $0xcc] sm:$0xf] %vm3222, 0
        %3276 = vst.msk [vmem:[#allocation3 + $0xd0] sm:$0xf] %vm3222, 0
        %3277 = vst.msk [vmem:[#allocation3 + $0xd4] sm:$0x1] %vm3225, 0
        %v3294 = vunpack.c.l.b16 %v3206
        %v3295 = vunpack.c.h.b16 %v3206
        %v3296 = vunpack.c.l.b16 %v3207
        %v3297 = vunpack.c.h.b16 %v3207
        %v3298 = vunpack.c.l.b16 %v3208
        %v3299 = vunpack.c.h.b16 %v3208
        %v3300 = vunpack.c.l.b16 %v3209
        %v3301 = vunpack.c.h.b16 %v3209
        %v3302 = vunpack.c.l.b16 %v3210
        %v3303 = vunpack.c.h.b16 %v3210
        %v3304 = vunpack.c.l.b16 %v3211
        %v3305 = vunpack.c.h.b16 %v3211
        %v3306 = vunpack.c.l.b16 %v3212
        %v3307 = vunpack.c.h.b16 %v3212
        %v3308 = vunpack.c.l.b16 %v3213
        %v3309 = vunpack.c.h.b16 %v3213
        %v3310 = vunpack.c.l.b16 %v3214
        %v3311 = vunpack.c.h.b16 %v3214
        %v3312 = vunpack.c.l.b16 %v3215
        %v3313 = vunpack.c.h.b16 %v3215
        %v3314 = vunpack.c.l.b16 %v3216
        %v3315 = vunpack.c.h.b16 %v3216
        %v3316 = vunpack.c.l.b16 %v3217
        %v3317 = vunpack.c.h.b16 %v3217
        %v3318 = vunpack.c.l.b16 %v3218
        %v3319 = vunpack.c.h.b16 %v3218
        %v3320 = vunpack.c.l.b16 %v3219
        %v3321 = vunpack.c.h.b16 %v3219
        %v3322 = vunpack.c.l.b16 %v3220
        %v3323 = vunpack.c.h.b16 %v3220
        %v3324 = vunpack.c.l.b16 %v3221
        %v3325 = vunpack.c.h.b16 %v3221
        %v3326 = vpack.c.b16 %v3294, %v3294
        %v3327 = vpack.c.b16 %v3295, %v3295
        %v3328 = vpack.c.b16 %v3296, %v3296
        %v3329 = vpack.c.b16 %v3297, %v3297
        %v3330 = vpack.c.b16 %v3298, %v3298
        %v3331 = vpack.c.b16 %v3299, %v3299
        %v3332 = vpack.c.b16 %v3300, %v3300
        %v3333 = vpack.c.b16 %v3301, %v3301
        %v3334 = vpack.c.b16 %v3302, %v3302
        %v3335 = vpack.c.b16 %v3303, %v3303
        %v3336 = vpack.c.b16 %v3304, %v3304
        %v3337 = vpack.c.b16 %v3305, %v3305
        %v3338 = vpack.c.b16 %v3306, %v3306
        %v3339 = vpack.c.b16 %v3307, %v3307
        %v3340 = vpack.c.b16 %v3308, %v3308
        %v3341 = vpack.c.b16 %v3309, %v3309
        %v3342 = vpack.c.b16 %v3310, %v3310
        %v3343 = vpack.c.b16 %v3311, %v3311
        %v3344 = vpack.c.b16 %v3312, %v3312
        %v3345 = vpack.c.b16 %v3313, %v3313
        %v3346 = vpack.c.b16 %v3314, %v3314
        %v3347 = vpack.c.b16 %v3315, %v3315
        %v3348 = vpack.c.b16 %v3316, %v3316
        %v3349 = vpack.c.b16 %v3317, %v3317
        %v3350 = vpack.c.b16 %v3318, %v3318
        %v3351 = vpack.c.b16 %v3319, %v3319
        %v3352 = vpack.c.b16 %v3320, %v3320
        %v3353 = vpack.c.b16 %v3321, %v3321
        %v3354 = vpack.c.b16 %v3322, %v3322
        %v3355 = vpack.c.b16 %v3323, %v3323
        %v3356 = vpack.c.b16 %v3324, %v3324
        %v3357 = vpack.c.b16 %v3325, %v3325
        %v3359 = vshrl.u32 %v3326, 16
        %v3361 = vrot.slane %v3359, 7
        %v3362 = vshll.u32 %v3326, 16
        %v3364 = vor.u32 %v3361, %v3362
        %v3365 = vrot.slane %v3361, 4
        %v3367 = vshrl.u32 %v3327, 16
        %v3369 = vrot.slane %v3367, 7
        %v3370 = vshll.u32 %v3327, 16
        %v3372 = vor.u32 %v3369, %v3370
        %v3373 = vsel %vm730, %v3365, %v3372
        %v3374 = vrot.slane %v3369, 4
        %v3376 = vshrl.u32 %v3328, 16
        %v3378 = vrot.slane %v3376, 7
        %v3379 = vshll.u32 %v3328, 16
        %v3381 = vor.u32 %v3378, %v3379
        %v3382 = vrot.slane %v3378, 4
        %v3384 = vshrl.u32 %v3329, 16
        %v3386 = vrot.slane %v3384, 7
        %v3387 = vshll.u32 %v3329, 16
        %v3389 = vor.u32 %v3386, %v3387
        %v3390 = vsel %vm730, %v3382, %v3389
        %v3391 = vrot.slane %v3386, 4
        %v3393 = vshrl.u32 %v3330, 16
        %v3395 = vrot.slane %v3393, 7
        %v3396 = vshll.u32 %v3330, 16
        %v3398 = vor.u32 %v3395, %v3396
        %v3399 = vrot.slane %v3395, 4
        %v3401 = vshrl.u32 %v3331, 16
        %v3403 = vrot.slane %v3401, 7
        %v3404 = vshll.u32 %v3331, 16
        %v3406 = vor.u32 %v3403, %v3404
        %v3407 = vsel %vm730, %v3399, %v3406
        %v3408 = vrot.slane %v3403, 4
        %v3410 = vshrl.u32 %v3332, 16
        %v3412 = vrot.slane %v3410, 7
        %v3413 = vshll.u32 %v3332, 16
        %v3415 = vor.u32 %v3412, %v3413
        %v3416 = vrot.slane %v3412, 4
        %v3418 = vshrl.u32 %v3333, 16
        %v3420 = vrot.slane %v3418, 7
        %v3421 = vshll.u32 %v3333, 16
        %v3423 = vor.u32 %v3420, %v3421
        %v3424 = vsel %vm730, %v3416, %v3423
        %v3425 = vrot.slane %v3420, 4
        %v3427 = vshrl.u32 %v3334, 16
        %v3429 = vrot.slane %v3427, 7
        %v3430 = vshll.u32 %v3334, 16
        %v3432 = vor.u32 %v3429, %v3430
        %v3433 = vrot.slane %v3429, 4
        %v3435 = vshrl.u32 %v3335, 16
        %v3437 = vrot.slane %v3435, 7
        %v3438 = vshll.u32 %v3335, 16
        %v3440 = vor.u32 %v3437, %v3438
        %v3441 = vsel %vm730, %v3433, %v3440
        %v3442 = vrot.slane %v3437, 4
        %v3444 = vshrl.u32 %v3336, 16
        %v3446 = vrot.slane %v3444, 7
        %v3447 = vshll.u32 %v3336, 16
        %v3449 = vor.u32 %v3446, %v3447
        %v3450 = vrot.slane %v3446, 4
        %v3452 = vshrl.u32 %v3337, 16
        %v3454 = vrot.slane %v3452, 7
        %v3455 = vshll.u32 %v3337, 16
        %v3457 = vor.u32 %v3454, %v3455
        %v3458 = vsel %vm730, %v3450, %v3457
        %v3459 = vrot.slane %v3454, 4
        %v3461 = vshrl.u32 %v3338, 16
        %v3463 = vrot.slane %v3461, 7
        %v3464 = vshll.u32 %v3338, 16
        %v3466 = vor.u32 %v3463, %v3464
        %v3467 = vrot.slane %v3463, 4
        %v3469 = vshrl.u32 %v3339, 16
        %v3471 = vrot.slane %v3469, 7
        %v3472 = vshll.u32 %v3339, 16
        %v3474 = vor.u32 %v3471, %v3472
        %v3475 = vsel %vm730, %v3467, %v3474
        %v3476 = vrot.slane %v3471, 4
        %v3478 = vshrl.u32 %v3340, 16
        %v3480 = vrot.slane %v3478, 7
        %v3481 = vshll.u32 %v3340, 16
        %v3483 = vor.u32 %v3480, %v3481
        %v3484 = vrot.slane %v3480, 4
        %v3486 = vshrl.u32 %v3341, 16
        %v3488 = vrot.slane %v3486, 7
        %v3489 = vshll.u32 %v3341, 16
        %v3491 = vor.u32 %v3488, %v3489
        %v3492 = vsel %vm730, %v3484, %v3491
        %v3493 = vrot.slane %v3488, 4
        %v3495 = vshrl.u32 %v3342, 16
        %v3497 = vrot.slane %v3495, 7
        %v3498 = vshll.u32 %v3342, 16
        %v3500 = vor.u32 %v3497, %v3498
        %v3501 = vrot.slane %v3497, 4
        %v3503 = vshrl.u32 %v3343, 16
        %v3505 = vrot.slane %v3503, 7
        %v3506 = vshll.u32 %v3343, 16
        %v3508 = vor.u32 %v3505, %v3506
        %v3509 = vsel %vm730, %v3501, %v3508
        %v3510 = vrot.slane %v3505, 4
        %v3512 = vshrl.u32 %v3344, 16
        %v3514 = vrot.slane %v3512, 7
        %v3515 = vshll.u32 %v3344, 16
        %v3517 = vor.u32 %v3514, %v3515
        %v3518 = vrot.slane %v3514, 4
        %v3520 = vshrl.u32 %v3345, 16
        %v3522 = vrot.slane %v3520, 7
        %v3523 = vshll.u32 %v3345, 16
        %v3525 = vor.u32 %v3522, %v3523
        %v3526 = vsel %vm730, %v3518, %v3525
        %v3527 = vrot.slane %v3522, 4
        %v3529 = vshrl.u32 %v3346, 16
        %v3531 = vrot.slane %v3529, 7
        %v3532 = vshll.u32 %v3346, 16
        %v3534 = vor.u32 %v3531, %v3532
        %v3535 = vrot.slane %v3531, 4
        %v3537 = vshrl.u32 %v3347, 16
        %v3539 = vrot.slane %v3537, 7
        %v3540 = vshll.u32 %v3347, 16
        %v3542 = vor.u32 %v3539, %v3540
        %v3543 = vsel %vm730, %v3535, %v3542
        %v3544 = vrot.slane %v3539, 4
        %v3546 = vshrl.u32 %v3348, 16
        %v3548 = vrot.slane %v3546, 7
        %v3549 = vshll.u32 %v3348, 16
        %v3551 = vor.u32 %v3548, %v3549
        %v3552 = vrot.slane %v3548, 4
        %v3554 = vshrl.u32 %v3349, 16
        %v3556 = vrot.slane %v3554, 7
        %v3557 = vshll.u32 %v3349, 16
        %v3559 = vor.u32 %v3556, %v3557
        %v3560 = vsel %vm730, %v3552, %v3559
        %v3561 = vrot.slane %v3556, 4
        %v3563 = vshrl.u32 %v3350, 16
        %v3565 = vrot.slane %v3563, 7
        %v3566 = vshll.u32 %v3350, 16
        %v3568 = vor.u32 %v3565, %v3566
        %v3569 = vrot.slane %v3565, 4
        %v3571 = vshrl.u32 %v3351, 16
        %v3573 = vrot.slane %v3571, 7
        %v3574 = vshll.u32 %v3351, 16
        %v3576 = vor.u32 %v3573, %v3574
        %v3577 = vsel %vm730, %v3569, %v3576
        %v3578 = vrot.slane %v3573, 4
        %v3580 = vshrl.u32 %v3352, 16
        %v3582 = vrot.slane %v3580, 7
        %v3583 = vshll.u32 %v3352, 16
        %v3585 = vor.u32 %v3582, %v3583
        %v3586 = vrot.slane %v3582, 4
        %v3588 = vshrl.u32 %v3353, 16
        %v3590 = vrot.slane %v3588, 7
        %v3591 = vshll.u32 %v3353, 16
        %v3593 = vor.u32 %v3590, %v3591
        %v3594 = vsel %vm730, %v3586, %v3593
        %v3595 = vrot.slane %v3590, 4
        %v3597 = vshrl.u32 %v3354, 16
        %v3599 = vrot.slane %v3597, 7
        %v3600 = vshll.u32 %v3354, 16
        %v3602 = vor.u32 %v3599, %v3600
        %v3603 = vrot.slane %v3599, 4
        %v3605 = vshrl.u32 %v3355, 16
        %v3607 = vrot.slane %v3605, 7
        %v3608 = vshll.u32 %v3355, 16
        %v3610 = vor.u32 %v3607, %v3608
        %v3611 = vsel %vm730, %v3603, %v3610
        %v3612 = vrot.slane %v3607, 4
        %v3614 = vshrl.u32 %v3356, 16
        %v3616 = vrot.slane %v3614, 7
        %v3617 = vshll.u32 %v3356, 16
        %v3619 = vor.u32 %v3616, %v3617
        %v3620 = vrot.slane %v3616, 4
        %v3622 = vshrl.u32 %v3357, 16
        %v3624 = vrot.slane %v3622, 7
        %v3625 = vshll.u32 %v3357, 16
        %v3627 = vor.u32 %v3624, %v3625
        %v3628 = vsel %vm730, %v3620, %v3627
        %v3629 = vrot.slane %v3624, 4
        %s3678 = scalar_lea.vmem [#allocation3], 12
        %vm3679 = vcmask 519168
        %vm3680 = vmand %vm3679, %vm1053
        %v3681 = vld [vmem:[%s3678] sm:$0xf]
        %v3682 = vsel %vm3680, %v3364, %v3681
        %3683 = vst [vmem:[%s3678] sm:$0xf] %v3682
        %3684 = vst.msk [vmem:[%s3678 + $0x4] sm:$0xf] %vm3222, %v3373
        %vm3685 = vcmask 516096
        %vm3686 = vmand %vm3685, %vm728
        %v3687 = vld [vmem:[%s3678 + $0x8] sm:$0x1]
        %v3688 = vsel %vm3686, %v3374, %v3687
        %3689 = vst [vmem:[%s3678 + $0x8] sm:$0x1] %v3688
        %v3690 = vld [vmem:[%s3678 + $0xc] sm:$0xf]
        %v3691 = vsel %vm3680, %v3381, %v3690
        %3692 = vst [vmem:[%s3678 + $0xc] sm:$0xf] %v3691
        %3693 = vst.msk [vmem:[%s3678 + $0x10] sm:$0xf] %vm3222, %v3390
        %v3694 = vld [vmem:[%s3678 + $0x14] sm:$0x1]
        %v3695 = vsel %vm3686, %v3391, %v3694
        %3696 = vst [vmem:[%s3678 + $0x14] sm:$0x1] %v3695
        %v3697 = vld [vmem:[%s3678 + $0x18] sm:$0xf]
        %v3698 = vsel %vm3680, %v3398, %v3697
        %3699 = vst [vmem:[%s3678 + $0x18] sm:$0xf] %v3698
        %3700 = vst.msk [vmem:[%s3678 + $0x1c] sm:$0xf] %vm3222, %v3407
        %v3701 = vld [vmem:[%s3678 + $0x20] sm:$0x1]
        %v3702 = vsel %vm3686, %v3408, %v3701
        %3703 = vst [vmem:[%s3678 + $0x20] sm:$0x1] %v3702
        %v3704 = vld [vmem:[%s3678 + $0x24] sm:$0xf]
        %v3705 = vsel %vm3680, %v3415, %v3704
        %3706 = vst [vmem:[%s3678 + $0x24] sm:$0xf] %v3705
        %3707 = vst.msk [vmem:[%s3678 + $0x28] sm:$0xf] %vm3222, %v3424
        %v3708 = vld [vmem:[%s3678 + $0x2c] sm:$0x1]
        %v3709 = vsel %vm3686, %v3425, %v3708
        %3710 = vst [vmem:[%s3678 + $0x2c] sm:$0x1] %v3709
        %v3711 = vld [vmem:[%s3678 + $0x30] sm:$0xf]
        %v3712 = vsel %vm3680, %v3432, %v3711
        %3713 = vst [vmem:[%s3678 + $0x30] sm:$0xf] %v3712
        %3714 = vst.msk [vmem:[%s3678 + $0x34] sm:$0xf] %vm3222, %v3441
        %v3715 = vld [vmem:[%s3678 + $0x38] sm:$0x1]
        %v3716 = vsel %vm3686, %v3442, %v3715
        %3717 = vst [vmem:[%s3678 + $0x38] sm:$0x1] %v3716
        %v3718 = vld [vmem:[%s3678 + $0x3c] sm:$0xf]
        %v3719 = vsel %vm3680, %v3449, %v3718
        %3720 = vst [vmem:[%s3678 + $0x3c] sm:$0xf] %v3719
        %3721 = vst.msk [vmem:[%s3678 + $0x40] sm:$0xf] %vm3222, %v3458
        %v3722 = vld [vmem:[%s3678 + $0x44] sm:$0x1]
        %v3723 = vsel %vm3686, %v3459, %v3722
        %3724 = vst [vmem:[%s3678 + $0x44] sm:$0x1] %v3723
        %v3725 = vld [vmem:[%s3678 + $0x48] sm:$0xf]
        %v3726 = vsel %vm3680, %v3466, %v3725
        %3727 = vst [vmem:[%s3678 + $0x48] sm:$0xf] %v3726
        %3728 = vst.msk [vmem:[%s3678 + $0x4c] sm:$0xf] %vm3222, %v3475
        %v3729 = vld [vmem:[%s3678 + $0x50] sm:$0x1]
        %v3730 = vsel %vm3686, %v3476, %v3729
        %3731 = vst [vmem:[%s3678 + $0x50] sm:$0x1] %v3730
        %v3732 = vld [vmem:[%s3678 + $0x54] sm:$0xf]
        %v3733 = vsel %vm3680, %v3483, %v3732
        %3734 = vst [vmem:[%s3678 + $0x54] sm:$0xf] %v3733
        %3735 = vst.msk [vmem:[%s3678 + $0x58] sm:$0xf] %vm3222, %v3492
        %v3736 = vld [vmem:[%s3678 + $0x5c] sm:$0x1]
        %v3737 = vsel %vm3686, %v3493, %v3736
        %3738 = vst [vmem:[%s3678 + $0x5c] sm:$0x1] %v3737
        %v3739 = vld [vmem:[%s3678 + $0x60] sm:$0xf]
        %v3740 = vsel %vm3680, %v3500, %v3739
        %3741 = vst [vmem:[%s3678 + $0x60] sm:$0xf] %v3740
        %3742 = vst.msk [vmem:[%s3678 + $0x64] sm:$0xf] %vm3222, %v3509
        %v3743 = vld [vmem:[%s3678 + $0x68] sm:$0x1]
        %v3744 = vsel %vm3686, %v3510, %v3743
        %3745 = vst [vmem:[%s3678 + $0x68] sm:$0x1] %v3744
        %v3746 = vld [vmem:[%s3678 + $0x6c] sm:$0xf]
        %v3747 = vsel %vm3680, %v3517, %v3746
        %3748 = vst [vmem:[%s3678 + $0x6c] sm:$0xf] %v3747
        %3749 = vst.msk [vmem:[%s3678 + $0x70] sm:$0xf] %vm3222, %v3526
        %v3750 = vld [vmem:[%s3678 + $0x74] sm:$0x1]
        %v3751 = vsel %vm3686, %v3527, %v3750
        %3752 = vst [vmem:[%s3678 + $0x74] sm:$0x1] %v3751
        %v3753 = vld [vmem:[%s3678 + $0x78] sm:$0xf]
        %v3754 = vsel %vm3680, %v3534, %v3753
        %3755 = vst [vmem:[%s3678 + $0x78] sm:$0xf] %v3754
        %3756 = vst.msk [vmem:[%s3678 + $0x7c] sm:$0xf] %vm3222, %v3543
        %v3757 = vld [vmem:[%s3678 + $0x80] sm:$0x1]
        %v3758 = vsel %vm3686, %v3544, %v3757
        %3759 = vst [vmem:[%s3678 + $0x80] sm:$0x1] %v3758
        %v3760 = vld [vmem:[%s3678 + $0x84] sm:$0xf]
        %v3761 = vsel %vm3680, %v3551, %v3760
        %3762 = vst [vmem:[%s3678 + $0x84] sm:$0xf] %v3761
        %3763 = vst.msk [vmem:[%s3678 + $0x88] sm:$0xf] %vm3222, %v3560
        %v3764 = vld [vmem:[%s3678 + $0x8c] sm:$0x1]
        %v3765 = vsel %vm3686, %v3561, %v3764
        %3766 = vst [vmem:[%s3678 + $0x8c] sm:$0x1] %v3765
        %v3767 = vld [vmem:[%s3678 + $0x90] sm:$0xf]
        %v3768 = vsel %vm3680, %v3568, %v3767
        %3769 = vst [vmem:[%s3678 + $0x90] sm:$0xf] %v3768
        %3770 = vst.msk [vmem:[%s3678 + $0x94] sm:$0xf] %vm3222, %v3577
        %v3771 = vld [vmem:[%s3678 + $0x98] sm:$0x1]
        %v3772 = vsel %vm3686, %v3578, %v3771
        %3773 = vst [vmem:[%s3678 + $0x98] sm:$0x1] %v3772
        %v3774 = vld [vmem:[%s3678 + $0x9c] sm:$0xf]
        %v3775 = vsel %vm3680, %v3585, %v3774
        %3776 = vst [vmem:[%s3678 + $0x9c] sm:$0xf] %v3775
        %3777 = vst.msk [vmem:[%s3678 + $0xa0] sm:$0xf] %vm3222, %v3594
        %v3778 = vld [vmem:[%s3678 + $0xa4] sm:$0x1]
        %v3779 = vsel %vm3686, %v3595, %v3778
        %3780 = vst [vmem:[%s3678 + $0xa4] sm:$0x1] %v3779
        %v3781 = vld [vmem:[%s3678 + $0xa8] sm:$0xf]
        %v3782 = vsel %vm3680, %v3602, %v3781
        %3783 = vst [vmem:[%s3678 + $0xa8] sm:$0xf] %v3782
        %3784 = vst.msk [vmem:[%s3678 + $0xac] sm:$0xf] %vm3222, %v3611
        %v3785 = vld [vmem:[%s3678 + $0xb0] sm:$0x1]
        %v3786 = vsel %vm3686, %v3612, %v3785
        %3787 = vst [vmem:[%s3678 + $0xb0] sm:$0x1] %v3786
        %v3788 = vld [vmem:[%s3678 + $0xb4] sm:$0xf]
        %v3789 = vsel %vm3680, %v3619, %v3788
        %3790 = vst [vmem:[%s3678 + $0xb4] sm:$0xf] %v3789
        %3791 = vst.msk [vmem:[%s3678 + $0xb8] sm:$0xf] %vm3222, %v3628
        %v3792 = vld [vmem:[%s3678 + $0xbc] sm:$0x1]
        %v3793 = vsel %vm3686, %v3629, %v3792
        %3794 = vst [vmem:[%s3678 + $0xbc] sm:$0x1] %v3793
        %v3795 = vld [vmem:[#allocation3] sm:$0xf]
        %v3796 = vld [vmem:[#allocation3 + $0x4] sm:$0xf]
        %v3797 = vld [vmem:[#allocation3 + $0x8] sm:$0x1]
        %v3798 = vld [vmem:[#allocation3 + $0xc] sm:$0xf]
        %v3799 = vld [vmem:[#allocation3 + $0x10] sm:$0xf]
        %v3800 = vld [vmem:[#allocation3 + $0x14] sm:$0x1]
        %v3801 = vld [vmem:[#allocation3 + $0x18] sm:$0xf]
        %v3802 = vld [vmem:[#allocation3 + $0x1c] sm:$0xf]
        %v3803 = vld [vmem:[#allocation3 + $0x20] sm:$0x1]
        %v3804 = vld [vmem:[#allocation3 + $0x24] sm:$0xf]
        %v3805 = vld [vmem:[#allocation3 + $0x28] sm:$0xf]
        %v3806 = vld [vmem:[#allocation3 + $0x2c] sm:$0x1]
        %v3807 = vld [vmem:[#allocation3 + $0x30] sm:$0xf]
        %v3808 = vld [vmem:[#allocation3 + $0x34] sm:$0xf]
        %v3809 = vld [vmem:[#allocation3 + $0x38] sm:$0x1]
        %v3810 = vld [vmem:[#allocation3 + $0x3c] sm:$0xf]
        %v3811 = vld [vmem:[#allocation3 + $0x40] sm:$0xf]
        %v3812 = vld [vmem:[#allocation3 + $0x44] sm:$0x1]
        %v3813 = vld [vmem:[#allocation3 + $0x48] sm:$0xf]
        %v3814 = vld [vmem:[#allocation3 + $0x4c] sm:$0xf]
        %v3815 = vld [vmem:[#allocation3 + $0x50] sm:$0x1]
        %v3816 = vld [vmem:[#allocation3 + $0x54] sm:$0xf]
        %v3817 = vld [vmem:[#allocation3 + $0x58] sm:$0xf]
        %v3818 = vld [vmem:[#allocation3 + $0x5c] sm:$0x1]
        %v3819 = vld [vmem:[#allocation3 + $0x60] sm:$0xf]
        %v3820 = vld [vmem:[#allocation3 + $0x64] sm:$0xf]
        %v3821 = vld [vmem:[#allocation3 + $0x68] sm:$0x1]
        %v3822 = vld [vmem:[#allocation3 + $0x6c] sm:$0xf]
        %v3823 = vld [vmem:[#allocation3 + $0x70] sm:$0xf]
        %v3824 = vld [vmem:[#allocation3 + $0x74] sm:$0x1]
        %v3825 = vld [vmem:[#allocation3 + $0x78] sm:$0xf]
        %v3826 = vld [vmem:[#allocation3 + $0x7c] sm:$0xf]
        %v3827 = vld [vmem:[#allocation3 + $0x80] sm:$0x1]
        %v3828 = vld [vmem:[#allocation3 + $0x84] sm:$0xf]
        %v3829 = vld [vmem:[#allocation3 + $0x88] sm:$0xf]
        %v3830 = vld [vmem:[#allocation3 + $0x8c] sm:$0x1]
        %v3831 = vld [vmem:[#allocation3 + $0x90] sm:$0xf]
        %v3832 = vld [vmem:[#allocation3 + $0x94] sm:$0xf]
        %v3833 = vld [vmem:[#allocation3 + $0x98] sm:$0x1]
        %v3834 = vld [vmem:[#allocation3 + $0x9c] sm:$0xf]
        %v3835 = vld [vmem:[#allocation3 + $0xa0] sm:$0xf]
        %v3836 = vld [vmem:[#allocation3 + $0xa4] sm:$0x1]
        %v3837 = vld [vmem:[#allocation3 + $0xa8] sm:$0xf]
        %v3838 = vld [vmem:[#allocation3 + $0xac] sm:$0xf]
        %v3839 = vld [vmem:[#allocation3 + $0xb0] sm:$0x1]
        %v3840 = vld [vmem:[#allocation3 + $0xb4] sm:$0xf]
        %v3841 = vld [vmem:[#allocation3 + $0xb8] sm:$0xf]
        %v3842 = vld [vmem:[#allocation3 + $0xbc] sm:$0x1]
        %v3843 = vld [vmem:[#allocation3 + $0xc0] sm:$0xf]
        %v3844 = vld [vmem:[#allocation3 + $0xc4] sm:$0xf]
        %v3845 = vld [vmem:[#allocation3 + $0xc8] sm:$0x1]
        %v3846 = vld [vmem:[#allocation3 + $0xcc] sm:$0xf]
        %v3847 = vld [vmem:[#allocation3 + $0xd0] sm:$0xf]
        %v3848 = vld [vmem:[#allocation3 + $0xd4] sm:$0x1]
        %v3849 = vld [vmem:[%s6] sm:$0xf]
        %v3850 = vld [vmem:[%s6 + $0x4] sm:$0xf]
        %v3851 = vld [vmem:[%s6 + $0x8] sm:$0xf]
        %v3852 = vld [vmem:[%s6 + $0xc] sm:$0xf]
        %v3853 = vld [vmem:[%s6 + $0x10] sm:$0xf]
        %v3854 = vld [vmem:[%s6 + $0x14] sm:$0xf]
        %v3855 = vld [vmem:[%s6 + $0x18] sm:$0xf]
        %v3856 = vld [vmem:[%s6 + $0x1c] sm:$0xf]
        %v3857 = vld [vmem:[%s6 + $0x20] sm:$0xf]
        %v3858 = vld [vmem:[%s6 + $0x24] sm:$0xf]
        %v3859 = vld [vmem:[%s6 + $0x28] sm:$0xf]
        %v3860 = vld [vmem:[%s6 + $0x2c] sm:$0xf]
        %v3861 = vld [vmem:[%s6 + $0x30] sm:$0xf]
        %v3862 = vld [vmem:[%s6 + $0x34] sm:$0xf]
        %v3863 = vld [vmem:[%s6 + $0x38] sm:$0xf]
        %v3864 = vld [vmem:[%s6 + $0x3c] sm:$0xf]
        %v3865 = vld [vmem:[%s6 + $0x40] sm:$0xf]
        %v3866 = vld [vmem:[%s6 + $0x44] sm:$0xf]
        %v3867 = vld [vmem:[%s6 + $0x48] sm:$0xf]
        %v3868 = vld [vmem:[%s6 + $0x4c] sm:$0xf]
        %v3869 = vld [vmem:[%s6 + $0x50] sm:$0xf]
        %v3870 = vld [vmem:[%s6 + $0x54] sm:$0xf]
        %v3871 = vld [vmem:[%s6 + $0x58] sm:$0xf]
        %v3872 = vld [vmem:[%s6 + $0x5c] sm:$0xf]
        %v3873 = vld [vmem:[%s6 + $0x60] sm:$0xf]
        %v3874 = vld [vmem:[%s6 + $0x64] sm:$0xf]
        %v3875 = vld [vmem:[%s6 + $0x68] sm:$0xf]
        %v3876 = vld [vmem:[%s6 + $0x6c] sm:$0xf]
        %v3877 = vld [vmem:[%s6 + $0x70] sm:$0xf]
        %v3878 = vld [vmem:[%s6 + $0x74] sm:$0xf]
        %v3879 = vld [vmem:[%s6 + $0x78] sm:$0xf]
        %v3880 = vld [vmem:[%s6 + $0x7c] sm:$0xf]
        %v3881 = vld [vmem:[%s6 + $0x80] sm:$0xf]
        %v3882 = vld [vmem:[%s6 + $0x84] sm:$0xf]
        %v3883 = vld [vmem:[%s6 + $0x88] sm:$0xf]
        %v3884 = vld [vmem:[%s6 + $0x8c] sm:$0xf]
        %v3885 = vld [vmem:[%s6 + $0x90] sm:$0xf]
        %v3886 = vld [vmem:[%s6 + $0x94] sm:$0xf]
        %v3887 = vld [vmem:[%s6 + $0x98] sm:$0xf]
        %v3888 = vld [vmem:[%s6 + $0x9c] sm:$0xf]
        %v3889 = vld [vmem:[%s6 + $0xa0] sm:$0xf]
        %v3890 = vld [vmem:[%s6 + $0xa4] sm:$0xf]
        %v3891 = vld [vmem:[%s6 + $0xa8] sm:$0xf]
        %v3892 = vld [vmem:[%s6 + $0xac] sm:$0xf]
        %v3893 = vld [vmem:[%s6 + $0xb0] sm:$0xf]
        %v3894 = vld [vmem:[%s6 + $0xb4] sm:$0xf]
        %v3895 = vld [vmem:[%s6 + $0xb8] sm:$0xf]
        %v3896 = vld [vmem:[%s6 + $0xbc] sm:$0xf]
        %v3897 = vld [vmem:[%s6 + $0xc0] sm:$0xf]
        %v3898 = vld [vmem:[%s6 + $0xc4] sm:$0xf]
        %v3899 = vld [vmem:[%s6 + $0xc8] sm:$0xf]
        %v3900 = vld [vmem:[%s6 + $0xcc] sm:$0xf]
        %v3901 = vld [vmem:[%s6 + $0xd0] sm:$0xf]
        %v3902 = vld [vmem:[%s6 + $0xd4] sm:$0xf]
        %v3903 = vld [vmem:[%s6 + $0xd8] sm:$0xf]
        %v3904 = vld [vmem:[%s6 + $0xdc] sm:$0xf]
        %v3905 = vld [vmem:[%s6 + $0xe0] sm:$0xf]
        %v3906 = vld [vmem:[%s6 + $0xe4] sm:$0xf]
        %v3907 = vld [vmem:[%s6 + $0xe8] sm:$0xf]
        %v3908 = vld [vmem:[%s6 + $0xec] sm:$0xf]
        %v3909 = vld [vmem:[%s6 + $0xf0] sm:$0xf]
        %v3910 = vld [vmem:[%s6 + $0xf4] sm:$0xf]
        %v3911 = vld [vmem:[%s6 + $0xf8] sm:$0xf]
        %v3912 = vld [vmem:[%s6 + $0xfc] sm:$0xf]
        %v3913 = vld [vmem:[%s6 + $0x100] sm:$0xf]
        %v3914 = vld [vmem:[%s6 + $0x104] sm:$0xf]
        %v3915 = vld [vmem:[%s6 + $0x108] sm:$0xf]
        %v3916 = vld [vmem:[%s6 + $0x10c] sm:$0xf]
        %v3917 = vld [vmem:[%s6 + $0x110] sm:$0xf]
        %v3918 = vld [vmem:[%s6 + $0x114] sm:$0xf]
        %v3919 = vld [vmem:[%s6 + $0x118] sm:$0xf]
        %v3920 = vld [vmem:[%s6 + $0x11c] sm:$0xf]
        %v3922 = vshrl.u32 %v3795, 16
        %v3924 = vrot.slane %v3922, 4
        %v3925 = vshll.u32 %v3795, 16
        %v3927 = vrot.slane %v3925, 5
        %v3928 = vor.u32 %v3924, %v3927
        %v3929 = vrot.slane %v3928, 4
        %v3931 = vshll.u32 %v3796, 16
        %v3933 = vrot.slane %v3931, 5
        %v3934 = vsel %vm1261, %v3929, %v3933
        %v3935 = vshrl.u32 %v3796, 16
        %v3937 = vrot.slane %v3935, 4
        %v3938 = vor.u32 %v3937, %v3933
        %v3939 = vrot.slane %v3938, 4
        %v3941 = vshll.u32 %v3797, 16
        %v3943 = vrot.slane %v3941, 5
        %v3944 = vsel %vm1261, %v3939, %v3943
        %v3946 = vshrl.u32 %v3798, 16
        %v3948 = vrot.slane %v3946, 4
        %v3949 = vshll.u32 %v3798, 16
        %v3951 = vrot.slane %v3949, 5
        %v3952 = vor.u32 %v3948, %v3951
        %v3953 = vrot.slane %v3952, 4
        %v3955 = vshll.u32 %v3799, 16
        %v3957 = vrot.slane %v3955, 5
        %v3958 = vsel %vm1261, %v3953, %v3957
        %v3959 = vshrl.u32 %v3799, 16
        %v3961 = vrot.slane %v3959, 4
        %v3962 = vor.u32 %v3961, %v3957
        %v3963 = vrot.slane %v3962, 4
        %v3965 = vshll.u32 %v3800, 16
        %v3967 = vrot.slane %v3965, 5
        %v3968 = vsel %vm1261, %v3963, %v3967
        %v3970 = vshrl.u32 %v3801, 16
        %v3972 = vrot.slane %v3970, 4
        %v3973 = vshll.u32 %v3801, 16
        %v3975 = vrot.slane %v3973, 5
        %v3976 = vor.u32 %v3972, %v3975
        %v3977 = vrot.slane %v3976, 4
        %v3979 = vshll.u32 %v3802, 16
        %v3981 = vrot.slane %v3979, 5
        %v3982 = vsel %vm1261, %v3977, %v3981
        %v3983 = vshrl.u32 %v3802, 16
        %v3985 = vrot.slane %v3983, 4
        %v3986 = vor.u32 %v3985, %v3981
        %v3987 = vrot.slane %v3986, 4
        %v3989 = vshll.u32 %v3803, 16
        %v3991 = vrot.slane %v3989, 5
        %v3992 = vsel %vm1261, %v3987, %v3991
        %v3994 = vshrl.u32 %v3804, 16
        %v3996 = vrot.slane %v3994, 4
        %v3997 = vshll.u32 %v3804, 16
        %v3999 = vrot.slane %v3997, 5
        %v4000 = vor.u32 %v3996, %v3999
        %v4001 = vrot.slane %v4000, 4
        %v4003 = vshll.u32 %v3805, 16
        %v4005 = vrot.slane %v4003, 5
        %v4006 = vsel %vm1261, %v4001, %v4005
        %v4007 = vshrl.u32 %v3805, 16
        %v4009 = vrot.slane %v4007, 4
        %v4010 = vor.u32 %v4009, %v4005
        %v4011 = vrot.slane %v4010, 4
        %v4013 = vshll.u32 %v3806, 16
        %v4015 = vrot.slane %v4013, 5
        %v4016 = vsel %vm1261, %v4011, %v4015
        %v4018 = vshrl.u32 %v3807, 16
        %v4020 = vrot.slane %v4018, 4
        %v4021 = vshll.u32 %v3807, 16
        %v4023 = vrot.slane %v4021, 5
        %v4024 = vor.u32 %v4020, %v4023
        %v4025 = vrot.slane %v4024, 4
        %v4027 = vshll.u32 %v3808, 16
        %v4029 = vrot.slane %v4027, 5
        %v4030 = vsel %vm1261, %v4025, %v4029
        %v4031 = vshrl.u32 %v3808, 16
        %v4033 = vrot.slane %v4031, 4
        %v4034 = vor.u32 %v4033, %v4029
        %v4035 = vrot.slane %v4034, 4
        %v4037 = vshll.u32 %v3809, 16
        %v4039 = vrot.slane %v4037, 5
        %v4040 = vsel %vm1261, %v4035, %v4039
        %v4042 = vshrl.u32 %v3810, 16
        %v4044 = vrot.slane %v4042, 4
        %v4045 = vshll.u32 %v3810, 16
        %v4047 = vrot.slane %v4045, 5
        %v4048 = vor.u32 %v4044, %v4047
        %v4049 = vrot.slane %v4048, 4
        %v4051 = vshll.u32 %v3811, 16
        %v4053 = vrot.slane %v4051, 5
        %v4054 = vsel %vm1261, %v4049, %v4053
        %v4055 = vshrl.u32 %v3811, 16
        %v4057 = vrot.slane %v4055, 4
        %v4058 = vor.u32 %v4057, %v4053
        %v4059 = vrot.slane %v4058, 4
        %v4061 = vshll.u32 %v3812, 16
        %v4063 = vrot.slane %v4061, 5
        %v4064 = vsel %vm1261, %v4059, %v4063
        %v4066 = vshrl.u32 %v3813, 16
        %v4068 = vrot.slane %v4066, 4
        %v4069 = vshll.u32 %v3813, 16
        %v4071 = vrot.slane %v4069, 5
        %v4072 = vor.u32 %v4068, %v4071
        %v4073 = vrot.slane %v4072, 4
        %v4075 = vshll.u32 %v3814, 16
        %v4077 = vrot.slane %v4075, 5
        %v4078 = vsel %vm1261, %v4073, %v4077
        %v4079 = vshrl.u32 %v3814, 16
        %v4081 = vrot.slane %v4079, 4
        %v4082 = vor.u32 %v4081, %v4077
        %v4083 = vrot.slane %v4082, 4
        %v4085 = vshll.u32 %v3815, 16
        %v4087 = vrot.slane %v4085, 5
        %v4088 = vsel %vm1261, %v4083, %v4087
        %v4090 = vshrl.u32 %v3816, 16
        %v4092 = vrot.slane %v4090, 4
        %v4093 = vshll.u32 %v3816, 16
        %v4095 = vrot.slane %v4093, 5
        %v4096 = vor.u32 %v4092, %v4095
        %v4097 = vrot.slane %v4096, 4
        %v4099 = vshll.u32 %v3817, 16
        %v4101 = vrot.slane %v4099, 5
        %v4102 = vsel %vm1261, %v4097, %v4101
        %v4103 = vshrl.u32 %v3817, 16
        %v4105 = vrot.slane %v4103, 4
        %v4106 = vor.u32 %v4105, %v4101
        %v4107 = vrot.slane %v4106, 4
        %v4109 = vshll.u32 %v3818, 16
        %v4111 = vrot.slane %v4109, 5
        %v4112 = vsel %vm1261, %v4107, %v4111
        %v4114 = vshrl.u32 %v3819, 16
        %v4116 = vrot.slane %v4114, 4
        %v4117 = vshll.u32 %v3819, 16
        %v4119 = vrot.slane %v4117, 5
        %v4120 = vor.u32 %v4116, %v4119
        %v4121 = vrot.slane %v4120, 4
        %v4123 = vshll.u32 %v3820, 16
        %v4125 = vrot.slane %v4123, 5
        %v4126 = vsel %vm1261, %v4121, %v4125
        %v4127 = vshrl.u32 %v3820, 16
        %v4129 = vrot.slane %v4127, 4
        %v4130 = vor.u32 %v4129, %v4125
        %v4131 = vrot.slane %v4130, 4
        %v4133 = vshll.u32 %v3821, 16
        %v4135 = vrot.slane %v4133, 5
        %v4136 = vsel %vm1261, %v4131, %v4135
        %v4138 = vshrl.u32 %v3822, 16
        %v4140 = vrot.slane %v4138, 4
        %v4141 = vshll.u32 %v3822, 16
        %v4143 = vrot.slane %v4141, 5
        %v4144 = vor.u32 %v4140, %v4143
        %v4145 = vrot.slane %v4144, 4
        %v4147 = vshll.u32 %v3823, 16
        %v4149 = vrot.slane %v4147, 5
        %v4150 = vsel %vm1261, %v4145, %v4149
        %v4151 = vshrl.u32 %v3823, 16
        %v4153 = vrot.slane %v4151, 4
        %v4154 = vor.u32 %v4153, %v4149
        %v4155 = vrot.slane %v4154, 4
        %v4157 = vshll.u32 %v3824, 16
        %v4159 = vrot.slane %v4157, 5
        %v4160 = vsel %vm1261, %v4155, %v4159
        %v4162 = vshrl.u32 %v3825, 16
        %v4164 = vrot.slane %v4162, 4
        %v4165 = vshll.u32 %v3825, 16
        %v4167 = vrot.slane %v4165, 5
        %v4168 = vor.u32 %v4164, %v4167
        %v4169 = vrot.slane %v4168, 4
        %v4171 = vshll.u32 %v3826, 16
        %v4173 = vrot.slane %v4171, 5
        %v4174 = vsel %vm1261, %v4169, %v4173
        %v4175 = vshrl.u32 %v3826, 16
        %v4177 = vrot.slane %v4175, 4
        %v4178 = vor.u32 %v4177, %v4173
        %v4179 = vrot.slane %v4178, 4
        %v4181 = vshll.u32 %v3827, 16
        %v4183 = vrot.slane %v4181, 5
        %v4184 = vsel %vm1261, %v4179, %v4183
        %v4186 = vshrl.u32 %v3828, 16
        %v4188 = vrot.slane %v4186, 4
        %v4189 = vshll.u32 %v3828, 16
        %v4191 = vrot.slane %v4189, 5
        %v4192 = vor.u32 %v4188, %v4191
        %v4193 = vrot.slane %v4192, 4
        %v4195 = vshll.u32 %v3829, 16
        %v4197 = vrot.slane %v4195, 5
        %v4198 = vsel %vm1261, %v4193, %v4197
        %v4199 = vshrl.u32 %v3829, 16
        %v4201 = vrot.slane %v4199, 4
        %v4202 = vor.u32 %v4201, %v4197
        %v4203 = vrot.slane %v4202, 4
        %v4205 = vshll.u32 %v3830, 16
        %v4207 = vrot.slane %v4205, 5
        %v4208 = vsel %vm1261, %v4203, %v4207
        %v4210 = vshrl.u32 %v3831, 16
        %v4212 = vrot.slane %v4210, 4
        %v4213 = vshll.u32 %v3831, 16
        %v4215 = vrot.slane %v4213, 5
        %v4216 = vor.u32 %v4212, %v4215
        %v4217 = vrot.slane %v4216, 4
        %v4219 = vshll.u32 %v3832, 16
        %v4221 = vrot.slane %v4219, 5
        %v4222 = vsel %vm1261, %v4217, %v4221
        %v4223 = vshrl.u32 %v3832, 16
        %v4225 = vrot.slane %v4223, 4
        %v4226 = vor.u32 %v4225, %v4221
        %v4227 = vrot.slane %v4226, 4
        %v4229 = vshll.u32 %v3833, 16
        %v4231 = vrot.slane %v4229, 5
        %v4232 = vsel %vm1261, %v4227, %v4231
        %v4234 = vshrl.u32 %v3834, 16
        %v4236 = vrot.slane %v4234, 4
        %v4237 = vshll.u32 %v3834, 16
        %v4239 = vrot.slane %v4237, 5
        %v4240 = vor.u32 %v4236, %v4239
        %v4241 = vrot.slane %v4240, 4
        %v4243 = vshll.u32 %v3835, 16
        %v4245 = vrot.slane %v4243, 5
        %v4246 = vsel %vm1261, %v4241, %v4245
        %v4247 = vshrl.u32 %v3835, 16
        %v4249 = vrot.slane %v4247, 4
        %v4250 = vor.u32 %v4249, %v4245
        %v4251 = vrot.slane %v4250, 4
        %v4253 = vshll.u32 %v3836, 16
        %v4255 = vrot.slane %v4253, 5
        %v4256 = vsel %vm1261, %v4251, %v4255
        %v4258 = vshrl.u32 %v3837, 16
        %v4260 = vrot.slane %v4258, 4
        %v4261 = vshll.u32 %v3837, 16
        %v4263 = vrot.slane %v4261, 5
        %v4264 = vor.u32 %v4260, %v4263
        %v4265 = vrot.slane %v4264, 4
        %v4267 = vshll.u32 %v3838, 16
        %v4269 = vrot.slane %v4267, 5
        %v4270 = vsel %vm1261, %v4265, %v4269
        %v4271 = vshrl.u32 %v3838, 16
        %v4273 = vrot.slane %v4271, 4
        %v4274 = vor.u32 %v4273, %v4269
        %v4275 = vrot.slane %v4274, 4
        %v4277 = vshll.u32 %v3839, 16
        %v4279 = vrot.slane %v4277, 5
        %v4280 = vsel %vm1261, %v4275, %v4279
        %v4282 = vshrl.u32 %v3840, 16
        %v4284 = vrot.slane %v4282, 4
        %v4285 = vshll.u32 %v3840, 16
        %v4287 = vrot.slane %v4285, 5
        %v4288 = vor.u32 %v4284, %v4287
        %v4289 = vrot.slane %v4288, 4
        %v4291 = vshll.u32 %v3841, 16
        %v4293 = vrot.slane %v4291, 5
        %v4294 = vsel %vm1261, %v4289, %v4293
        %v4295 = vshrl.u32 %v3841, 16
        %v4297 = vrot.slane %v4295, 4
        %v4298 = vor.u32 %v4297, %v4293
        %v4299 = vrot.slane %v4298, 4
        %v4301 = vshll.u32 %v3842, 16
        %v4303 = vrot.slane %v4301, 5
        %v4304 = vsel %vm1261, %v4299, %v4303
        %v4353 = vrot.slane %v3795, 5
        %v4354 = vrot.slane %v4353, 4
        %v4355 = vrot.slane %v3796, 5
        %v4356 = vsel %vm1696, %v4354, %v4355
        %v4357 = vrot.slane %v4355, 4
        %v4358 = vrot.slane %v3797, 5
        %v4359 = vsel %vm1696, %v4357, %v4358
        %v4360 = vrot.slane %v3798, 5
        %v4361 = vrot.slane %v4360, 4
        %v4362 = vrot.slane %v3799, 5
        %v4363 = vsel %vm1696, %v4361, %v4362
        %v4364 = vrot.slane %v4362, 4
        %v4365 = vrot.slane %v3800, 5
        %v4366 = vsel %vm1696, %v4364, %v4365
        %v4367 = vrot.slane %v3801, 5
        %v4368 = vrot.slane %v4367, 4
        %v4369 = vrot.slane %v3802, 5
        %v4370 = vsel %vm1696, %v4368, %v4369
        %v4371 = vrot.slane %v4369, 4
        %v4372 = vrot.slane %v3803, 5
        %v4373 = vsel %vm1696, %v4371, %v4372
        %v4374 = vrot.slane %v3804, 5
        %v4375 = vrot.slane %v4374, 4
        %v4376 = vrot.slane %v3805, 5
        %v4377 = vsel %vm1696, %v4375, %v4376
        %v4378 = vrot.slane %v4376, 4
        %v4379 = vrot.slane %v3806, 5
        %v4380 = vsel %vm1696, %v4378, %v4379
        %v4381 = vrot.slane %v3807, 5
        %v4382 = vrot.slane %v4381, 4
        %v4383 = vrot.slane %v3808, 5
        %v4384 = vsel %vm1696, %v4382, %v4383
        %v4385 = vrot.slane %v4383, 4
        %v4386 = vrot.slane %v3809, 5
        %v4387 = vsel %vm1696, %v4385, %v4386
        %v4388 = vrot.slane %v3810, 5
        %v4389 = vrot.slane %v4388, 4
        %v4390 = vrot.slane %v3811, 5
        %v4391 = vsel %vm1696, %v4389, %v4390
        %v4392 = vrot.slane %v4390, 4
        %v4393 = vrot.slane %v3812, 5
        %v4394 = vsel %vm1696, %v4392, %v4393
        %v4395 = vrot.slane %v3813, 5
        %v4396 = vrot.slane %v4395, 4
        %v4397 = vrot.slane %v3814, 5
        %v4398 = vsel %vm1696, %v4396, %v4397
        %v4399 = vrot.slane %v4397, 4
        %v4400 = vrot.slane %v3815, 5
        %v4401 = vsel %vm1696, %v4399, %v4400
        %v4402 = vrot.slane %v3816, 5
        %v4403 = vrot.slane %v4402, 4
        %v4404 = vrot.slane %v3817, 5
        %v4405 = vsel %vm1696, %v4403, %v4404
        %v4406 = vrot.slane %v4404, 4
        %v4407 = vrot.slane %v3818, 5
        %v4408 = vsel %vm1696, %v4406, %v4407
        %v4409 = vrot.slane %v3819, 5
        %v4410 = vrot.slane %v4409, 4
        %v4411 = vrot.slane %v3820, 5
        %v4412 = vsel %vm1696, %v4410, %v4411
        %v4413 = vrot.slane %v4411, 4
        %v4414 = vrot.slane %v3821, 5
        %v4415 = vsel %vm1696, %v4413, %v4414
        %v4416 = vrot.slane %v3822, 5
        %v4417 = vrot.slane %v4416, 4
        %v4418 = vrot.slane %v3823, 5
        %v4419 = vsel %vm1696, %v4417, %v4418
        %v4420 = vrot.slane %v4418, 4
        %v4421 = vrot.slane %v3824, 5
        %v4422 = vsel %vm1696, %v4420, %v4421
        %v4423 = vrot.slane %v3825, 5
        %v4424 = vrot.slane %v4423, 4
        %v4425 = vrot.slane %v3826, 5
        %v4426 = vsel %vm1696, %v4424, %v4425
        %v4427 = vrot.slane %v4425, 4
        %v4428 = vrot.slane %v3827, 5
        %v4429 = vsel %vm1696, %v4427, %v4428
        %v4430 = vrot.slane %v3828, 5
        %v4431 = vrot.slane %v4430, 4
        %v4432 = vrot.slane %v3829, 5
        %v4433 = vsel %vm1696, %v4431, %v4432
        %v4434 = vrot.slane %v4432, 4
        %v4435 = vrot.slane %v3830, 5
        %v4436 = vsel %vm1696, %v4434, %v4435
        %v4437 = vrot.slane %v3831, 5
        %v4438 = vrot.slane %v4437, 4
        %v4439 = vrot.slane %v3832, 5
        %v4440 = vsel %vm1696, %v4438, %v4439
        %v4441 = vrot.slane %v4439, 4
        %v4442 = vrot.slane %v3833, 5
        %v4443 = vsel %vm1696, %v4441, %v4442
        %v4444 = vrot.slane %v3834, 5
        %v4445 = vrot.slane %v4444, 4
        %v4446 = vrot.slane %v3835, 5
        %v4447 = vsel %vm1696, %v4445, %v4446
        %v4448 = vrot.slane %v4446, 4
        %v4449 = vrot.slane %v3836, 5
        %v4450 = vsel %vm1696, %v4448, %v4449
        %v4451 = vrot.slane %v3837, 5
        %v4452 = vrot.slane %v4451, 4
        %v4453 = vrot.slane %v3838, 5
        %v4454 = vsel %vm1696, %v4452, %v4453
        %v4455 = vrot.slane %v4453, 4
        %v4456 = vrot.slane %v3839, 5
        %v4457 = vsel %vm1696, %v4455, %v4456
        %v4458 = vrot.slane %v3840, 5
        %v4459 = vrot.slane %v4458, 4
        %v4460 = vrot.slane %v3841, 5
        %v4461 = vsel %vm1696, %v4459, %v4460
        %v4462 = vrot.slane %v4460, 4
        %v4463 = vrot.slane %v3842, 5
        %v4464 = vsel %vm1696, %v4462, %v4463
        %v4466 = vshrl.u32 %v3843, 16
        %v4468 = vrot.slane %v4466, 4
        %v4469 = vshll.u32 %v3843, 16
        %v4471 = vrot.slane %v4469, 5
        %v4472 = vor.u32 %v4468, %v4471
        %v4473 = vrot.slane %v4472, 4
        %v4475 = vshll.u32 %v3844, 16
        %v4477 = vrot.slane %v4475, 5
        %v4478 = vsel %vm1261, %v4473, %v4477
        %v4479 = vshrl.u32 %v3844, 16
        %v4481 = vrot.slane %v4479, 4
        %v4482 = vor.u32 %v4481, %v4477
        %v4483 = vrot.slane %v4482, 4
        %v4485 = vshll.u32 %v3845, 16
        %v4487 = vrot.slane %v4485, 5
        %v4488 = vsel %vm1261, %v4483, %v4487
        %v4492 = vrot.slane %v3843, 5
        %v4493 = vrot.slane %v4492, 4
        %v4494 = vrot.slane %v3844, 5
        %v4495 = vsel %vm1696, %v4493, %v4494
        %v4496 = vrot.slane %v4494, 4
        %v4497 = vrot.slane %v3845, 5
        %v4498 = vsel %vm1696, %v4496, %v4497
        %v4500 = vshrl.u32 %v3846, 16
        %v4502 = vrot.slane %v4500, 4
        %v4503 = vshll.u32 %v3846, 16
        %v4505 = vrot.slane %v4503, 5
        %v4506 = vor.u32 %v4502, %v4505
        %v4507 = vrot.slane %v4506, 4
        %v4509 = vshll.u32 %v3847, 16
        %v4511 = vrot.slane %v4509, 5
        %v4512 = vsel %vm1261, %v4507, %v4511
        %v4513 = vshrl.u32 %v3847, 16
        %v4515 = vrot.slane %v4513, 4
        %v4516 = vor.u32 %v4515, %v4511
        %v4517 = vrot.slane %v4516, 4
        %v4519 = vshll.u32 %v3848, 16
        %v4521 = vrot.slane %v4519, 5
        %v4522 = vsel %vm1261, %v4517, %v4521
        %v4526 = vrot.slane %v3846, 5
        %v4527 = vrot.slane %v4526, 4
        %v4528 = vrot.slane %v3847, 5
        %v4529 = vsel %vm1696, %v4527, %v4528
        %v4530 = vrot.slane %v4528, 4
        %v4531 = vrot.slane %v3848, 5
        %v4532 = vsel %vm1696, %v4530, %v4531
        %v4533 = vunpack.c.l.b16 %v3795
        %v4534 = vunpack.c.l.b16 %v3796
        %v4535 = vunpack.c.l.b16 %v3798
        %v4536 = vunpack.c.l.b16 %v3799
        %v4537 = vunpack.c.l.b16 %v3801
        %v4538 = vunpack.c.l.b16 %v3802
        %v4539 = vunpack.c.l.b16 %v3804
        %v4540 = vunpack.c.l.b16 %v3805
        %v4541 = vunpack.c.l.b16 %v3807
        %v4542 = vunpack.c.l.b16 %v3808
        %v4543 = vunpack.c.l.b16 %v3810
        %v4544 = vunpack.c.l.b16 %v3811
        %v4545 = vunpack.c.l.b16 %v3813
        %v4546 = vunpack.c.l.b16 %v3814
        %v4547 = vunpack.c.l.b16 %v3816
        %v4548 = vunpack.c.l.b16 %v3817
        %v4549 = vunpack.c.l.b16 %v3819
        %v4550 = vunpack.c.l.b16 %v3820
        %v4551 = vunpack.c.l.b16 %v3822
        %v4552 = vunpack.c.l.b16 %v3823
        %v4553 = vunpack.c.l.b16 %v3825
        %v4554 = vunpack.c.l.b16 %v3826
        %v4555 = vunpack.c.l.b16 %v3828
        %v4556 = vunpack.c.l.b16 %v3829
        %v4557 = vunpack.c.l.b16 %v3831
        %v4558 = vunpack.c.l.b16 %v3832
        %v4559 = vunpack.c.l.b16 %v3834
        %v4560 = vunpack.c.l.b16 %v3835
        %v4561 = vunpack.c.l.b16 %v3837
        %v4562 = vunpack.c.l.b16 %v3838
        %v4563 = vunpack.c.l.b16 %v3840
        %v4564 = vunpack.c.l.b16 %v3841
        %v4565 = vpack.c.b16 %v4534, %v4533
        %v4566 = vpack.c.b16 %v4536, %v4535
        %v4567 = vpack.c.b16 %v4538, %v4537
        %v4568 = vpack.c.b16 %v4540, %v4539
        %v4569 = vpack.c.b16 %v4542, %v4541
        %v4570 = vpack.c.b16 %v4544, %v4543
        %v4571 = vpack.c.b16 %v4546, %v4545
        %v4572 = vpack.c.b16 %v4548, %v4547
        %v4573 = vpack.c.b16 %v4550, %v4549
        %v4574 = vpack.c.b16 %v4552, %v4551
        %v4575 = vpack.c.b16 %v4554, %v4553
        %v4576 = vpack.c.b16 %v4556, %v4555
        %v4577 = vpack.c.b16 %v4558, %v4557
        %v4578 = vpack.c.b16 %v4560, %v4559
        %v4579 = vpack.c.b16 %v4562, %v4561
        %v4580 = vpack.c.b16 %v4564, %v4563
        %v4581 = vunpack.c.l.b16 %v3934
        %v4582 = vunpack.c.l.b16 %v3944
        %v4583 = vunpack.c.l.b16 %v3958
        %v4584 = vunpack.c.l.b16 %v3968
        %v4585 = vunpack.c.l.b16 %v3982
        %v4586 = vunpack.c.l.b16 %v3992
        %v4587 = vunpack.c.l.b16 %v4006
        %v4588 = vunpack.c.l.b16 %v4016
        %v4589 = vunpack.c.l.b16 %v4030
        %v4590 = vunpack.c.l.b16 %v4040
        %v4591 = vunpack.c.l.b16 %v4054
        %v4592 = vunpack.c.l.b16 %v4064
        %v4593 = vunpack.c.l.b16 %v4078
        %v4594 = vunpack.c.l.b16 %v4088
        %v4595 = vunpack.c.l.b16 %v4102
        %v4596 = vunpack.c.l.b16 %v4112
        %v4597 = vunpack.c.l.b16 %v4126
        %v4598 = vunpack.c.l.b16 %v4136
        %v4599 = vunpack.c.l.b16 %v4150
        %v4600 = vunpack.c.l.b16 %v4160
        %v4601 = vunpack.c.l.b16 %v4174
        %v4602 = vunpack.c.l.b16 %v4184
        %v4603 = vunpack.c.l.b16 %v4198
        %v4604 = vunpack.c.l.b16 %v4208
        %v4605 = vunpack.c.l.b16 %v4222
        %v4606 = vunpack.c.l.b16 %v4232
        %v4607 = vunpack.c.l.b16 %v4246
        %v4608 = vunpack.c.l.b16 %v4256
        %v4609 = vunpack.c.l.b16 %v4270
        %v4610 = vunpack.c.l.b16 %v4280
        %v4611 = vunpack.c.l.b16 %v4294
        %v4612 = vunpack.c.l.b16 %v4304
        %v4613 = vpack.c.b16 %v4582, %v4581
        %v4614 = vpack.c.b16 %v4584, %v4583
        %v4615 = vpack.c.b16 %v4586, %v4585
        %v4616 = vpack.c.b16 %v4588, %v4587
        %v4617 = vpack.c.b16 %v4590, %v4589
        %v4618 = vpack.c.b16 %v4592, %v4591
        %v4619 = vpack.c.b16 %v4594, %v4593
        %v4620 = vpack.c.b16 %v4596, %v4595
        %v4621 = vpack.c.b16 %v4598, %v4597
        %v4622 = vpack.c.b16 %v4600, %v4599
        %v4623 = vpack.c.b16 %v4602, %v4601
        %v4624 = vpack.c.b16 %v4604, %v4603
        %v4625 = vpack.c.b16 %v4606, %v4605
        %v4626 = vpack.c.b16 %v4608, %v4607
        %v4627 = vpack.c.b16 %v4610, %v4609
        %v4628 = vpack.c.b16 %v4612, %v4611
        %4629 = vrot.lane.b32.xlu0 %v4613, 64
        %v4630 = vpop.permute.xlu0 %4629
        %4631 = vrot.lane.b32.xlu0 %v4614, 64
        %v4632 = vpop.permute.xlu0 %4631
        %4633 = vrot.lane.b32.xlu0 %v4615, 64
        %v4634 = vpop.permute.xlu0 %4633
        %4635 = vrot.lane.b32.xlu0 %v4616, 64
        %v4636 = vpop.permute.xlu0 %4635
        %4637 = vrot.lane.b32.xlu0 %v4617, 64
        %v4638 = vpop.permute.xlu0 %4637
        %4639 = vrot.lane.b32.xlu0 %v4618, 64
        %v4640 = vpop.permute.xlu0 %4639
        %4641 = vrot.lane.b32.xlu0 %v4619, 64
        %v4642 = vpop.permute.xlu0 %4641
        %4643 = vrot.lane.b32.xlu0 %v4620, 64
        %v4644 = vpop.permute.xlu0 %4643
        %4645 = vrot.lane.b32.xlu0 %v4621, 64
        %v4646 = vpop.permute.xlu0 %4645
        %4647 = vrot.lane.b32.xlu0 %v4622, 64
        %v4648 = vpop.permute.xlu0 %4647
        %4649 = vrot.lane.b32.xlu0 %v4623, 64
        %v4650 = vpop.permute.xlu0 %4649
        %4651 = vrot.lane.b32.xlu0 %v4624, 64
        %v4652 = vpop.permute.xlu0 %4651
        %4653 = vrot.lane.b32.xlu0 %v4625, 64
        %v4654 = vpop.permute.xlu0 %4653
        %4655 = vrot.lane.b32.xlu0 %v4626, 64
        %v4656 = vpop.permute.xlu0 %4655
        %4657 = vrot.lane.b32.xlu0 %v4627, 64
        %v4658 = vpop.permute.xlu0 %4657
        %4659 = vrot.lane.b32.xlu0 %v4628, 64
        %v4660 = vpop.permute.xlu0 %4659
        %v4661 = vunpack.c.l.b16 %v4356
        %v4662 = vunpack.c.l.b16 %v4359
        %v4663 = vunpack.c.l.b16 %v4363
        %v4664 = vunpack.c.l.b16 %v4366
        %v4665 = vunpack.c.l.b16 %v4370
        %v4666 = vunpack.c.l.b16 %v4373
        %v4667 = vunpack.c.l.b16 %v4377
        %v4668 = vunpack.c.l.b16 %v4380
        %v4669 = vunpack.c.l.b16 %v4384
        %v4670 = vunpack.c.l.b16 %v4387
        %v4671 = vunpack.c.l.b16 %v4391
        %v4672 = vunpack.c.l.b16 %v4394
        %v4673 = vunpack.c.l.b16 %v4398
        %v4674 = vunpack.c.l.b16 %v4401
        %v4675 = vunpack.c.l.b16 %v4405
        %v4676 = vunpack.c.l.b16 %v4408
        %v4677 = vunpack.c.l.b16 %v4412
        %v4678 = vunpack.c.l.b16 %v4415
        %v4679 = vunpack.c.l.b16 %v4419
        %v4680 = vunpack.c.l.b16 %v4422
        %v4681 = vunpack.c.l.b16 %v4426
        %v4682 = vunpack.c.l.b16 %v4429
        %v4683 = vunpack.c.l.b16 %v4433
        %v4684 = vunpack.c.l.b16 %v4436
        %v4685 = vunpack.c.l.b16 %v4440
        %v4686 = vunpack.c.l.b16 %v4443
        %v4687 = vunpack.c.l.b16 %v4447
        %v4688 = vunpack.c.l.b16 %v4450
        %v4689 = vunpack.c.l.b16 %v4454
        %v4690 = vunpack.c.l.b16 %v4457
        %v4691 = vunpack.c.l.b16 %v4461
        %v4692 = vunpack.c.l.b16 %v4464
        %v4693 = vpack.c.b16 %v4662, %v4661
        %v4694 = vpack.c.b16 %v4664, %v4663
        %v4695 = vpack.c.b16 %v4666, %v4665
        %v4696 = vpack.c.b16 %v4668, %v4667
        %v4697 = vpack.c.b16 %v4670, %v4669
        %v4698 = vpack.c.b16 %v4672, %v4671
        %v4699 = vpack.c.b16 %v4674, %v4673
        %v4700 = vpack.c.b16 %v4676, %v4675
        %v4701 = vpack.c.b16 %v4678, %v4677
        %v4702 = vpack.c.b16 %v4680, %v4679
        %v4703 = vpack.c.b16 %v4682, %v4681
        %v4704 = vpack.c.b16 %v4684, %v4683
        %v4705 = vpack.c.b16 %v4686, %v4685
        %v4706 = vpack.c.b16 %v4688, %v4687
        %v4707 = vpack.c.b16 %v4690, %v4689
        %v4708 = vpack.c.b16 %v4692, %v4691
        %v4709 = vunpack.c.l.b16 %v3843
        %v4710 = vunpack.c.l.b16 %v3844
        %v4711 = vpack.c.b16 %v4710, %v4709
        %4712 = vrot.lane.b32.xlu0 %v4566, 64
        %v4713 = vpop.permute.xlu0 %4712
        %4714 = vrot.lane.b32.xlu0 %v4567, 64
        %v4715 = vpop.permute.xlu0 %4714
        %4716 = vrot.lane.b32.xlu0 %v4568, 64
        %v4717 = vpop.permute.xlu0 %4716
        %4718 = vrot.lane.b32.xlu0 %v4569, 64
        %v4719 = vpop.permute.xlu0 %4718
        %4720 = vrot.lane.b32.xlu0 %v4570, 64
        %v4721 = vpop.permute.xlu0 %4720
        %4722 = vrot.lane.b32.xlu0 %v4571, 64
        %v4723 = vpop.permute.xlu0 %4722
        %4724 = vrot.lane.b32.xlu0 %v4572, 64
        %v4725 = vpop.permute.xlu0 %4724
        %4726 = vrot.lane.b32.xlu0 %v4573, 64
        %v4727 = vpop.permute.xlu0 %4726
        %4728 = vrot.lane.b32.xlu0 %v4574, 64
        %v4729 = vpop.permute.xlu0 %4728
        %4730 = vrot.lane.b32.xlu0 %v4575, 64
        %v4731 = vpop.permute.xlu0 %4730
        %4732 = vrot.lane.b32.xlu0 %v4576, 64
        %v4733 = vpop.permute.xlu0 %4732
        %4734 = vrot.lane.b32.xlu0 %v4577, 64
        %v4735 = vpop.permute.xlu0 %4734
        %4736 = vrot.lane.b32.xlu0 %v4578, 64
        %v4737 = vpop.permute.xlu0 %4736
        %4738 = vrot.lane.b32.xlu0 %v4579, 64
        %v4739 = vpop.permute.xlu0 %4738
        %4740 = vrot.lane.b32.xlu0 %v4580, 64
        %v4741 = vpop.permute.xlu0 %4740
        %4742 = vrot.lane.b32.xlu0 %v4711, 64
        %v4743 = vpop.permute.xlu0 %4742
        %v4744 = vunpack.c.l.b16 %v4478
        %v4745 = vunpack.c.l.b16 %v4488
        %v4746 = vpack.c.b16 %v4745, %v4744
        %v4747 = vunpack.c.l.b16 %v4495
        %v4748 = vunpack.c.l.b16 %v4498
        %v4749 = vpack.c.b16 %v4748, %v4747
        %4750 = vrot.lane.b32.xlu0 %v4694, 64
        %v4751 = vpop.permute.xlu0 %4750
        %4752 = vrot.lane.b32.xlu0 %v4695, 64
        %v4753 = vpop.permute.xlu0 %4752
        %4754 = vrot.lane.b32.xlu0 %v4696, 64
        %v4755 = vpop.permute.xlu0 %4754
        %4756 = vrot.lane.b32.xlu0 %v4697, 64
        %v4757 = vpop.permute.xlu0 %4756
        %4758 = vrot.lane.b32.xlu0 %v4698, 64
        %v4759 = vpop.permute.xlu0 %4758
        %4760 = vrot.lane.b32.xlu0 %v4699, 64
        %v4761 = vpop.permute.xlu0 %4760
        %4762 = vrot.lane.b32.xlu0 %v4700, 64
        %v4763 = vpop.permute.xlu0 %4762
        %4764 = vrot.lane.b32.xlu0 %v4701, 64
        %v4765 = vpop.permute.xlu0 %4764
        %4766 = vrot.lane.b32.xlu0 %v4702, 64
        %v4767 = vpop.permute.xlu0 %4766
        %4768 = vrot.lane.b32.xlu0 %v4703, 64
        %v4769 = vpop.permute.xlu0 %4768
        %4770 = vrot.lane.b32.xlu0 %v4704, 64
        %v4771 = vpop.permute.xlu0 %4770
        %4772 = vrot.lane.b32.xlu0 %v4705, 64
        %v4773 = vpop.permute.xlu0 %4772
        %4774 = vrot.lane.b32.xlu0 %v4706, 64
        %v4775 = vpop.permute.xlu0 %4774
        %4776 = vrot.lane.b32.xlu0 %v4707, 64
        %v4777 = vpop.permute.xlu0 %4776
        %4778 = vrot.lane.b32.xlu0 %v4708, 64
        %v4779 = vpop.permute.xlu0 %4778
        %4780 = vrot.lane.b32.xlu0 %v4749, 64
        %v4781 = vpop.permute.xlu0 %4780
        %v4782 = vunpack.c.l.b16 %v3846
        %v4783 = vunpack.c.l.b16 %v3847
        %v4784 = vpack.c.b16 %v4783, %v4782
        %v4785 = vunpack.c.l.b16 %v4512
        %v4786 = vunpack.c.l.b16 %v4522
        %v4787 = vpack.c.b16 %v4786, %v4785
        %4788 = vrot.lane.b32.xlu0 %v4746, 64
        %v4789 = vpop.permute.xlu0 %4788
        %4790 = vrot.lane.b32.xlu0 %v4787, 64
        %v4791 = vpop.permute.xlu0 %4790
        %v4792 = vunpack.c.l.b16 %v4529
        %v4793 = vunpack.c.l.b16 %v4532
        %v4794 = vpack.c.b16 %v4793, %v4792
        %v4797 = vsel %vm2280, %v4565, %v4630
        %v4801 = vsel %vm2280, %v4566, %v4632
        %v4805 = vsel %vm2280, %v4567, %v4634
        %v4809 = vsel %vm2280, %v4568, %v4636
        %v4813 = vsel %vm2280, %v4569, %v4638
        %v4817 = vsel %vm2280, %v4570, %v4640
        %v4821 = vsel %vm2280, %v4571, %v4642
        %v4825 = vsel %vm2280, %v4572, %v4644
        %v4829 = vsel %vm2280, %v4573, %v4646
        %v4833 = vsel %vm2280, %v4574, %v4648
        %v4837 = vsel %vm2280, %v4575, %v4650
        %v4841 = vsel %vm2280, %v4576, %v4652
        %v4845 = vsel %vm2280, %v4577, %v4654
        %v4849 = vsel %vm2280, %v4578, %v4656
        %v4853 = vsel %vm2280, %v4579, %v4658
        %v4857 = vsel %vm2280, %v4580, %v4660
        %v4861 = vsel %vm2280, %v4693, %v4713
        %v4865 = vsel %vm2280, %v4694, %v4715
        %v4869 = vsel %vm2280, %v4695, %v4717
        %v4873 = vsel %vm2280, %v4696, %v4719
        %v4877 = vsel %vm2280, %v4697, %v4721
        %v4881 = vsel %vm2280, %v4698, %v4723
        %v4885 = vsel %vm2280, %v4699, %v4725
        %v4889 = vsel %vm2280, %v4700, %v4727
        %v4893 = vsel %vm2280, %v4701, %v4729
        %v4897 = vsel %vm2280, %v4702, %v4731
        %v4901 = vsel %vm2280, %v4703, %v4733
        %v4905 = vsel %vm2280, %v4704, %v4735
        %v4909 = vsel %vm2280, %v4705, %v4737
        %v4913 = vsel %vm2280, %v4706, %v4739
        %v4917 = vsel %vm2280, %v4707, %v4741
        %v4921 = vsel %vm2280, %v4708, %v4743
        %v4925 = vsel %vm2280, %v4614, %v4751
        %v4929 = vsel %vm2280, %v4615, %v4753
        %v4933 = vsel %vm2280, %v4616, %v4755
        %v4937 = vsel %vm2280, %v4617, %v4757
        %v4941 = vsel %vm2280, %v4618, %v4759
        %v4945 = vsel %vm2280, %v4619, %v4761
        %v4949 = vsel %vm2280, %v4620, %v4763
        %v4953 = vsel %vm2280, %v4621, %v4765
        %v4957 = vsel %vm2280, %v4622, %v4767
        %v4961 = vsel %vm2280, %v4623, %v4769
        %v4965 = vsel %vm2280, %v4624, %v4771
        %v4969 = vsel %vm2280, %v4625, %v4773
        %v4973 = vsel %vm2280, %v4626, %v4775
        %v4977 = vsel %vm2280, %v4627, %v4777
        %v4981 = vsel %vm2280, %v4628, %v4779
        %v4985 = vsel %vm2280, %v4746, %v4781
        %v4989 = vsel %vm2280, %v4711, %v4789
        %v4993 = vsel %vm2280, %v4784, %v4791
        %v4995 = vld [vmem:[%s7] sm:$0xf]
        %v4996 = vld [vmem:[%s7 + $0x4] sm:$0xf]
        %v4997 = vld [vmem:[%s7 + $0x8] sm:$0xf]
        %v4998 = vld [vmem:[%s7 + $0xc] sm:$0xf]
        %v5003 = vunpack.c.l.b16 %v4995
        %v5004 = vunpack.c.l.b16 %v4996
        %v5005 = vunpack.c.l.b16 %v4997
        %v5006 = vunpack.c.l.b16 %v4998
        %v5007 = vpack.c.b16 %v5004, %v5003
        %v5008 = vpack.c.b16 %v5006, %v5005
        %v5012 = vsel %vm2231, %v576, 0
        %v5015 = vsel %vm2231, %v577, 0
        %v5018 = vsel %vm2231, %v578, 0
        %v5021 = vsel %vm2231, %v579, 0
        %v5024 = vsel %vm2231, %v580, 0
        %v5027 = vsel %vm2231, %v581, 0
        %v5030 = vsel %vm2231, %v582, 0
        %v5033 = vsel %vm2231, %v583, 0
        %v5036 = vsel %vm2231, %v584, 0
        %v5039 = vsel %vm2231, %v585, 0
        %v5042 = vsel %vm2231, %v586, 0
        %v5045 = vsel %vm2231, %v587, 0
        %v5048 = vsel %vm2231, %v588, 0
        %v5051 = vsel %vm2231, %v589, 0
        %v5054 = vsel %vm2231, %v590, 0
        %v5057 = vsel %vm2231, %v591, 0
        %5059 = vmatprep.subr.bf16.mxu0 0
        %5060 = vmatpush1.bf16.msra.mxu0 0
        %5061 = vmatprep.subr.bf16.mxu0 0
        %5062 = vmatpush1.bf16.msra.mxu0 0
        %5063 = vmatprep.subr.bf16.mxu0 0
        %5064 = vmatpush1.bf16.msra.mxu0 0
        %5065 = vmatprep.subr.bf16.mxu0 0
        %5066 = vmatpush1.bf16.msra.mxu0 0
        %5067 = vmatprep.subr.bf16.mxu0 0
        %5068 = vmatpush1.bf16.msra.mxu0 0
        %5069 = vmatprep.subr.bf16.mxu0 0
        %5070 = vmatpush1.bf16.msra.mxu0 0
        %5071 = vmatprep.subr.bf16.mxu0 0
        %5072 = vmatpush1.bf16.msra.mxu0 %v5008
        %5073 = vmatprep.subr.bf16.mxu0 0
        %5074 = vmatpush1.bf16.msra.mxu0 %v5007
        %5075 = vmatprep.subr.bf16.mxu0 0
        %5076 = vmatpush2.bf16.msra.mxu0 0
        %5077 = vmatprep.subr.bf16.mxu0 0
        %5078 = vmatpush2.bf16.msra.mxu0 0
        %5079 = vmatprep.subr.bf16.mxu0 0
        %5080 = vmatpush2.bf16.msra.mxu0 0
        %5081 = vmatprep.subr.bf16.mxu0 0
        %5082 = vmatpush2.bf16.msra.mxu0 0
        %5083 = vmatprep.subr.bf16.mxu0 0
        %5084 = vmatpush2.bf16.msra.mxu0 0
        %5085 = vmatprep.subr.bf16.mxu0 0
        %5086 = vmatpush2.bf16.msra.mxu0 0
        %5087 = vmatprep.subr.bf16.mxu0 0
        %5088 = vmatpush2.bf16.msra.mxu0 0
        %5089 = vmatprep.subr.bf16.mxu0 0
        %5090 = vmatpush2.bf16.msra.mxu0 0
        %5091 = vmatprep.mubr.bf16.mxu0 0
        %5092 = vmatmul.mubr.bf16.gmra.mxu0 %v5012
        %v5093 = vpop.f32.mrf.mxu0
        %v5094 = vadd.f32 0.0, %v5093
        %v5095 = vpop.f32.mrf.mxu0
        %v5096 = vpop.f32.mrf.mxu0
        %v5097 = vadd.f32 0.0, %v5096
        %v5098 = vpop.f32.mrf.mxu0
        %5099 = vmatprep.mubr.bf16.mxu0 0
        %5100 = vmatmul.mubr.bf16.gmra.mxu0 %v5015
        %v5101 = vpop.f32.mrf.mxu0
        %v5102 = vadd.f32 0.0, %v5101
        %v5103 = vpop.f32.mrf.mxu0
        %v5104 = vpop.f32.mrf.mxu0
        %v5105 = vadd.f32 0.0, %v5104
        %v5106 = vpop.f32.mrf.mxu0
        %5107 = vmatprep.mubr.bf16.mxu0 0
        %5108 = vmatmul.mubr.bf16.gmra.mxu0 %v5018
        %v5109 = vpop.f32.mrf.mxu0
        %v5110 = vadd.f32 0.0, %v5109
        %v5111 = vpop.f32.mrf.mxu0
        %v5112 = vpop.f32.mrf.mxu0
        %v5113 = vadd.f32 0.0, %v5112
        %v5114 = vpop.f32.mrf.mxu0
        %5115 = vmatprep.mubr.bf16.mxu0 0
        %5116 = vmatmul.mubr.bf16.gmra.mxu0 %v5021
        %v5117 = vpop.f32.mrf.mxu0
        %v5118 = vadd.f32 0.0, %v5117
        %v5119 = vpop.f32.mrf.mxu0
        %v5120 = vpop.f32.mrf.mxu0
        %v5121 = vadd.f32 0.0, %v5120
        %v5122 = vpop.f32.mrf.mxu0
        %5123 = vmatprep.mubr.bf16.mxu0 0
        %5124 = vmatmul.mubr.bf16.gmra.mxu0 %v5024
        %v5125 = vpop.f32.mrf.mxu0
        %v5126 = vadd.f32 0.0, %v5125
        %v5127 = vpop.f32.mrf.mxu0
        %v5128 = vpop.f32.mrf.mxu0
        %v5129 = vadd.f32 0.0, %v5128
        %v5130 = vpop.f32.mrf.mxu0
        %5131 = vmatprep.mubr.bf16.mxu0 0
        %5132 = vmatmul.mubr.bf16.gmra.mxu0 %v5027
        %v5133 = vpop.f32.mrf.mxu0
        %v5134 = vadd.f32 0.0, %v5133
        %v5135 = vpop.f32.mrf.mxu0
        %v5136 = vpop.f32.mrf.mxu0
        %v5137 = vadd.f32 0.0, %v5136
        %v5138 = vpop.f32.mrf.mxu0
        %5139 = vmatprep.mubr.bf16.mxu0 0
        %5140 = vmatmul.mubr.bf16.gmra.mxu0 %v5030
        %v5141 = vpop.f32.mrf.mxu0
        %v5142 = vadd.f32 0.0, %v5141
        %v5143 = vpop.f32.mrf.mxu0
        %v5144 = vpop.f32.mrf.mxu0
        %v5145 = vadd.f32 0.0, %v5144
        %v5146 = vpop.f32.mrf.mxu0
        %5147 = vmatprep.mubr.bf16.mxu0 0
        %5148 = vmatmul.mubr.bf16.gmra.mxu0 %v5033
        %v5149 = vpop.f32.mrf.mxu0
        %v5150 = vadd.f32 0.0, %v5149
        %v5151 = vpop.f32.mrf.mxu0
        %v5152 = vpop.f32.mrf.mxu0
        %v5153 = vadd.f32 0.0, %v5152
        %v5154 = vpop.f32.mrf.mxu0
        %5155 = vmatprep.mubr.bf16.mxu0 0
        %5156 = vmatmul.mubr.bf16.gmra.mxu0 %v5036
        %v5157 = vpop.f32.mrf.mxu0
        %v5158 = vadd.f32 0.0, %v5157
        %v5159 = vpop.f32.mrf.mxu0
        %v5160 = vpop.f32.mrf.mxu0
        %v5161 = vadd.f32 0.0, %v5160
        %v5162 = vpop.f32.mrf.mxu0
        %5163 = vmatprep.mubr.bf16.mxu0 0
        %5164 = vmatmul.mubr.bf16.gmra.mxu0 %v5039
        %v5165 = vpop.f32.mrf.mxu0
        %v5166 = vadd.f32 0.0, %v5165
        %v5167 = vpop.f32.mrf.mxu0
        %v5168 = vpop.f32.mrf.mxu0
        %v5169 = vadd.f32 0.0, %v5168
        %v5170 = vpop.f32.mrf.mxu0
        %5171 = vmatprep.mubr.bf16.mxu0 0
        %5172 = vmatmul.mubr.bf16.gmra.mxu0 %v5042
        %v5173 = vpop.f32.mrf.mxu0
        %v5174 = vadd.f32 0.0, %v5173
        %v5175 = vpop.f32.mrf.mxu0
        %v5176 = vpop.f32.mrf.mxu0
        %v5177 = vadd.f32 0.0, %v5176
        %v5178 = vpop.f32.mrf.mxu0
        %5179 = vmatprep.mubr.bf16.mxu0 0
        %5180 = vmatmul.mubr.bf16.gmra.mxu0 %v5045
        %v5181 = vpop.f32.mrf.mxu0
        %v5182 = vadd.f32 0.0, %v5181
        %v5183 = vpop.f32.mrf.mxu0
        %v5184 = vpop.f32.mrf.mxu0
        %v5185 = vadd.f32 0.0, %v5184
        %v5186 = vpop.f32.mrf.mxu0
        %5187 = vmatprep.mubr.bf16.mxu0 0
        %5188 = vmatmul.mubr.bf16.gmra.mxu0 %v5048
        %v5189 = vpop.f32.mrf.mxu0
        %v5190 = vadd.f32 0.0, %v5189
        %v5191 = vpop.f32.mrf.mxu0
        %v5192 = vpop.f32.mrf.mxu0
        %v5193 = vadd.f32 0.0, %v5192
        %v5194 = vpop.f32.mrf.mxu0
        %5195 = vmatprep.mubr.bf16.mxu0 0
        %5196 = vmatmul.mubr.bf16.gmra.mxu0 %v5051
        %v5197 = vpop.f32.mrf.mxu0
        %v5198 = vadd.f32 0.0, %v5197
        %v5199 = vpop.f32.mrf.mxu0
        %v5200 = vpop.f32.mrf.mxu0
        %v5201 = vadd.f32 0.0, %v5200
        %v5202 = vpop.f32.mrf.mxu0
        %5203 = vmatprep.mubr.bf16.mxu0 0
        %5204 = vmatmul.mubr.bf16.gmra.mxu0 %v5054
        %v5205 = vpop.f32.mrf.mxu0
        %v5206 = vadd.f32 0.0, %v5205
        %v5207 = vpop.f32.mrf.mxu0
        %v5208 = vpop.f32.mrf.mxu0
        %v5209 = vadd.f32 0.0, %v5208
        %v5210 = vpop.f32.mrf.mxu0
        %5211 = vmatprep.mubr.bf16.mxu0 0
        %5212 = vmatmul.mubr.bf16.gmra.mxu0 %v5057
        %v5213 = vpop.f32.mrf.mxu0
        %v5214 = vadd.f32 0.0, %v5213
        %v5215 = vpop.f32.mrf.mxu0
        %v5216 = vpop.f32.mrf.mxu0
        %v5217 = vadd.f32 0.0, %v5216
        %v5218 = vpop.f32.mrf.mxu0
        %5219 = vdwg.mxu0
        %v5292 = vunpack.c.l.b16 %v3849
        %v5293 = vunpack.c.l.b16 %v3850
        %v5294 = vunpack.c.l.b16 %v3851
        %v5295 = vunpack.c.l.b16 %v3852
        %v5296 = vunpack.c.l.b16 %v3853
        %v5297 = vunpack.c.l.b16 %v3854
        %v5298 = vunpack.c.l.b16 %v3855
        %v5299 = vunpack.c.l.b16 %v3856
        %v5300 = vunpack.c.l.b16 %v3857
        %v5301 = vunpack.c.l.b16 %v3858
        %v5302 = vunpack.c.l.b16 %v3859
        %v5303 = vunpack.c.l.b16 %v3860
        %v5304 = vunpack.c.l.b16 %v3861
        %v5305 = vunpack.c.l.b16 %v3862
        %v5306 = vunpack.c.l.b16 %v3863
        %v5307 = vunpack.c.l.b16 %v3864
        %v5308 = vunpack.c.l.b16 %v3865
        %v5309 = vunpack.c.l.b16 %v3866
        %v5310 = vunpack.c.l.b16 %v3867
        %v5311 = vunpack.c.l.b16 %v3868
        %v5312 = vunpack.c.l.b16 %v3869
        %v5313 = vunpack.c.l.b16 %v3870
        %v5314 = vunpack.c.l.b16 %v3871
        %v5315 = vunpack.c.l.b16 %v3872
        %v5316 = vunpack.c.l.b16 %v3873
        %v5317 = vunpack.c.l.b16 %v3874
        %v5318 = vunpack.c.l.b16 %v3875
        %v5319 = vunpack.c.l.b16 %v3876
        %v5320 = vunpack.c.l.b16 %v3877
        %v5321 = vunpack.c.l.b16 %v3878
        %v5322 = vunpack.c.l.b16 %v3879
        %v5323 = vunpack.c.l.b16 %v3880
        %v5324 = vunpack.c.l.b16 %v3881
        %v5325 = vunpack.c.l.b16 %v3882
        %v5326 = vunpack.c.l.b16 %v3883
        %v5327 = vunpack.c.l.b16 %v3884
        %v5328 = vunpack.c.l.b16 %v3885
        %v5329 = vunpack.c.l.b16 %v3886
        %v5330 = vunpack.c.l.b16 %v3887
        %v5331 = vunpack.c.l.b16 %v3888
        %v5332 = vunpack.c.l.b16 %v3889
        %v5333 = vunpack.c.l.b16 %v3890
        %v5334 = vunpack.c.l.b16 %v3891
        %v5335 = vunpack.c.l.b16 %v3892
        %v5336 = vunpack.c.l.b16 %v3893
        %v5337 = vunpack.c.l.b16 %v3894
        %v5338 = vunpack.c.l.b16 %v3895
        %v5339 = vunpack.c.l.b16 %v3896
        %v5340 = vunpack.c.l.b16 %v3897
        %v5341 = vunpack.c.l.b16 %v3898
        %v5342 = vunpack.c.l.b16 %v3899
        %v5343 = vunpack.c.l.b16 %v3900
        %v5344 = vunpack.c.l.b16 %v3901
        %v5345 = vunpack.c.l.b16 %v3902
        %v5346 = vunpack.c.l.b16 %v3903
        %v5347 = vunpack.c.l.b16 %v3904
        %v5348 = vunpack.c.l.b16 %v3905
        %v5349 = vunpack.c.l.b16 %v3906
        %v5350 = vunpack.c.l.b16 %v3907
        %v5351 = vunpack.c.l.b16 %v3908
        %v5352 = vunpack.c.l.b16 %v3909
        %v5353 = vunpack.c.l.b16 %v3910
        %v5354 = vunpack.c.l.b16 %v3911
        %v5355 = vunpack.c.l.b16 %v3912
        %v5356 = vunpack.c.l.b16 %v3913
        %v5357 = vunpack.c.l.b16 %v3914
        %v5358 = vunpack.c.l.b16 %v3915
        %v5359 = vunpack.c.l.b16 %v3916
        %v5360 = vunpack.c.l.b16 %v3917
        %v5361 = vunpack.c.l.b16 %v3918
        %v5362 = vunpack.c.l.b16 %v3919
        %v5363 = vunpack.c.l.b16 %v3920
        %v5364 = vpack.c.b16 %v5293, %v5292
        %v5365 = vpack.c.b16 %v5295, %v5294
        %v5366 = vpack.c.b16 %v5297, %v5296
        %v5367 = vpack.c.b16 %v5299, %v5298
        %v5368 = vpack.c.b16 %v5301, %v5300
        %v5369 = vpack.c.b16 %v5303, %v5302
        %v5370 = vpack.c.b16 %v5305, %v5304
        %v5371 = vpack.c.b16 %v5307, %v5306
        %v5372 = vpack.c.b16 %v5309, %v5308
        %v5373 = vpack.c.b16 %v5311, %v5310
        %v5374 = vpack.c.b16 %v5313, %v5312
        %v5375 = vpack.c.b16 %v5315, %v5314
        %v5376 = vpack.c.b16 %v5317, %v5316
        %v5377 = vpack.c.b16 %v5319, %v5318
        %v5378 = vpack.c.b16 %v5321, %v5320
        %v5379 = vpack.c.b16 %v5323, %v5322
        %v5380 = vpack.c.b16 %v5325, %v5324
        %v5381 = vpack.c.b16 %v5327, %v5326
        %v5382 = vpack.c.b16 %v5329, %v5328
        %v5383 = vpack.c.b16 %v5331, %v5330
        %v5384 = vpack.c.b16 %v5333, %v5332
        %v5385 = vpack.c.b16 %v5335, %v5334
        %v5386 = vpack.c.b16 %v5337, %v5336
        %v5387 = vpack.c.b16 %v5339, %v5338
        %v5388 = vpack.c.b16 %v5341, %v5340
        %v5389 = vpack.c.b16 %v5343, %v5342
        %v5390 = vpack.c.b16 %v5345, %v5344
        %v5391 = vpack.c.b16 %v5347, %v5346
        %v5392 = vpack.c.b16 %v5349, %v5348
        %v5393 = vpack.c.b16 %v5351, %v5350
        %v5394 = vpack.c.b16 %v5353, %v5352
        %v5395 = vpack.c.b16 %v5355, %v5354
        %v5396 = vpack.c.b16 %v5357, %v5356
        %v5397 = vpack.c.b16 %v5359, %v5358
        %v5398 = vpack.c.b16 %v5361, %v5360
        %v5399 = vpack.c.b16 %v5363, %v5362
        %v5436 = vsel %vm2280, %v4695, 0
        %v5438 = vsel %vm2280, %v4696, 0
        %v5440 = vsel %vm2280, %v4697, 0
        %v5442 = vsel %vm2280, %v4698, 0
        %v5444 = vsel %vm2280, %v4699, 0
        %v5446 = vsel %vm2280, %v4700, 0
        %v5448 = vsel %vm2280, %v4701, 0
        %v5450 = vsel %vm2280, %v4702, 0
        %v5452 = vsel %vm2280, %v4703, 0
        %v5454 = vsel %vm2280, %v4704, 0
        %v5456 = vsel %vm2280, %v4705, 0
        %v5458 = vsel %vm2280, %v4706, 0
        %v5460 = vsel %vm2280, %v4707, 0
        %v5462 = vsel %vm2280, %v4708, 0
        %v5465 = vsel %vm2280, %v4749, 0
        %v5468 = vsel %vm2280, %v4794, 0
        %5470 = vmatprep.subr.bf16.mxu0 0
        %5471 = vmatpush1.bf16.msra.mxu0 %v5371
        %5472 = vmatprep.subr.bf16.mxu0 0
        %5473 = vmatpush1.bf16.msra.mxu0 %v5370
        %5474 = vmatprep.subr.bf16.mxu0 0
        %5475 = vmatpush1.bf16.msra.mxu0 %v5369
        %5476 = vmatprep.subr.bf16.mxu0 0
        %5477 = vmatpush1.bf16.msra.mxu0 %v5368
        %5478 = vmatprep.subr.bf16.mxu0 0
        %5479 = vmatpush1.bf16.msra.mxu0 %v5367
        %5480 = vmatprep.subr.bf16.mxu0 0
        %5481 = vmatpush1.bf16.msra.mxu0 %v5366
        %5482 = vmatprep.subr.bf16.mxu0 0
        %5483 = vmatpush1.bf16.msra.mxu0 %v5365
        %5484 = vmatprep.subr.bf16.mxu0 0
        %5485 = vmatpush1.bf16.msra.mxu0 %v5364
        %5486 = vmatprep.subr.bf16.mxu0 0
        %5487 = vmatpush2.bf16.msra.mxu0 %v5379
        %5488 = vmatprep.subr.bf16.mxu0 0
        %5489 = vmatpush2.bf16.msra.mxu0 %v5378
        %5490 = vmatprep.subr.bf16.mxu0 0
        %5491 = vmatpush2.bf16.msra.mxu0 %v5377
        %5492 = vmatprep.subr.bf16.mxu0 0
        %5493 = vmatpush2.bf16.msra.mxu0 %v5376
        %5494 = vmatprep.subr.bf16.mxu0 0
        %5495 = vmatpush2.bf16.msra.mxu0 %v5375
        %5496 = vmatprep.subr.bf16.mxu0 0
        %5497 = vmatpush2.bf16.msra.mxu0 %v5374
        %5498 = vmatprep.subr.bf16.mxu0 0
        %5499 = vmatpush2.bf16.msra.mxu0 %v5373
        %5500 = vmatprep.subr.bf16.mxu0 0
        %5501 = vmatpush2.bf16.msra.mxu0 %v5372
        %5502 = vmatprep.mubr.bf16.mxu0 %v4861
        %5503 = vmatmul.mubr.bf16.gmra.mxu0 %v4797
        %v5504 = vpop.f32.mrf.mxu0
        %v5505 = vadd.f32 %v5094, %v5504
        %v5506 = vpop.f32.mrf.mxu0
        %v5507 = vpop.f32.mrf.mxu0
        %v5508 = vadd.f32 %v5097, %v5507
        %v5509 = vpop.f32.mrf.mxu0
        %5510 = vmatprep.mubr.bf16.mxu0 %v4865
        %5511 = vmatmul.mubr.bf16.gmra.mxu0 %v4801
        %v5512 = vpop.f32.mrf.mxu0
        %v5513 = vadd.f32 %v5102, %v5512
        %v5514 = vpop.f32.mrf.mxu0
        %v5515 = vpop.f32.mrf.mxu0
        %v5516 = vadd.f32 %v5105, %v5515
        %v5517 = vpop.f32.mrf.mxu0
        %5518 = vmatprep.mubr.bf16.mxu0 %v4869
        %5519 = vmatmul.mubr.bf16.gmra.mxu0 %v4805
        %v5520 = vpop.f32.mrf.mxu0
        %v5521 = vadd.f32 %v5110, %v5520
        %v5522 = vpop.f32.mrf.mxu0
        %v5523 = vpop.f32.mrf.mxu0
        %v5524 = vadd.f32 %v5113, %v5523
        %v5525 = vpop.f32.mrf.mxu0
        %5526 = vmatprep.mubr.bf16.mxu0 %v4873
        %5527 = vmatmul.mubr.bf16.gmra.mxu0 %v4809
        %v5528 = vpop.f32.mrf.mxu0
        %v5529 = vadd.f32 %v5118, %v5528
        %v5530 = vpop.f32.mrf.mxu0
        %v5531 = vpop.f32.mrf.mxu0
        %v5532 = vadd.f32 %v5121, %v5531
        %v5533 = vpop.f32.mrf.mxu0
        %5534 = vmatprep.mubr.bf16.mxu0 %v4877
        %5535 = vmatmul.mubr.bf16.gmra.mxu0 %v4813
        %v5536 = vpop.f32.mrf.mxu0
        %v5537 = vadd.f32 %v5126, %v5536
        %v5538 = vpop.f32.mrf.mxu0
        %v5539 = vpop.f32.mrf.mxu0
        %v5540 = vadd.f32 %v5129, %v5539
        %v5541 = vpop.f32.mrf.mxu0
        %5542 = vmatprep.mubr.bf16.mxu0 %v4881
        %5543 = vmatmul.mubr.bf16.gmra.mxu0 %v4817
        %v5544 = vpop.f32.mrf.mxu0
        %v5545 = vadd.f32 %v5134, %v5544
        %v5546 = vpop.f32.mrf.mxu0
        %v5547 = vpop.f32.mrf.mxu0
        %v5548 = vadd.f32 %v5137, %v5547
        %v5549 = vpop.f32.mrf.mxu0
        %5550 = vmatprep.mubr.bf16.mxu0 %v4885
        %5551 = vmatmul.mubr.bf16.gmra.mxu0 %v4821
        %v5552 = vpop.f32.mrf.mxu0
        %v5553 = vadd.f32 %v5142, %v5552
        %v5554 = vpop.f32.mrf.mxu0
        %v5555 = vpop.f32.mrf.mxu0
        %v5556 = vadd.f32 %v5145, %v5555
        %v5557 = vpop.f32.mrf.mxu0
        %5558 = vmatprep.mubr.bf16.mxu0 %v4889
        %5559 = vmatmul.mubr.bf16.gmra.mxu0 %v4825
        %v5560 = vpop.f32.mrf.mxu0
        %v5561 = vadd.f32 %v5150, %v5560
        %v5562 = vpop.f32.mrf.mxu0
        %v5563 = vpop.f32.mrf.mxu0
        %v5564 = vadd.f32 %v5153, %v5563
        %v5565 = vpop.f32.mrf.mxu0
        %5566 = vmatprep.mubr.bf16.mxu0 %v4893
        %5567 = vmatmul.mubr.bf16.gmra.mxu0 %v4829
        %v5568 = vpop.f32.mrf.mxu0
        %v5569 = vadd.f32 %v5158, %v5568
        %v5570 = vpop.f32.mrf.mxu0
        %v5571 = vpop.f32.mrf.mxu0
        %v5572 = vadd.f32 %v5161, %v5571
        %v5573 = vpop.f32.mrf.mxu0
        %5574 = vmatprep.mubr.bf16.mxu0 %v4897
        %5575 = vmatmul.mubr.bf16.gmra.mxu0 %v4833
        %v5576 = vpop.f32.mrf.mxu0
        %v5577 = vadd.f32 %v5166, %v5576
        %v5578 = vpop.f32.mrf.mxu0
        %v5579 = vpop.f32.mrf.mxu0
        %v5580 = vadd.f32 %v5169, %v5579
        %v5581 = vpop.f32.mrf.mxu0
        %5582 = vmatprep.mubr.bf16.mxu0 %v4901
        %5583 = vmatmul.mubr.bf16.gmra.mxu0 %v4837
        %v5584 = vpop.f32.mrf.mxu0
        %v5585 = vadd.f32 %v5174, %v5584
        %v5586 = vpop.f32.mrf.mxu0
        %v5587 = vpop.f32.mrf.mxu0
        %v5588 = vadd.f32 %v5177, %v5587
        %v5589 = vpop.f32.mrf.mxu0
        %5590 = vmatprep.mubr.bf16.mxu0 %v4905
        %5591 = vmatmul.mubr.bf16.gmra.mxu0 %v4841
        %v5592 = vpop.f32.mrf.mxu0
        %v5593 = vadd.f32 %v5182, %v5592
        %v5594 = vpop.f32.mrf.mxu0
        %v5595 = vpop.f32.mrf.mxu0
        %v5596 = vadd.f32 %v5185, %v5595
        %v5597 = vpop.f32.mrf.mxu0
        %5598 = vmatprep.mubr.bf16.mxu0 %v4909
        %5599 = vmatmul.mubr.bf16.gmra.mxu0 %v4845
        %v5600 = vpop.f32.mrf.mxu0
        %v5601 = vadd.f32 %v5190, %v5600
        %v5602 = vpop.f32.mrf.mxu0
        %v5603 = vpop.f32.mrf.mxu0
        %v5604 = vadd.f32 %v5193, %v5603
        %v5605 = vpop.f32.mrf.mxu0
        %5606 = vmatprep.mubr.bf16.mxu0 %v4913
        %5607 = vmatmul.mubr.bf16.gmra.mxu0 %v4849
        %v5608 = vpop.f32.mrf.mxu0
        %v5609 = vadd.f32 %v5198, %v5608
        %v5610 = vpop.f32.mrf.mxu0
        %v5611 = vpop.f32.mrf.mxu0
        %v5612 = vadd.f32 %v5201, %v5611
        %v5613 = vpop.f32.mrf.mxu0
        %5614 = vmatprep.mubr.bf16.mxu0 %v4917
        %5615 = vmatmul.mubr.bf16.gmra.mxu0 %v4853
        %v5616 = vpop.f32.mrf.mxu0
        %v5617 = vadd.f32 %v5206, %v5616
        %v5618 = vpop.f32.mrf.mxu0
        %v5619 = vpop.f32.mrf.mxu0
        %v5620 = vadd.f32 %v5209, %v5619
        %v5621 = vpop.f32.mrf.mxu0
        %5622 = vmatprep.mubr.bf16.mxu0 %v4921
        %5623 = vmatmul.mubr.bf16.gmra.mxu0 %v4857
        %v5624 = vpop.f32.mrf.mxu0
        %v5625 = vadd.f32 %v5214, %v5624
        %v5626 = vpop.f32.mrf.mxu0
        %v5627 = vpop.f32.mrf.mxu0
        %v5628 = vadd.f32 %v5217, %v5627
        %v5629 = vpop.f32.mrf.mxu0
        %5630 = vdwg.mxu0
        %5631 = vmatprep.subr.bf16.mxu0 0
        %5632 = vmatpush1.bf16.msra.mxu0 %v5387
        %5633 = vmatprep.subr.bf16.mxu0 0
        %5634 = vmatpush1.bf16.msra.mxu0 %v5386
        %5635 = vmatprep.subr.bf16.mxu0 0
        %5636 = vmatpush1.bf16.msra.mxu0 %v5385
        %5637 = vmatprep.subr.bf16.mxu0 0
        %5638 = vmatpush1.bf16.msra.mxu0 %v5384
        %5639 = vmatprep.subr.bf16.mxu0 0
        %5640 = vmatpush1.bf16.msra.mxu0 %v5383
        %5641 = vmatprep.subr.bf16.mxu0 0
        %5642 = vmatpush1.bf16.msra.mxu0 %v5382
        %5643 = vmatprep.subr.bf16.mxu0 0
        %5644 = vmatpush1.bf16.msra.mxu0 %v5381
        %5645 = vmatprep.subr.bf16.mxu0 0
        %5646 = vmatpush1.bf16.msra.mxu0 %v5380
        %5647 = vmatprep.subr.bf16.mxu0 0
        %5648 = vmatpush2.bf16.msra.mxu0 %v5395
        %5649 = vmatprep.subr.bf16.mxu0 0
        %5650 = vmatpush2.bf16.msra.mxu0 %v5394
        %5651 = vmatprep.subr.bf16.mxu0 0
        %5652 = vmatpush2.bf16.msra.mxu0 %v5393
        %5653 = vmatprep.subr.bf16.mxu0 0
        %5654 = vmatpush2.bf16.msra.mxu0 %v5392
        %5655 = vmatprep.subr.bf16.mxu0 0
        %5656 = vmatpush2.bf16.msra.mxu0 %v5391
        %5657 = vmatprep.subr.bf16.mxu0 0
        %5658 = vmatpush2.bf16.msra.mxu0 %v5390
        %5659 = vmatprep.subr.bf16.mxu0 0
        %5660 = vmatpush2.bf16.msra.mxu0 %v5389
        %5661 = vmatprep.subr.bf16.mxu0 0
        %5662 = vmatpush2.bf16.msra.mxu0 %v5388
        %5663 = vmatprep.mubr.bf16.mxu0 %v4805
        %5664 = vmatmul.mubr.bf16.gmra.mxu0 %v4925
        %v5665 = vpop.f32.mrf.mxu0
        %v5666 = vadd.f32 %v5505, %v5665
        %v5667 = vpop.f32.mrf.mxu0
        %v5668 = vpop.f32.mrf.mxu0
        %v5669 = vadd.f32 %v5508, %v5668
        %v5670 = vpop.f32.mrf.mxu0
        %5671 = vmatprep.mubr.bf16.mxu0 %v4809
        %5672 = vmatmul.mubr.bf16.gmra.mxu0 %v4929
        %v5673 = vpop.f32.mrf.mxu0
        %v5674 = vadd.f32 %v5513, %v5673
        %v5675 = vpop.f32.mrf.mxu0
        %v5676 = vpop.f32.mrf.mxu0
        %v5677 = vadd.f32 %v5516, %v5676
        %v5678 = vpop.f32.mrf.mxu0
        %5679 = vmatprep.mubr.bf16.mxu0 %v4813
        %5680 = vmatmul.mubr.bf16.gmra.mxu0 %v4933
        %v5681 = vpop.f32.mrf.mxu0
        %v5682 = vadd.f32 %v5521, %v5681
        %v5683 = vpop.f32.mrf.mxu0
        %v5684 = vpop.f32.mrf.mxu0
        %v5685 = vadd.f32 %v5524, %v5684
        %v5686 = vpop.f32.mrf.mxu0
        %5687 = vmatprep.mubr.bf16.mxu0 %v4817
        %5688 = vmatmul.mubr.bf16.gmra.mxu0 %v4937
        %v5689 = vpop.f32.mrf.mxu0
        %v5690 = vadd.f32 %v5529, %v5689
        %v5691 = vpop.f32.mrf.mxu0
        %v5692 = vpop.f32.mrf.mxu0
        %v5693 = vadd.f32 %v5532, %v5692
        %v5694 = vpop.f32.mrf.mxu0
        %5695 = vmatprep.mubr.bf16.mxu0 %v4821
        %5696 = vmatmul.mubr.bf16.gmra.mxu0 %v4941
        %v5697 = vpop.f32.mrf.mxu0
        %v5698 = vadd.f32 %v5537, %v5697
        %v5699 = vpop.f32.mrf.mxu0
        %v5700 = vpop.f32.mrf.mxu0
        %v5701 = vadd.f32 %v5540, %v5700
        %v5702 = vpop.f32.mrf.mxu0
        %5703 = vmatprep.mubr.bf16.mxu0 %v4825
        %5704 = vmatmul.mubr.bf16.gmra.mxu0 %v4945
        %v5705 = vpop.f32.mrf.mxu0
        %v5706 = vadd.f32 %v5545, %v5705
        %v5707 = vpop.f32.mrf.mxu0
        %v5708 = vpop.f32.mrf.mxu0
        %v5709 = vadd.f32 %v5548, %v5708
        %v5710 = vpop.f32.mrf.mxu0
        %5711 = vmatprep.mubr.bf16.mxu0 %v4829
        %5712 = vmatmul.mubr.bf16.gmra.mxu0 %v4949
        %v5713 = vpop.f32.mrf.mxu0
        %v5714 = vadd.f32 %v5553, %v5713
        %v5715 = vpop.f32.mrf.mxu0
        %v5716 = vpop.f32.mrf.mxu0
        %v5717 = vadd.f32 %v5556, %v5716
        %v5718 = vpop.f32.mrf.mxu0
        %5719 = vmatprep.mubr.bf16.mxu0 %v4833
        %5720 = vmatmul.mubr.bf16.gmra.mxu0 %v4953
        %v5721 = vpop.f32.mrf.mxu0
        %v5722 = vadd.f32 %v5561, %v5721
        %v5723 = vpop.f32.mrf.mxu0
        %v5724 = vpop.f32.mrf.mxu0
        %v5725 = vadd.f32 %v5564, %v5724
        %v5726 = vpop.f32.mrf.mxu0
        %5727 = vmatprep.mubr.bf16.mxu0 %v4837
        %5728 = vmatmul.mubr.bf16.gmra.mxu0 %v4957
        %v5729 = vpop.f32.mrf.mxu0
        %v5730 = vadd.f32 %v5569, %v5729
        %v5731 = vpop.f32.mrf.mxu0
        %v5732 = vpop.f32.mrf.mxu0
        %v5733 = vadd.f32 %v5572, %v5732
        %v5734 = vpop.f32.mrf.mxu0
        %5735 = vmatprep.mubr.bf16.mxu0 %v4841
        %5736 = vmatmul.mubr.bf16.gmra.mxu0 %v4961
        %v5737 = vpop.f32.mrf.mxu0
        %v5738 = vadd.f32 %v5577, %v5737
        %v5739 = vpop.f32.mrf.mxu0
        %v5740 = vpop.f32.mrf.mxu0
        %v5741 = vadd.f32 %v5580, %v5740
        %v5742 = vpop.f32.mrf.mxu0
        %5743 = vmatprep.mubr.bf16.mxu0 %v4845
        %5744 = vmatmul.mubr.bf16.gmra.mxu0 %v4965
        %v5745 = vpop.f32.mrf.mxu0
        %v5746 = vadd.f32 %v5585, %v5745
        %v5747 = vpop.f32.mrf.mxu0
        %v5748 = vpop.f32.mrf.mxu0
        %v5749 = vadd.f32 %v5588, %v5748
        %v5750 = vpop.f32.mrf.mxu0
        %5751 = vmatprep.mubr.bf16.mxu0 %v4849
        %5752 = vmatmul.mubr.bf16.gmra.mxu0 %v4969
        %v5753 = vpop.f32.mrf.mxu0
        %v5754 = vadd.f32 %v5593, %v5753
        %v5755 = vpop.f32.mrf.mxu0
        %v5756 = vpop.f32.mrf.mxu0
        %v5757 = vadd.f32 %v5596, %v5756
        %v5758 = vpop.f32.mrf.mxu0
        %5759 = vmatprep.mubr.bf16.mxu0 %v4853
        %5760 = vmatmul.mubr.bf16.gmra.mxu0 %v4973
        %v5761 = vpop.f32.mrf.mxu0
        %v5762 = vadd.f32 %v5601, %v5761
        %v5763 = vpop.f32.mrf.mxu0
        %v5764 = vpop.f32.mrf.mxu0
        %v5765 = vadd.f32 %v5604, %v5764
        %v5766 = vpop.f32.mrf.mxu0
        %5767 = vmatprep.mubr.bf16.mxu0 %v4857
        %5768 = vmatmul.mubr.bf16.gmra.mxu0 %v4977
        %v5769 = vpop.f32.mrf.mxu0
        %v5770 = vadd.f32 %v5609, %v5769
        %v5771 = vpop.f32.mrf.mxu0
        %v5772 = vpop.f32.mrf.mxu0
        %v5773 = vadd.f32 %v5612, %v5772
        %v5774 = vpop.f32.mrf.mxu0
        %5775 = vmatprep.mubr.bf16.mxu0 %v4989
        %5776 = vmatmul.mubr.bf16.gmra.mxu0 %v4981
        %v5777 = vpop.f32.mrf.mxu0
        %v5778 = vadd.f32 %v5617, %v5777
        %v5779 = vpop.f32.mrf.mxu0
        %v5780 = vpop.f32.mrf.mxu0
        %v5781 = vadd.f32 %v5620, %v5780
        %v5782 = vpop.f32.mrf.mxu0
        %5783 = vmatprep.mubr.bf16.mxu0 %v4993
        %5784 = vmatmul.mubr.bf16.gmra.mxu0 %v4985
        %v5785 = vpop.f32.mrf.mxu0
        %v5786 = vadd.f32 %v5625, %v5785
        %v5787 = vpop.f32.mrf.mxu0
        %v5788 = vpop.f32.mrf.mxu0
        %v5789 = vadd.f32 %v5628, %v5788
        %v5790 = vpop.f32.mrf.mxu0
        %5791 = vdwg.mxu0
        %5792 = vmatprep.subr.bf16.mxu0 0
        %5793 = vmatpush1.bf16.msra.mxu0 0
        %5794 = vmatprep.subr.bf16.mxu0 0
        %5795 = vmatpush1.bf16.msra.mxu0 0
        %5796 = vmatprep.subr.bf16.mxu0 0
        %5797 = vmatpush1.bf16.msra.mxu0 0
        %5798 = vmatprep.subr.bf16.mxu0 0
        %5799 = vmatpush1.bf16.msra.mxu0 0
        %5800 = vmatprep.subr.bf16.mxu0 0
        %5801 = vmatpush1.bf16.msra.mxu0 %v5399
        %5802 = vmatprep.subr.bf16.mxu0 0
        %5803 = vmatpush1.bf16.msra.mxu0 %v5398
        %5804 = vmatprep.subr.bf16.mxu0 0
        %5805 = vmatpush1.bf16.msra.mxu0 %v5397
        %5806 = vmatprep.subr.bf16.mxu0 0
        %5807 = vmatpush1.bf16.msra.mxu0 %v5396
        %5808 = vmatprep.subr.bf16.mxu0 0
        %5809 = vmatpush2.bf16.msra.mxu0 0
        %5810 = vmatprep.subr.bf16.mxu0 0
        %5811 = vmatpush2.bf16.msra.mxu0 0
        %5812 = vmatprep.subr.bf16.mxu0 0
        %5813 = vmatpush2.bf16.msra.mxu0 0
        %5814 = vmatprep.subr.bf16.mxu0 0
        %5815 = vmatpush2.bf16.msra.mxu0 0
        %5816 = vmatprep.subr.bf16.mxu0 0
        %5817 = vmatpush2.bf16.msra.mxu0 0
        %5818 = vmatprep.subr.bf16.mxu0 0
        %5819 = vmatpush2.bf16.msra.mxu0 0
        %5820 = vmatprep.subr.bf16.mxu0 0
        %5821 = vmatpush2.bf16.msra.mxu0 0
        %5822 = vmatprep.subr.bf16.mxu0 0
        %5823 = vmatpush2.bf16.msra.mxu0 0
        %5824 = vmatprep.mubr.bf16.mxu0 0
        %5825 = vmatmul.mubr.bf16.gmra.mxu0 %v5436
        %v5826 = vpop.f32.mrf.mxu0
        %v5827 = vadd.f32 %v5666, %v5826
        %v5828 = vpop.f32.mrf.mxu0
        %v5829 = vpop.f32.mrf.mxu0
        %v5830 = vadd.f32 %v5669, %v5829
        %v5831 = vpop.f32.mrf.mxu0
        %5832 = vmatprep.mubr.bf16.mxu0 0
        %5833 = vmatmul.mubr.bf16.gmra.mxu0 %v5438
        %v5834 = vpop.f32.mrf.mxu0
        %v5835 = vadd.f32 %v5674, %v5834
        %v5836 = vpop.f32.mrf.mxu0
        %v5837 = vpop.f32.mrf.mxu0
        %v5838 = vadd.f32 %v5677, %v5837
        %v5839 = vpop.f32.mrf.mxu0
        %5840 = vmatprep.mubr.bf16.mxu0 0
        %5841 = vmatmul.mubr.bf16.gmra.mxu0 %v5440
        %v5842 = vpop.f32.mrf.mxu0
        %v5843 = vadd.f32 %v5682, %v5842
        %v5844 = vpop.f32.mrf.mxu0
        %v5845 = vpop.f32.mrf.mxu0
        %v5846 = vadd.f32 %v5685, %v5845
        %v5847 = vpop.f32.mrf.mxu0
        %5848 = vmatprep.mubr.bf16.mxu0 0
        %5849 = vmatmul.mubr.bf16.gmra.mxu0 %v5442
        %v5850 = vpop.f32.mrf.mxu0
        %v5851 = vadd.f32 %v5690, %v5850
        %v5852 = vpop.f32.mrf.mxu0
        %v5853 = vpop.f32.mrf.mxu0
        %v5854 = vadd.f32 %v5693, %v5853
        %v5855 = vpop.f32.mrf.mxu0
        %5856 = vmatprep.mubr.bf16.mxu0 0
        %5857 = vmatmul.mubr.bf16.gmra.mxu0 %v5444
        %v5858 = vpop.f32.mrf.mxu0
        %v5859 = vadd.f32 %v5698, %v5858
        %v5860 = vpop.f32.mrf.mxu0
        %v5861 = vpop.f32.mrf.mxu0
        %v5862 = vadd.f32 %v5701, %v5861
        %v5863 = vpop.f32.mrf.mxu0
        %5864 = vmatprep.mubr.bf16.mxu0 0
        %5865 = vmatmul.mubr.bf16.gmra.mxu0 %v5446
        %v5866 = vpop.f32.mrf.mxu0
        %v5867 = vadd.f32 %v5706, %v5866
        %v5868 = vpop.f32.mrf.mxu0
        %v5869 = vpop.f32.mrf.mxu0
        %v5870 = vadd.f32 %v5709, %v5869
        %v5871 = vpop.f32.mrf.mxu0
        %5872 = vmatprep.mubr.bf16.mxu0 0
        %5873 = vmatmul.mubr.bf16.gmra.mxu0 %v5448
        %v5874 = vpop.f32.mrf.mxu0
        %v5875 = vadd.f32 %v5714, %v5874
        %v5876 = vpop.f32.mrf.mxu0
        %v5877 = vpop.f32.mrf.mxu0
        %v5878 = vadd.f32 %v5717, %v5877
        %v5879 = vpop.f32.mrf.mxu0
        %5880 = vmatprep.mubr.bf16.mxu0 0
        %5881 = vmatmul.mubr.bf16.gmra.mxu0 %v5450
        %v5882 = vpop.f32.mrf.mxu0
        %v5883 = vadd.f32 %v5722, %v5882
        %v5884 = vpop.f32.mrf.mxu0
        %v5885 = vpop.f32.mrf.mxu0
        %v5886 = vadd.f32 %v5725, %v5885
        %v5887 = vpop.f32.mrf.mxu0
        %5888 = vmatprep.mubr.bf16.mxu0 0
        %5889 = vmatmul.mubr.bf16.gmra.mxu0 %v5452
        %v5890 = vpop.f32.mrf.mxu0
        %v5891 = vadd.f32 %v5730, %v5890
        %v5892 = vpop.f32.mrf.mxu0
        %v5893 = vpop.f32.mrf.mxu0
        %v5894 = vadd.f32 %v5733, %v5893
        %v5895 = vpop.f32.mrf.mxu0
        %5896 = vmatprep.mubr.bf16.mxu0 0
        %5897 = vmatmul.mubr.bf16.gmra.mxu0 %v5454
        %v5898 = vpop.f32.mrf.mxu0
        %v5899 = vadd.f32 %v5738, %v5898
        %v5900 = vpop.f32.mrf.mxu0
        %v5901 = vpop.f32.mrf.mxu0
        %v5902 = vadd.f32 %v5741, %v5901
        %v5903 = vpop.f32.mrf.mxu0
        %5904 = vmatprep.mubr.bf16.mxu0 0
        %5905 = vmatmul.mubr.bf16.gmra.mxu0 %v5456
        %v5906 = vpop.f32.mrf.mxu0
        %v5907 = vadd.f32 %v5746, %v5906
        %v5908 = vpop.f32.mrf.mxu0
        %v5909 = vpop.f32.mrf.mxu0
        %v5910 = vadd.f32 %v5749, %v5909
        %v5911 = vpop.f32.mrf.mxu0
        %5912 = vmatprep.mubr.bf16.mxu0 0
        %5913 = vmatmul.mubr.bf16.gmra.mxu0 %v5458
        %v5914 = vpop.f32.mrf.mxu0
        %v5915 = vadd.f32 %v5754, %v5914
        %v5916 = vpop.f32.mrf.mxu0
        %v5917 = vpop.f32.mrf.mxu0
        %v5918 = vadd.f32 %v5757, %v5917
        %v5919 = vpop.f32.mrf.mxu0
        %5920 = vmatprep.mubr.bf16.mxu0 0
        %5921 = vmatmul.mubr.bf16.gmra.mxu0 %v5460
        %v5922 = vpop.f32.mrf.mxu0
        %v5923 = vadd.f32 %v5762, %v5922
        %v5924 = vpop.f32.mrf.mxu0
        %v5925 = vpop.f32.mrf.mxu0
        %v5926 = vadd.f32 %v5765, %v5925
        %v5927 = vpop.f32.mrf.mxu0
        %5928 = vmatprep.mubr.bf16.mxu0 0
        %5929 = vmatmul.mubr.bf16.gmra.mxu0 %v5462
        %v5930 = vpop.f32.mrf.mxu0
        %v5931 = vadd.f32 %v5770, %v5930
        %v5932 = vpop.f32.mrf.mxu0
        %v5933 = vpop.f32.mrf.mxu0
        %v5934 = vadd.f32 %v5773, %v5933
        %v5935 = vpop.f32.mrf.mxu0
        %5936 = vmatprep.mubr.bf16.mxu0 0
        %5937 = vmatmul.mubr.bf16.gmra.mxu0 %v5465
        %v5938 = vpop.f32.mrf.mxu0
        %v5939 = vadd.f32 %v5778, %v5938
        %v5940 = vpop.f32.mrf.mxu0
        %v5941 = vpop.f32.mrf.mxu0
        %v5942 = vadd.f32 %v5781, %v5941
        %v5943 = vpop.f32.mrf.mxu0
        %5944 = vmatprep.mubr.bf16.mxu0 0
        %5945 = vmatmul.mubr.bf16.gmra.mxu0 %v5468
        %v5946 = vpop.f32.mrf.mxu0
        %v5947 = vadd.f32 %v5786, %v5946
        %v5948 = vpop.f32.mrf.mxu0
        %v5949 = vpop.f32.mrf.mxu0
        %v5950 = vadd.f32 %v5789, %v5949
        %v5951 = vpop.f32.mrf.mxu0
        %5952 = vdwg.mxu0
        %5953 = vst.msk [vmem:[%s298] sm:$0xff] %vm2280, %v5827
        %5954 = vst.msk [vmem:[%s298 + $0x8] sm:$0xff] %vm2280, %v5830
        %5955 = vst.msk [vmem:[%s298 + $0x10] sm:$0xff] %vm2280, %v5835
        %5956 = vst.msk [vmem:[%s298 + $0x18] sm:$0xff] %vm2280, %v5838
        %5957 = vst.msk [vmem:[%s298 + $0x20] sm:$0xff] %vm2280, %v5843
        %5958 = vst.msk [vmem:[%s298 + $0x28] sm:$0xff] %vm2280, %v5846
        %5959 = vst.msk [vmem:[%s298 + $0x30] sm:$0xff] %vm2280, %v5851
        %5960 = vst.msk [vmem:[%s298 + $0x38] sm:$0xff] %vm2280, %v5854
        %5961 = vst.msk [vmem:[%s298 + $0x40] sm:$0xff] %vm2280, %v5859
        %5962 = vst.msk [vmem:[%s298 + $0x48] sm:$0xff] %vm2280, %v5862
        %5963 = vst.msk [vmem:[%s298 + $0x50] sm:$0xff] %vm2280, %v5867
        %5964 = vst.msk [vmem:[%s298 + $0x58] sm:$0xff] %vm2280, %v5870
        %5965 = vst.msk [vmem:[%s298 + $0x60] sm:$0xff] %vm2280, %v5875
        %5966 = vst.msk [vmem:[%s298 + $0x68] sm:$0xff] %vm2280, %v5878
        %5967 = vst.msk [vmem:[%s298 + $0x70] sm:$0xff] %vm2280, %v5883
        %5968 = vst.msk [vmem:[%s298 + $0x78] sm:$0xff] %vm2280, %v5886
        %5969 = vst.msk [vmem:[%s298 + $0x80] sm:$0xff] %vm2280, %v5891
        %5970 = vst.msk [vmem:[%s298 + $0x88] sm:$0xff] %vm2280, %v5894
        %5971 = vst.msk [vmem:[%s298 + $0x90] sm:$0xff] %vm2280, %v5899
        %5972 = vst.msk [vmem:[%s298 + $0x98] sm:$0xff] %vm2280, %v5902
        %5973 = vst.msk [vmem:[%s298 + $0xa0] sm:$0xff] %vm2280, %v5907
        %5974 = vst.msk [vmem:[%s298 + $0xa8] sm:$0xff] %vm2280, %v5910
        %5975 = vst.msk [vmem:[%s298 + $0xb0] sm:$0xff] %vm2280, %v5915
        %5976 = vst.msk [vmem:[%s298 + $0xb8] sm:$0xff] %vm2280, %v5918
        %5977 = vst.msk [vmem:[%s298 + $0xc0] sm:$0xff] %vm2280, %v5923
        %5978 = vst.msk [vmem:[%s298 + $0xc8] sm:$0xff] %vm2280, %v5926
        %5979 = vst.msk [vmem:[%s298 + $0xd0] sm:$0xff] %vm2280, %v5931
        %5980 = vst.msk [vmem:[%s298 + $0xd8] sm:$0xff] %vm2280, %v5934
        %5981 = vst.msk [vmem:[%s298 + $0xe0] sm:$0xff] %vm2280, %v5939
        %5982 = vst.msk [vmem:[%s298 + $0xe8] sm:$0xff] %vm2280, %v5942
        %5983 = vst.msk [vmem:[%s298 + $0xf0] sm:$0xff] %vm2280, %v5947
        %5984 = vst.msk [vmem:[%s298 + $0xf8] sm:$0xff] %vm2280, %v5950
        %s5985 = sand.u32 %s203, 1
        %s5986 = scalar_lea.sflag [#allocation5], %s5985
        %s5987 = sand.u32 %s203, 1
        %s5988 = smul.addr %s5987, 256
        %s5989 = scalar_lea.vmem [#allocation4], %s5988
        // Predicated region
        $region53: #{wide_basicblock_q_forward.1} parent=51 // pred_check
          %p5990 = pneg %p213
        $region54: #{wide_basicblock_q_forward.1} parent=51 // pred_check_branch
          %5992 = sbr.rel (%p5990) target = $region56
        $region55: #{wide_basicblock_q_forward.1} parent=51 // pred_region
          %s5994 = ssub.s32 4096, 4096
          %5995 = vsyncadd %s5986, %s5994
          %s5996 = smul.addr %s22, 32
          %s5997 = smul.addr %s5996, 128
          %s5998 = scalar_lea.hbm %s8, %s5997
          %s5999 = sshll.u32 %s5989, 4
          %s6000 = int_to_ptr.vmem [resolvable:$true] %s5999
          %6005 = dma.vmem_to_hbm [thread:$0]  %s6000, 4096, %s5998, %s5986, 128, 128, 8
        $region56: #{wide_basicblock_q_forward.1} parent=51 // pred_fallthru
          _
      $region52: #{wide_basicblock_q_forward.1} parent=5 // pred_fallthru
        _
      %p6006 = scmp.le.s32.totalorder 2, %s17
      // Predicated region
      $region57: #{wide_basicblock_q_forward.1} parent=5 // pred_check
        %p6007 = pneg %p6006
      $region58: #{wide_basicblock_q_forward.1} parent=5 // pred_check_branch
        %6009 = sbr.rel (%p6007) target = $region60
      $region59: #{wide_basicblock_q_forward.1} parent=5 // pred_region
        %s6010 = ssub.s32 %s17, 2
        // Predicated region
        $region61: #{wide_basicblock_q_forward.1} parent=59 // pred_check
          %p6011 = pneg %p219
        $region62: #{wide_basicblock_q_forward.1} parent=59 // pred_check_branch
          %6013 = sbr.rel (%p6011) target = $region64
        $region63: #{wide_basicblock_q_forward.1} parent=59 // pred_region
          %s6014 = sand.u32 %s204, 1
          %s6015 = scalar_lea.sflag [#allocation5], %s6014
          %s6016 = sand.u32 %s204, 1
          %s6017 = smul.addr %s6016, 256
          %s6018 = scalar_lea.vmem [#allocation4], %s6017
          %6019 = dma.done %s6015, 4096
        $region64: #{wide_basicblock_q_forward.1} parent=59 // pred_fallthru
          _
      $region60: #{wide_basicblock_q_forward.1} parent=5 // pred_fallthru
        _
    $region6: #{wide_basicblock_q_forward.1} parent=1 // loop_footer
      %s21 = sadd.s32 1, %s17
    $region7: #{wide_basicblock_q_forward.1} parent=1 // loop_footer_branch
      %16 = sbr.rel target = $region3
    $region8: #{wide_basicblock_q_forward.1} parent=1 // loop_exit
      _
    %6020 = vsyncpa [#allocation5], 1
    %s6021 = scalar_lea.sflag [#allocation5], 1
    %6022 = vsyncpa %s6021, 1

</llo_original>
